<compile_context>
chip_gen: v5e
topology: v5e:2x2
jax: 0.10.0
libtpu: 0.0.40
codegen_flags: <defaults>
</compile_context>

<pallas_src>
import functools

import jax
import jax.numpy as jnp
from jax import lax
from jax.experimental import pallas as pl
from jax.experimental.pallas import tpu as pltpu

LANE = 128      # lane width (last dim)
SUBLANE = 8     # f32 sublane height (second-to-last dim)

# Cast MXU operands (weights + the activation fed to each jnp.dot) to bf16 while keeping
# all gate/elementwise math and accumulation in f32.  Large win on v5e/v6e (bf16-native
# MXU, halved weight DMA) but loosens numerics vs. the f32 reference, so it is OFF by
# default to keep the strict 1e-5 correctness check at the bottom of this script.
USE_BF16_MXU = False
MXU_DTYPE = jnp.bfloat16 if USE_BF16_MXU else jnp.float32


def _round_up(n, m):
    return (n + m - 1) // m * m


# ---------------------------------------------------------------------------
# Fused Pallas kernel: all GRU layers + Linear head in one invocation
# ---------------------------------------------------------------------------
def _encoder_fused_kernel(*refs, seq, b_pad, h_pad, n_layers):
    """Ref layout (positional):
      inputs : x_ref,
               (wih, whh, bgi, bhn) * n_layers,
               wcls_ref, bcls_ref
      outputs: hid_out_ref (seq*b_pad, h_pad), cls_out_ref (seq*b_pad, c_pad)
      scratch: gi_ref (seq*b_pad, 3*h_pad), hbuf_ref (seq*b_pad, h_pad)

    Per layer:
      wih : (in_pad, 3*h_pad)  input->gates weight, gates = [r|z|n], 128-lane aligned
      whh : (h_pad, 3*h_pad)   hidden->gates weight
      bgi : (1, 3*h_pad)       b_ih with b_hh folded in for the r/z gates
      bhn : (1, h_pad)         b_hh for the n gate (kept separate due to r*(.))
    """
    x_ref = refs[0]
    layer_refs = [refs[1 + 4 * l: 1 + 4 * (l + 1)] for l in range(n_layers)]
    wcls_ref = refs[1 + 4 * n_layers]
    bcls_ref = refs[2 + 4 * n_layers]
    hid_out_ref = refs[3 + 4 * n_layers]
    cls_out_ref = refs[4 + 4 * n_layers]
    gi_ref = refs[5 + 4 * n_layers]
    hbuf_ref = refs[6 + 4 * n_layers]

    def run_layer(in_ref, out_ref, wih_ref, whh_ref, bgi_ref, bhn_ref):
        # Hoisted input projection: one big MXU matmul over all timesteps.
        # (gi is fully materialized before the recurrence, so out_ref may alias in_ref
        #  for intermediate layers without a hazard.)
        gi_ref[...] = (
            jnp.dot(in_ref[...].astype(wih_ref.dtype), wih_ref[...],
                    preferred_element_type=jnp.float32)
            + bgi_ref[...]
        )
        whh = whh_ref[...]                                     # VMEM-resident weight
        bhn = jnp.broadcast_to(bhn_ref[...], (b_pad, h_pad))   # hoisted broadcast

        def step(t, h):
            row = pl.multiple_of(t * b_pad, b_pad)
            gi = gi_ref[pl.ds(row, b_pad), :]                  # (B_pad, 3*H_pad), aligned
            gh = jnp.dot(h.astype(whh.dtype), whh, preferred_element_type=jnp.float32)
            # Gate slabs are 128-aligned lane ranges -> cheap aligned slices.
            r = jax.nn.sigmoid(gi[:, 0 * h_pad:1 * h_pad] + gh[:, 0 * h_pad:1 * h_pad])
            z = jax.nn.sigmoid(gi[:, 1 * h_pad:2 * h_pad] + gh[:, 1 * h_pad:2 * h_pad])
            n = jnp.tanh(gi[:, 2 * h_pad:3 * h_pad] + r * (gh[:, 2 * h_pad:3 * h_pad] + bhn))
            h_new = (1.0 - z) * n + z * h
            out_ref[pl.ds(row, b_pad), :] = h_new
            return h_new

        h0 = jnp.zeros((b_pad, h_pad), jnp.float32)            # h_0 = None -> zeros
        # Capped unroll: full unroll at seq<=8, bounded for longer sequences so vreg
        # live ranges / instruction stream stay sane.
        lax.fori_loop(0, seq, step, h0, unroll=min(seq, 8))

    cur_in = x_ref
    for l in range(n_layers):
        wih_ref, whh_ref, bgi_ref, bhn_ref = layer_refs[l]
        out_ref = hid_out_ref if l == n_layers - 1 else hbuf_ref
        run_layer(cur_in, out_ref, wih_ref, whh_ref, bgi_ref, bhn_ref)
        cur_in = out_ref

    # Classification head, hoisted out of the recurrence: one lane-dense MXU matmul
    # over the stored hidden instead of seq tiny per-step dots.
    cls_out_ref[...] = (
        jnp.dot(hid_out_ref[...].astype(wcls_ref.dtype), wcls_ref[...],
                preferred_element_type=jnp.float32)
        + bcls_ref[...]
    )


# ---------------------------------------------------------------------------
# pallas_call wrapper
# ---------------------------------------------------------------------------
def encoder_fused_pallas(x2d, layer_params, wcls, bcls, *, seq, b_pad):
    rows, in_pad = x2d.shape
    h_pad = layer_params[0]["whh"].shape[0]
    three_h = 3 * h_pad
    c_pad = wcls.shape[1]
    n_layers = len(layer_params)

    kernel = functools.partial(_encoder_fused_kernel, seq=seq, b_pad=b_pad,
                               h_pad=h_pad, n_layers=n_layers)

    in_specs = [pl.BlockSpec((rows, in_pad), lambda: (0, 0))]
    args = [x2d]
    flops = 0
    bytes_accessed = x2d.size * x2d.dtype.itemsize
    for lp in layer_params:
        l_in_pad = lp["wih"].shape[0]
        in_specs += [
            pl.BlockSpec((l_in_pad, three_h), lambda: (0, 0)),
            pl.BlockSpec((h_pad, three_h), lambda: (0, 0)),
            pl.BlockSpec((1, three_h), lambda: (0, 0)),
            pl.BlockSpec((1, h_pad), lambda: (0, 0)),
        ]
        args += [lp["wih"], lp["whh"], lp["bgi"], lp["bhn"]]
        flops += 2 * rows * (l_in_pad + h_pad) * three_h
        bytes_accessed += sum(a.size * a.dtype.itemsize
                              for a in (lp["wih"], lp["whh"], lp["bgi"], lp["bhn"]))
    in_specs += [pl.BlockSpec((h_pad, c_pad), lambda: (0, 0)),
                 pl.BlockSpec((1, c_pad), lambda: (0, 0))]
    args += [wcls, bcls]
    flops += 2 * rows * h_pad * c_pad
    bytes_accessed += (wcls.size * wcls.dtype.itemsize + bcls.size * bcls.dtype.itemsize
                       + 4 * rows * (h_pad + c_pad))

    return pl.pallas_call(
        kernel,
        out_shape=(jax.ShapeDtypeStruct((rows, h_pad), jnp.float32),
                   jax.ShapeDtypeStruct((rows, c_pad), jnp.float32)),
        in_specs=in_specs,
        out_specs=(pl.BlockSpec((rows, h_pad), lambda: (0, 0)),
                   pl.BlockSpec((rows, c_pad), lambda: (0, 0))),
        scratch_shapes=[pltpu.VMEM((rows, three_h), jnp.float32),   # gi scratch
                        pltpu.VMEM((rows, h_pad), jnp.float32)],    # inter-layer hidden
        # Whole-sequence-resident design: set the scoped-VMEM limit explicitly (footprint
        # here is ~1.5 MiB; keep well under v7x's 64 MiB physical / 32 MiB default).
        compiler_params=pltpu.CompilerParams(vmem_limit_bytes=32 * 1024 * 1024),
        cost_estimate=pl.CostEstimate(
            flops=flops,
            transcendentals=3 * rows * h_pad * n_layers,
            bytes_accessed=bytes_accessed,
        ),
    )(*args)


# ---------------------------------------------------------------------------
# Encoder forward
# ---------------------------------------------------------------------------
@functools.partial(jax.jit, static_argnames=("hid_dim", "n_class"))
def encoder_forward(x, packed, *, hid_dim, n_class):
    """Pallas Encoder.forward.

    x: (batch, seq, input_size)  [batch_first, like PyTorch]
    returns (class_out (batch, seq, n_class), hidden (batch, seq, hid_dim))
    """
    batch, seq, in_dim = x.shape
    b_pad = _round_up(batch, SUBLANE)
    in_pad = packed["layers"][0]["wih"].shape[0]
    h_pad = packed["layers"][0]["whh"].shape[0]
    c_pad = packed["wcls"].shape[1]

    # One small wrapper-side transpose of the raw input to time-major padded 2-D layout;
    # everything downstream stays in that layout inside the single fused kernel.
    x_t = jnp.transpose(x, (1, 0, 2))                                   # (seq, batch, in)
    x_t = jnp.pad(x_t, ((0, 0), (0, b_pad - batch), (0, in_pad - in_dim)))
    x2d = x_t.reshape(seq * b_pad, in_pad).astype(MXU_DTYPE)

    hid2d, cls2d = encoder_fused_pallas(
        x2d, packed["layers"], packed["wcls"], packed["bcls"], seq=seq, b_pad=b_pad)

    hidden = hid2d.reshape(seq, b_pad, h_pad)[:, :batch, :hid_dim]
    hidden = jnp.transpose(hidden, (1, 0, 2))                           # (batch, seq, hid)
    class_out = cls2d.reshape(seq, b_pad, c_pad)[:, :batch, :n_class]
    class_out = jnp.transpose(class_out, (1, 0, 2))                     # (batch, seq, n_class)
    return class_out, hidden


# ---------------------------------------------------------------------------
# Parameter init (PyTorch nn.GRU / nn.Linear layout) and packing for Pallas
# ---------------------------------------------------------------------------
def init_params(key, input_size, hid_dim, n_class, n_layers):
    params = {"gru_layers": []}
    bound = 1.0 / jnp.sqrt(jnp.float32(hid_dim))
    for layer in range(n_layers):
        in_dim = input_size if layer == 0 else hid_dim
        key, k1, k2, k3, k4 = jax.random.split(key, 5)
        # PyTorch stores weight_ih_l{k}: (3*hid, in_dim); we keep it transposed.
        w_ih = jax.random.uniform(k1, (3 * hid_dim, in_dim), jnp.float32, -bound, bound)
        w_hh = jax.random.uniform(k2, (3 * hid_dim, hid_dim), jnp.float32, -bound, bound)
        b_ih = jax.random.uniform(k3, (3 * hid_dim,), jnp.float32, -bound, bound)
        b_hh = jax.random.uniform(k4, (3 * hid_dim,), jnp.float32, -bound, bound)
        params["gru_layers"].append(
            dict(w_ih_t=w_ih.T, w_hh_t=w_hh.T, b_ih=b_ih, b_hh=b_hh)
        )
    key, k5, k6 = jax.random.split(key, 3)
    w_c = jax.random.uniform(k5, (n_class, hid_dim), jnp.float32, -bound, bound)
    b_c = jax.random.uniform(k6, (n_class,), jnp.float32, -bound, bound)
    params["w_class_t"] = w_c.T
    params["b_class"] = b_c
    return params


def pack_params(raw, hid_dim, n_class):
    """Zero-pad everything to (8, 128) tiles and 128-aligned gate slabs, pre-fold b_hh
    (r/z gates) into the hoisted input-projection bias, and optionally store MXU weights
    in bf16 (biases always stay f32)."""
    H = hid_dim
    h_pad = _round_up(H, LANE)
    c_pad = _round_up(n_class, LANE)
    layers = []
    for lp in raw["gru_layers"]:
        in_dim = lp["w_ih_t"].shape[0]
        in_pad = _round_up(in_dim, LANE)
        wih = jnp.zeros((in_pad, 3 * h_pad), jnp.float32)
        whh = jnp.zeros((h_pad, 3 * h_pad), jnp.float32)
        bgi = jnp.zeros((1, 3 * h_pad), jnp.float32)
        for g in range(3):
            wih = wih.at[:in_dim, g * h_pad:g * h_pad + H].set(
                lp["w_ih_t"][:, g * H:(g + 1) * H])
            whh = whh.at[:H, g * h_pad:g * h_pad + H].set(
                lp["w_hh_t"][:, g * H:(g + 1) * H])
            b = lp["b_ih"][g * H:(g + 1) * H]
            if g < 2:  # r, z: b_hh can be folded into the hoisted bias
                b = b + lp["b_hh"][g * H:(g + 1) * H]
            bgi = bgi.at[0, g * h_pad:g * h_pad + H].set(b)
        bhn = jnp.zeros((1, h_pad), jnp.float32).at[0, :H].set(lp["b_hh"][2 * H:3 * H])
        layers.append(dict(wih=wih.astype(MXU_DTYPE), whh=whh.astype(MXU_DTYPE),
                           bgi=bgi, bhn=bhn))
    wcls = jnp.zeros((h_pad, c_pad), jnp.float32).at[:H, :n_class].set(raw["w_class_t"])
    bcls = jnp.zeros((1, c_pad), jnp.float32).at[0, :n_class].set(raw["b_class"])
    return {"layers": layers, "wcls": wcls.astype(MXU_DTYPE), "bcls": bcls}


# ---------------------------------------------------------------------------
# Pure-JAX reference (PyTorch nn.GRU semantics) for a sanity check
# ---------------------------------------------------------------------------
def encoder_reference(x, params):
    batch, seq, _ = x.shape
    layer_in = x
    for lp in params["gru_layers"]:
        hid = lp["w_hh_t"].shape[0]
        h = jnp.zeros((batch, hid), jnp.float32)
        outs = []
        for t in range(seq):
            gi = layer_in[:, t, :] @ lp["w_ih_t"] + lp["b_ih"]
            gh = h @ lp["w_hh_t"] + lp["b_hh"]
            r = jax.nn.sigmoid(gi[:, :hid] + gh[:, :hid])
            z = jax.nn.sigmoid(gi[:, hid:2 * hid] + gh[:, hid:2 * hid])
            n = jnp.tanh(gi[:, 2 * hid:] + r * gh[:, 2 * hid:])
            h = (1.0 - z) * n + z * h
            outs.append(h)
        layer_in = jnp.stack(outs, axis=1)
    hidden = layer_in
    class_out = hidden @ params["w_class_t"] + params["b_class"]
    return class_out, hidden


if __name__ == "__main__":
    # Small shapes implied by the forward: x is (batch, seq, input_size).
    batch, seq, input_size = 2, 8, 16
    hid_dim, n_class, n_layers = 32, 4, 2

    key = jax.random.PRNGKey(0)
    key, kx, kp = jax.random.split(key, 3)
    x = jax.random.normal(kx, (batch, seq, input_size), jnp.float32)
    raw_params = init_params(kp, input_size, hid_dim, n_class, n_layers)
    packed_params = pack_params(raw_params, hid_dim, n_class)

    class_out, hidden = encoder_forward(x, packed_params, hid_dim=hid_dim, n_class=n_class)
    class_out = jax.block_until_ready(class_out)
    hidden = jax.block_until_ready(hidden)

    # Sanity-check vs. pure-JAX reference (PyTorch semantics).
    ref_class, ref_hidden = encoder_reference(x, raw_params)
    tol = 1e-5 if not USE_BF16_MXU else 2e-2
    assert class_out.shape == (batch, seq, n_class)
    assert hidden.shape == (batch, seq, hid_dim)
    assert jnp.allclose(hidden, ref_hidden, atol=tol, rtol=tol)
    assert jnp.allclose(class_out, ref_class, atol=tol, rtol=tol)

    print("KERNEL_OK")
</pallas_src>

<mosaic_0001>
module attributes {stable_mosaic.version = 11 : i64} {
  func.func @_encoder_fused_kernel(%arg0: memref<64x128xf32, #tpu.memory_space<vmem>>, %arg1: memref<128x384xf32, #tpu.memory_space<vmem>>, %arg2: memref<128x384xf32, #tpu.memory_space<vmem>>, %arg3: memref<1x384xf32, #tpu.memory_space<vmem>>, %arg4: memref<1x128xf32, #tpu.memory_space<vmem>>, %arg5: memref<128x384xf32, #tpu.memory_space<vmem>>, %arg6: memref<128x384xf32, #tpu.memory_space<vmem>>, %arg7: memref<1x384xf32, #tpu.memory_space<vmem>>, %arg8: memref<1x128xf32, #tpu.memory_space<vmem>>, %arg9: memref<128x128xf32, #tpu.memory_space<vmem>>, %arg10: memref<1x128xf32, #tpu.memory_space<vmem>>, %arg11: memref<64x128xf32, #tpu.memory_space<vmem>>, %arg12: memref<64x128xf32, #tpu.memory_space<vmem>>, %arg13: memref<64x384xf32, #tpu.memory_space<vmem>>, %arg14: memref<64x128xf32, #tpu.memory_space<vmem>>) attributes {dimension_semantics = [], scalar_prefetch = 0 : i64, scratch_operands = 2 : i64, tpu.core_type = #tpu.core_type<tc>} {
    %c0 = arith.constant 0 : index
    %c0_0 = arith.constant 0 : index
    %0 = vector.load %arg0[%c0, %c0_0] : memref<64x128xf32, #tpu.memory_space<vmem>>, vector<64x128xf32>
    %c0_1 = arith.constant 0 : index
    %c0_2 = arith.constant 0 : index
    %1 = vector.load %arg1[%c0_1, %c0_2] : memref<128x384xf32, #tpu.memory_space<vmem>>, vector<128x384xf32>
    %cst = arith.constant dense<0.000000e+00> : vector<64x384xf32>
    %2 = tpu.matmul %0, %1, %cst {dimension_numbers = #tpu.dot_dimension_numbers<[1], [0], [0], [1], [0, 0, 1, 1], [], []>} : vector<64x128xf32>, vector<128x384xf32>, vector<64x384xf32> -> vector<64x384xf32>
    %c0_3 = arith.constant 0 : index
    %c0_4 = arith.constant 0 : index
    %3 = vector.load %arg3[%c0_3, %c0_4] : memref<1x384xf32, #tpu.memory_space<vmem>>, vector<1x384xf32>
    %4 = vector.broadcast %3 : vector<1x384xf32> to vector<64x384xf32>
    %5 = arith.addf %2, %4 : vector<64x384xf32>
    %c0_5 = arith.constant 0 : index
    %c0_6 = arith.constant 0 : index
    %6 = vector.load %arg13[%c0_5, %c0_6] : memref<64x384xf32, #tpu.memory_space<vmem>>, vector<64x384xf32>
    tpu.vector_store %arg13[%c0_5, %c0_6], %5 {strides = array<i32>} : memref<64x384xf32, #tpu.memory_space<vmem>>, vector<64x384xf32>,
    %c0_7 = arith.constant 0 : index
    %c0_8 = arith.constant 0 : index
    %7 = vector.load %arg2[%c0_7, %c0_8] : memref<128x384xf32, #tpu.memory_space<vmem>>, vector<128x384xf32>
    %c0_9 = arith.constant 0 : index
    %c0_10 = arith.constant 0 : index
    %8 = vector.load %arg4[%c0_9, %c0_10] : memref<1x128xf32, #tpu.memory_space<vmem>>, vector<1x128xf32>
    %9 = vector.shape_cast %8 : vector<1x128xf32> to vector<1x128xf32>
    %10 = vector.broadcast %9 : vector<1x128xf32> to vector<8x128xf32>
    %cst_11 = arith.constant 0.000000e+00 : f32
    %11 = vector.broadcast %cst_11 : f32 to vector<8x128xf32>
    %c0_i32 = arith.constant 0 : i32
    %c8_i32 = arith.constant 8 : i32
    %12 = arith.muli %c0_i32, %c8_i32 : i32
    %13 = tpu.assume_multiple %12, 8 : i32
    %14 = arith.index_cast %13 : i32 to index
    %c0_12 = arith.constant 0 : index
    %15 = vector.load %arg13[%14, %c0_12] : memref<64x384xf32, #tpu.memory_space<vmem>>, vector<8x384xf32>
    %cst_13 = arith.constant dense<0.000000e+00> : vector<8x384xf32>
    %16 = tpu.matmul %11, %7, %cst_13 {dimension_numbers = #tpu.dot_dimension_numbers<[1], [0], [0], [1], [0, 0, 1, 1], [], []>} : vector<8x128xf32>, vector<128x384xf32>, vector<8x384xf32> -> vector<8x384xf32>
    %17 = vector.extract_strided_slice %15 {offsets = [0, 0], sizes = [8, 128], strides = [1, 1]} : vector<8x384xf32> to vector<8x128xf32>
    %18 = vector.extract_strided_slice %16 {offsets = [0, 0], sizes = [8, 128], strides = [1, 1]} : vector<8x384xf32> to vector<8x128xf32>
    %19 = arith.addf %17, %18 : vector<8x128xf32>
    %20 = arith.negf %19 : vector<8x128xf32>
    %21 = math.exp %20 : vector<8x128xf32>
    %cst_14 = arith.constant 1.000000e+00 : f32
    %22 = vector.broadcast %cst_14 : f32 to vector<8x128xf32>
    %23 = arith.addf %22, %21 : vector<8x128xf32>
    %24 = arith.divf %22, %23 : vector<8x128xf32>
    %25 = vector.extract_strided_slice %15 {offsets = [0, 128], sizes = [8, 128], strides = [1, 1]} : vector<8x384xf32> to vector<8x128xf32>
    %26 = vector.extract_strided_slice %16 {offsets = [0, 128], sizes = [8, 128], strides = [1, 1]} : vector<8x384xf32> to vector<8x128xf32>
    %27 = arith.addf %25, %26 : vector<8x128xf32>
    %28 = arith.negf %27 : vector<8x128xf32>
    %29 = math.exp %28 : vector<8x128xf32>
    %cst_15 = arith.constant 1.000000e+00 : f32
    %30 = vector.broadcast %cst_15 : f32 to vector<8x128xf32>
    %31 = arith.addf %30, %29 : vector<8x128xf32>
    %32 = arith.divf %30, %31 : vector<8x128xf32>
    %33 = vector.extract_strided_slice %15 {offsets = [0, 256], sizes = [8, 128], strides = [1, 1]} : vector<8x384xf32> to vector<8x128xf32>
    %34 = vector.extract_strided_slice %16 {offsets = [0, 256], sizes = [8, 128], strides = [1, 1]} : vector<8x384xf32> to vector<8x128xf32>
    %35 = arith.addf %34, %10 : vector<8x128xf32>
    %36 = arith.mulf %24, %35 : vector<8x128xf32>
    %37 = arith.addf %33, %36 : vector<8x128xf32>
    %38 = math.tanh %37 : vector<8x128xf32>
    %cst_16 = arith.constant 1.000000e+00 : f32
    %39 = vector.broadcast %cst_16 : f32 to vector<8x128xf32>
    %40 = arith.subf %39, %32 : vector<8x128xf32>
    %41 = arith.mulf %40, %38 : vector<8x128xf32>
    %42 = arith.mulf %32, %11 : vector<8x128xf32>
    %43 = arith.addf %41, %42 : vector<8x128xf32>
    %44 = arith.index_cast %13 : i32 to index
    %c0_17 = arith.constant 0 : index
    %45 = vector.load %arg14[%44, %c0_17] : memref<64x128xf32, #tpu.memory_space<vmem>>, vector<8x128xf32>
    tpu.vector_store %arg14[%44, %c0_17], %43 {strides = array<i32>} : memref<64x128xf32, #tpu.memory_space<vmem>>, vector<8x128xf32>,
    %c1_i32 = arith.constant 1 : i32
    %c8_i32_18 = arith.constant 8 : i32
    %46 = arith.muli %c1_i32, %c8_i32_18 : i32
    %47 = tpu.assume_multiple %46, 8 : i32
    %48 = arith.index_cast %47 : i32 to index
    %c0_19 = arith.constant 0 : index
    %49 = vector.load %arg13[%48, %c0_19] : memref<64x384xf32, #tpu.memory_space<vmem>>, vector<8x384xf32>
    %cst_20 = arith.constant dense<0.000000e+00> : vector<8x384xf32>
    %50 = tpu.matmul %43, %7, %cst_20 {dimension_numbers = #tpu.dot_dimension_numbers<[1], [0], [0], [1], [0, 0, 1, 1], [], []>} : vector<8x128xf32>, vector<128x384xf32>, vector<8x384xf32> -> vector<8x384xf32>
    %51 = vector.extract_strided_slice %49 {offsets = [0, 0], sizes = [8, 128], strides = [1, 1]} : vector<8x384xf32> to vector<8x128xf32>
    %52 = vector.extract_strided_slice %50 {offsets = [0, 0], sizes = [8, 128], strides = [1, 1]} : vector<8x384xf32> to vector<8x128xf32>
    %53 = arith.addf %51, %52 : vector<8x128xf32>
    %54 = arith.negf %53 : vector<8x128xf32>
    %55 = math.exp %54 : vector<8x128xf32>
    %cst_21 = arith.constant 1.000000e+00 : f32
    %56 = vector.broadcast %cst_21 : f32 to vector<8x128xf32>
    %57 = arith.addf %56, %55 : vector<8x128xf32>
    %58 = arith.divf %56, %57 : vector<8x128xf32>
    %59 = vector.extract_strided_slice %49 {offsets = [0, 128], sizes = [8, 128], strides = [1, 1]} : vector<8x384xf32> to vector<8x128xf32>
    %60 = vector.extract_strided_slice %50 {offsets = [0, 128], sizes = [8, 128], strides = [1, 1]} : vector<8x384xf32> to vector<8x128xf32>
    %61 = arith.addf %59, %60 : vector<8x128xf32>
    %62 = arith.negf %61 : vector<8x128xf32>
    %63 = math.exp %62 : vector<8x128xf32>
    %cst_22 = arith.constant 1.000000e+00 : f32
    %64 = vector.broadcast %cst_22 : f32 to vector<8x128xf32>
    %65 = arith.addf %64, %63 : vector<8x128xf32>
    %66 = arith.divf %64, %65 : vector<8x128xf32>
    %67 = vector.extract_strided_slice %49 {offsets = [0, 256], sizes = [8, 128], strides = [1, 1]} : vector<8x384xf32> to vector<8x128xf32>
    %68 = vector.extract_strided_slice %50 {offsets = [0, 256], sizes = [8, 128], strides = [1, 1]} : vector<8x384xf32> to vector<8x128xf32>
    %69 = arith.addf %68, %10 : vector<8x128xf32>
    %70 = arith.mulf %58, %69 : vector<8x128xf32>
    %71 = arith.addf %67, %70 : vector<8x128xf32>
    %72 = math.tanh %71 : vector<8x128xf32>
    %cst_23 = arith.constant 1.000000e+00 : f32
    %73 = vector.broadcast %cst_23 : f32 to vector<8x128xf32>
    %74 = arith.subf %73, %66 : vector<8x128xf32>
    %75 = arith.mulf %74, %72 : vector<8x128xf32>
    %76 = arith.mulf %66, %43 : vector<8x128xf32>
    %77 = arith.addf %75, %76 : vector<8x128xf32>
    %78 = arith.index_cast %47 : i32 to index
    %c0_24 = arith.constant 0 : index
    %79 = vector.load %arg14[%78, %c0_24] : memref<64x128xf32, #tpu.memory_space<vmem>>, vector<8x128xf32>
    tpu.vector_store %arg14[%78, %c0_24], %77 {strides = array<i32>} : memref<64x128xf32, #tpu.memory_space<vmem>>, vector<8x128xf32>,
    %c2_i32 = arith.constant 2 : i32
    %c8_i32_25 = arith.constant 8 : i32
    %80 = arith.muli %c2_i32, %c8_i32_25 : i32
    %81 = tpu.assume_multiple %80, 8 : i32
    %82 = arith.index_cast %81 : i32 to index
    %c0_26 = arith.constant 0 : index
    %83 = vector.load %arg13[%82, %c0_26] : memref<64x384xf32, #tpu.memory_space<vmem>>, vector<8x384xf32>
    %cst_27 = arith.constant dense<0.000000e+00> : vector<8x384xf32>
    %84 = tpu.matmul %77, %7, %cst_27 {dimension_numbers = #tpu.dot_dimension_numbers<[1], [0], [0], [1], [0, 0, 1, 1], [], []>} : vector<8x128xf32>, vector<128x384xf32>, vector<8x384xf32> -> vector<8x384xf32>
    %85 = vector.extract_strided_slice %83 {offsets = [0, 0], sizes = [8, 128], strides = [1, 1]} : vector<8x384xf32> to vector<8x128xf32>
    %86 = vector.extract_strided_slice %84 {offsets = [0, 0], sizes = [8, 128], strides = [1, 1]} : vector<8x384xf32> to vector<8x128xf32>
    %87 = arith.addf %85, %86 : vector<8x128xf32>
    %88 = arith.negf %87 : vector<8x128xf32>
    %89 = math.exp %88 : vector<8x128xf32>
    %cst_28 = arith.constant 1.000000e+00 : f32
    %90 = vector.broadcast %cst_28 : f32 to vector<8x128xf32>
    %91 = arith.addf %90, %89 : vector<8x128xf32>
    %92 = arith.divf %90, %91 : vector<8x128xf32>
    %93 = vector.extract_strided_slice %83 {offsets = [0, 128], sizes = [8, 128], strides = [1, 1]} : vector<8x384xf32> to vector<8x128xf32>
    %94 = vector.extract_strided_slice %84 {offsets = [0, 128], sizes = [8, 128], strides = [1, 1]} : vector<8x384xf32> to vector<8x128xf32>
    %95 = arith.addf %93, %94 : vector<8x128xf32>
    %96 = arith.negf %95 : vector<8x128xf32>
    %97 = math.exp %96 : vector<8x128xf32>
    %cst_29 = arith.constant 1.000000e+00 : f32
    %98 = vector.broadcast %cst_29 : f32 to vector<8x128xf32>
    %99 = arith.addf %98, %97 : vector<8x128xf32>
    %100 = arith.divf %98, %99 : vector<8x128xf32>
    %101 = vector.extract_strided_slice %83 {offsets = [0, 256], sizes = [8, 128], strides = [1, 1]} : vector<8x384xf32> to vector<8x128xf32>
    %102 = vector.extract_strided_slice %84 {offsets = [0, 256], sizes = [8, 128], strides = [1, 1]} : vector<8x384xf32> to vector<8x128xf32>
    %103 = arith.addf %102, %10 : vector<8x128xf32>
    %104 = arith.mulf %92, %103 : vector<8x128xf32>
    %105 = arith.addf %101, %104 : vector<8x128xf32>
    %106 = math.tanh %105 : vector<8x128xf32>
    %cst_30 = arith.constant 1.000000e+00 : f32
    %107 = vector.broadcast %cst_30 : f32 to vector<8x128xf32>
    %108 = arith.subf %107, %100 : vector<8x128xf32>
    %109 = arith.mulf %108, %106 : vector<8x128xf32>
    %110 = arith.mulf %100, %77 : vector<8x128xf32>
    %111 = arith.addf %109, %110 : vector<8x128xf32>
    %112 = arith.index_cast %81 : i32 to index
    %c0_31 = arith.constant 0 : index
    %113 = vector.load %arg14[%112, %c0_31] : memref<64x128xf32, #tpu.memory_space<vmem>>, vector<8x128xf32>
    tpu.vector_store %arg14[%112, %c0_31], %111 {strides = array<i32>} : memref<64x128xf32, #tpu.memory_space<vmem>>, vector<8x128xf32>,
    %c3_i32 = arith.constant 3 : i32
    %c8_i32_32 = arith.constant 8 : i32
    %114 = arith.muli %c3_i32, %c8_i32_32 : i32
    %115 = tpu.assume_multiple %114, 8 : i32
    %116 = arith.index_cast %115 : i32 to index
    %c0_33 = arith.constant 0 : index
    %117 = vector.load %arg13[%116, %c0_33] : memref<64x384xf32, #tpu.memory_space<vmem>>, vector<8x384xf32>
    %cst_34 = arith.constant dense<0.000000e+00> : vector<8x384xf32>
    %118 = tpu.matmul %111, %7, %cst_34 {dimension_numbers = #tpu.dot_dimension_numbers<[1], [0], [0], [1], [0, 0, 1, 1], [], []>} : vector<8x128xf32>, vector<128x384xf32>, vector<8x384xf32> -> vector<8x384xf32>
    %119 = vector.extract_strided_slice %117 {offsets = [0, 0], sizes = [8, 128], strides = [1, 1]} : vector<8x384xf32> to vector<8x128xf32>
    %120 = vector.extract_strided_slice %118 {offsets = [0, 0], sizes = [8, 128], strides = [1, 1]} : vector<8x384xf32> to vector<8x128xf32>
    %121 = arith.addf %119, %120 : vector<8x128xf32>
    %122 = arith.negf %121 : vector<8x128xf32>
    %123 = math.exp %122 : vector<8x128xf32>
    %cst_35 = arith.constant 1.000000e+00 : f32
    %124 = vector.broadcast %cst_35 : f32 to vector<8x128xf32>
    %125 = arith.addf %124, %123 : vector<8x128xf32>
    %126 = arith.divf %124, %125 : vector<8x128xf32>
    %127 = vector.extract_strided_slice %117 {offsets = [0, 128], sizes = [8, 128], strides = [1, 1]} : vector<8x384xf32> to vector<8x128xf32>
    %128 = vector.extract_strided_slice %118 {offsets = [0, 128], sizes = [8, 128], strides = [1, 1]} : vector<8x384xf32> to vector<8x128xf32>
    %129 = arith.addf %127, %128 : vector<8x128xf32>
    %130 = arith.negf %129 : vector<8x128xf32>
    %131 = math.exp %130 : vector<8x128xf32>
    %cst_36 = arith.constant 1.000000e+00 : f32
    %132 = vector.broadcast %cst_36 : f32 to vector<8x128xf32>
    %133 = arith.addf %132, %131 : vector<8x128xf32>
    %134 = arith.divf %132, %133 : vector<8x128xf32>
    %135 = vector.extract_strided_slice %117 {offsets = [0, 256], sizes = [8, 128], strides = [1, 1]} : vector<8x384xf32> to vector<8x128xf32>
    %136 = vector.extract_strided_slice %118 {offsets = [0, 256], sizes = [8, 128], strides = [1, 1]} : vector<8x384xf32> to vector<8x128xf32>
    %137 = arith.addf %136, %10 : vector<8x128xf32>
    %138 = arith.mulf %126, %137 : vector<8x128xf32>
    %139 = arith.addf %135, %138 : vector<8x128xf32>
    %140 = math.tanh %139 : vector<8x128xf32>
    %cst_37 = arith.constant 1.000000e+00 : f32
    %141 = vector.broadcast %cst_37 : f32 to vector<8x128xf32>
    %142 = arith.subf %141, %134 : vector<8x128xf32>
    %143 = arith.mulf %142, %140 : vector<8x128xf32>
    %144 = arith.mulf %134, %111 : vector<8x128xf32>
    %145 = arith.addf %143, %144 : vector<8x128xf32>
    %146 = arith.index_cast %115 : i32 to index
    %c0_38 = arith.constant 0 : index
    %147 = vector.load %arg14[%146, %c0_38] : memref<64x128xf32, #tpu.memory_space<vmem>>, vector<8x128xf32>
    tpu.vector_store %arg14[%146, %c0_38], %145 {strides = array<i32>} : memref<64x128xf32, #tpu.memory_space<vmem>>, vector<8x128xf32>,
    %c4_i32 = arith.constant 4 : i32
    %c8_i32_39 = arith.constant 8 : i32
    %148 = arith.muli %c4_i32, %c8_i32_39 : i32
    %149 = tpu.assume_multiple %148, 8 : i32
    %150 = arith.index_cast %149 : i32 to index
    %c0_40 = arith.constant 0 : index
    %151 = vector.load %arg13[%150, %c0_40] : memref<64x384xf32, #tpu.memory_space<vmem>>, vector<8x384xf32>
    %cst_41 = arith.constant dense<0.000000e+00> : vector<8x384xf32>
    %152 = tpu.matmul %145, %7, %cst_41 {dimension_numbers = #tpu.dot_dimension_numbers<[1], [0], [0], [1], [0, 0, 1, 1], [], []>} : vector<8x128xf32>, vector<128x384xf32>, vector<8x384xf32> -> vector<8x384xf32>
    %153 = vector.extract_strided_slice %151 {offsets = [0, 0], sizes = [8, 128], strides = [1, 1]} : vector<8x384xf32> to vector<8x128xf32>
    %154 = vector.extract_strided_slice %152 {offsets = [0, 0], sizes = [8, 128], strides = [1, 1]} : vector<8x384xf32> to vector<8x128xf32>
    %155 = arith.addf %153, %154 : vector<8x128xf32>
    %156 = arith.negf %155 : vector<8x128xf32>
    %157 = math.exp %156 : vector<8x128xf32>
    %cst_42 = arith.constant 1.000000e+00 : f32
    %158 = vector.broadcast %cst_42 : f32 to vector<8x128xf32>
    %159 = arith.addf %158, %157 : vector<8x128xf32>
    %160 = arith.divf %158, %159 : vector<8x128xf32>
    %161 = vector.extract_strided_slice %151 {offsets = [0, 128], sizes = [8, 128], strides = [1, 1]} : vector<8x384xf32> to vector<8x128xf32>
    %162 = vector.extract_strided_slice %152 {offsets = [0, 128], sizes = [8, 128], strides = [1, 1]} : vector<8x384xf32> to vector<8x128xf32>
    %163 = arith.addf %161, %162 : vector<8x128xf32>
    %164 = arith.negf %163 : vector<8x128xf32>
    %165 = math.exp %164 : vector<8x128xf32>
    %cst_43 = arith.constant 1.000000e+00 : f32
    %166 = vector.broadcast %cst_43 : f32 to vector<8x128xf32>
    %167 = arith.addf %166, %165 : vector<8x128xf32>
    %168 = arith.divf %166, %167 : vector<8x128xf32>
    %169 = vector.extract_strided_slice %151 {offsets = [0, 256], sizes = [8, 128], strides = [1, 1]} : vector<8x384xf32> to vector<8x128xf32>
    %170 = vector.extract_strided_slice %152 {offsets = [0, 256], sizes = [8, 128], strides = [1, 1]} : vector<8x384xf32> to vector<8x128xf32>
    %171 = arith.addf %170, %10 : vector<8x128xf32>
    %172 = arith.mulf %160, %171 : vector<8x128xf32>
    %173 = arith.addf %169, %172 : vector<8x128xf32>
    %174 = math.tanh %173 : vector<8x128xf32>
    %cst_44 = arith.constant 1.000000e+00 : f32
    %175 = vector.broadcast %cst_44 : f32 to vector<8x128xf32>
    %176 = arith.subf %175, %168 : vector<8x128xf32>
    %177 = arith.mulf %176, %174 : vector<8x128xf32>
    %178 = arith.mulf %168, %145 : vector<8x128xf32>
    %179 = arith.addf %177, %178 : vector<8x128xf32>
    %180 = arith.index_cast %149 : i32 to index
    %c0_45 = arith.constant 0 : index
    %181 = vector.load %arg14[%180, %c0_45] : memref<64x128xf32, #tpu.memory_space<vmem>>, vector<8x128xf32>
    tpu.vector_store %arg14[%180, %c0_45], %179 {strides = array<i32>} : memref<64x128xf32, #tpu.memory_space<vmem>>, vector<8x128xf32>,
    %c5_i32 = arith.constant 5 : i32
    %c8_i32_46 = arith.constant 8 : i32
    %182 = arith.muli %c5_i32, %c8_i32_46 : i32
    %183 = tpu.assume_multiple %182, 8 : i32
    %184 = arith.index_cast %183 : i32 to index
    %c0_47 = arith.constant 0 : index
    %185 = vector.load %arg13[%184, %c0_47] : memref<64x384xf32, #tpu.memory_space<vmem>>, vector<8x384xf32>
    %cst_48 = arith.constant dense<0.000000e+00> : vector<8x384xf32>
    %186 = tpu.matmul %179, %7, %cst_48 {dimension_numbers = #tpu.dot_dimension_numbers<[1], [0], [0], [1], [0, 0, 1, 1], [], []>} : vector<8x128xf32>, vector<128x384xf32>, vector<8x384xf32> -> vector<8x384xf32>
    %187 = vector.extract_strided_slice %185 {offsets = [0, 0], sizes = [8, 128], strides = [1, 1]} : vector<8x384xf32> to vector<8x128xf32>
    %188 = vector.extract_strided_slice %186 {offsets = [0, 0], sizes = [8, 128], strides = [1, 1]} : vector<8x384xf32> to vector<8x128xf32>
    %189 = arith.addf %187, %188 : vector<8x128xf32>
    %190 = arith.negf %189 : vector<8x128xf32>
    %191 = math.exp %190 : vector<8x128xf32>
    %cst_49 = arith.constant 1.000000e+00 : f32
    %192 = vector.broadcast %cst_49 : f32 to vector<8x128xf32>
    %193 = arith.addf %192, %191 : vector<8x128xf32>
    %194 = arith.divf %192, %193 : vector<8x128xf32>
    %195 = vector.extract_strided_slice %185 {offsets = [0, 128], sizes = [8, 128], strides = [1, 1]} : vector<8x384xf32> to vector<8x128xf32>
    %196 = vector.extract_strided_slice %186 {offsets = [0, 128], sizes = [8, 128], strides = [1, 1]} : vector<8x384xf32> to vector<8x128xf32>
    %197 = arith.addf %195, %196 : vector<8x128xf32>
    %198 = arith.negf %197 : vector<8x128xf32>
    %199 = math.exp %198 : vector<8x128xf32>
    %cst_50 = arith.constant 1.000000e+00 : f32
    %200 = vector.broadcast %cst_50 : f32 to vector<8x128xf32>
    %201 = arith.addf %200, %199 : vector<8x128xf32>
    %202 = arith.divf %200, %201 : vector<8x128xf32>
    %203 = vector.extract_strided_slice %185 {offsets = [0, 256], sizes = [8, 128], strides = [1, 1]} : vector<8x384xf32> to vector<8x128xf32>
    %204 = vector.extract_strided_slice %186 {offsets = [0, 256], sizes = [8, 128], strides = [1, 1]} : vector<8x384xf32> to vector<8x128xf32>
    %205 = arith.addf %204, %10 : vector<8x128xf32>
    %206 = arith.mulf %194, %205 : vector<8x128xf32>
    %207 = arith.addf %203, %206 : vector<8x128xf32>
    %208 = math.tanh %207 : vector<8x128xf32>
    %cst_51 = arith.constant 1.000000e+00 : f32
    %209 = vector.broadcast %cst_51 : f32 to vector<8x128xf32>
    %210 = arith.subf %209, %202 : vector<8x128xf32>
    %211 = arith.mulf %210, %208 : vector<8x128xf32>
    %212 = arith.mulf %202, %179 : vector<8x128xf32>
    %213 = arith.addf %211, %212 : vector<8x128xf32>
    %214 = arith.index_cast %183 : i32 to index
    %c0_52 = arith.constant 0 : index
    %215 = vector.load %arg14[%214, %c0_52] : memref<64x128xf32, #tpu.memory_space<vmem>>, vector<8x128xf32>
    tpu.vector_store %arg14[%214, %c0_52], %213 {strides = array<i32>} : memref<64x128xf32, #tpu.memory_space<vmem>>, vector<8x128xf32>,
    %c6_i32 = arith.constant 6 : i32
    %c8_i32_53 = arith.constant 8 : i32
    %216 = arith.muli %c6_i32, %c8_i32_53 : i32
    %217 = tpu.assume_multiple %216, 8 : i32
    %218 = arith.index_cast %217 : i32 to index
    %c0_54 = arith.constant 0 : index
    %219 = vector.load %arg13[%218, %c0_54] : memref<64x384xf32, #tpu.memory_space<vmem>>, vector<8x384xf32>
    %cst_55 = arith.constant dense<0.000000e+00> : vector<8x384xf32>
    %220 = tpu.matmul %213, %7, %cst_55 {dimension_numbers = #tpu.dot_dimension_numbers<[1], [0], [0], [1], [0, 0, 1, 1], [], []>} : vector<8x128xf32>, vector<128x384xf32>, vector<8x384xf32> -> vector<8x384xf32>
    %221 = vector.extract_strided_slice %219 {offsets = [0, 0], sizes = [8, 128], strides = [1, 1]} : vector<8x384xf32> to vector<8x128xf32>
    %222 = vector.extract_strided_slice %220 {offsets = [0, 0], sizes = [8, 128], strides = [1, 1]} : vector<8x384xf32> to vector<8x128xf32>
    %223 = arith.addf %221, %222 : vector<8x128xf32>
    %224 = arith.negf %223 : vector<8x128xf32>
    %225 = math.exp %224 : vector<8x128xf32>
    %cst_56 = arith.constant 1.000000e+00 : f32
    %226 = vector.broadcast %cst_56 : f32 to vector<8x128xf32>
    %227 = arith.addf %226, %225 : vector<8x128xf32>
    %228 = arith.divf %226, %227 : vector<8x128xf32>
    %229 = vector.extract_strided_slice %219 {offsets = [0, 128], sizes = [8, 128], strides = [1, 1]} : vector<8x384xf32> to vector<8x128xf32>
    %230 = vector.extract_strided_slice %220 {offsets = [0, 128], sizes = [8, 128], strides = [1, 1]} : vector<8x384xf32> to vector<8x128xf32>
    %231 = arith.addf %229, %230 : vector<8x128xf32>
    %232 = arith.negf %231 : vector<8x128xf32>
    %233 = math.exp %232 : vector<8x128xf32>
    %cst_57 = arith.constant 1.000000e+00 : f32
    %234 = vector.broadcast %cst_57 : f32 to vector<8x128xf32>
    %235 = arith.addf %234, %233 : vector<8x128xf32>
    %236 = arith.divf %234, %235 : vector<8x128xf32>
    %237 = vector.extract_strided_slice %219 {offsets = [0, 256], sizes = [8, 128], strides = [1, 1]} : vector<8x384xf32> to vector<8x128xf32>
    %238 = vector.extract_strided_slice %220 {offsets = [0, 256], sizes = [8, 128], strides = [1, 1]} : vector<8x384xf32> to vector<8x128xf32>
    %239 = arith.addf %238, %10 : vector<8x128xf32>
    %240 = arith.mulf %228, %239 : vector<8x128xf32>
    %241 = arith.addf %237, %240 : vector<8x128xf32>
    %242 = math.tanh %241 : vector<8x128xf32>
    %cst_58 = arith.constant 1.000000e+00 : f32
    %243 = vector.broadcast %cst_58 : f32 to vector<8x128xf32>
    %244 = arith.subf %243, %236 : vector<8x128xf32>
    %245 = arith.mulf %244, %242 : vector<8x128xf32>
    %246 = arith.mulf %236, %213 : vector<8x128xf32>
    %247 = arith.addf %245, %246 : vector<8x128xf32>
    %248 = arith.index_cast %217 : i32 to index
    %c0_59 = arith.constant 0 : index
    %249 = vector.load %arg14[%248, %c0_59] : memref<64x128xf32, #tpu.memory_space<vmem>>, vector<8x128xf32>
    tpu.vector_store %arg14[%248, %c0_59], %247 {strides = array<i32>} : memref<64x128xf32, #tpu.memory_space<vmem>>, vector<8x128xf32>,
    %c7_i32 = arith.constant 7 : i32
    %c8_i32_60 = arith.constant 8 : i32
    %250 = arith.muli %c7_i32, %c8_i32_60 : i32
    %251 = tpu.assume_multiple %250, 8 : i32
    %252 = arith.index_cast %251 : i32 to index
    %c0_61 = arith.constant 0 : index
    %253 = vector.load %arg13[%252, %c0_61] : memref<64x384xf32, #tpu.memory_space<vmem>>, vector<8x384xf32>
    %cst_62 = arith.constant dense<0.000000e+00> : vector<8x384xf32>
    %254 = tpu.matmul %247, %7, %cst_62 {dimension_numbers = #tpu.dot_dimension_numbers<[1], [0], [0], [1], [0, 0, 1, 1], [], []>} : vector<8x128xf32>, vector<128x384xf32>, vector<8x384xf32> -> vector<8x384xf32>
    %255 = vector.extract_strided_slice %253 {offsets = [0, 0], sizes = [8, 128], strides = [1, 1]} : vector<8x384xf32> to vector<8x128xf32>
    %256 = vector.extract_strided_slice %254 {offsets = [0, 0], sizes = [8, 128], strides = [1, 1]} : vector<8x384xf32> to vector<8x128xf32>
    %257 = arith.addf %255, %256 : vector<8x128xf32>
    %258 = arith.negf %257 : vector<8x128xf32>
    %259 = math.exp %258 : vector<8x128xf32>
    %cst_63 = arith.constant 1.000000e+00 : f32
    %260 = vector.broadcast %cst_63 : f32 to vector<8x128xf32>
    %261 = arith.addf %260, %259 : vector<8x128xf32>
    %262 = arith.divf %260, %261 : vector<8x128xf32>
    %263 = vector.extract_strided_slice %253 {offsets = [0, 128], sizes = [8, 128], strides = [1, 1]} : vector<8x384xf32> to vector<8x128xf32>
    %264 = vector.extract_strided_slice %254 {offsets = [0, 128], sizes = [8, 128], strides = [1, 1]} : vector<8x384xf32> to vector<8x128xf32>
    %265 = arith.addf %263, %264 : vector<8x128xf32>
    %266 = arith.negf %265 : vector<8x128xf32>
    %267 = math.exp %266 : vector<8x128xf32>
    %cst_64 = arith.constant 1.000000e+00 : f32
    %268 = vector.broadcast %cst_64 : f32 to vector<8x128xf32>
    %269 = arith.addf %268, %267 : vector<8x128xf32>
    %270 = arith.divf %268, %269 : vector<8x128xf32>
    %271 = vector.extract_strided_slice %253 {offsets = [0, 256], sizes = [8, 128], strides = [1, 1]} : vector<8x384xf32> to vector<8x128xf32>
    %272 = vector.extract_strided_slice %254 {offsets = [0, 256], sizes = [8, 128], strides = [1, 1]} : vector<8x384xf32> to vector<8x128xf32>
    %273 = arith.addf %272, %10 : vector<8x128xf32>
    %274 = arith.mulf %262, %273 : vector<8x128xf32>
    %275 = arith.addf %271, %274 : vector<8x128xf32>
    %276 = math.tanh %275 : vector<8x128xf32>
    %cst_65 = arith.constant 1.000000e+00 : f32
    %277 = vector.broadcast %cst_65 : f32 to vector<8x128xf32>
    %278 = arith.subf %277, %270 : vector<8x128xf32>
    %279 = arith.mulf %278, %276 : vector<8x128xf32>
    %280 = arith.mulf %270, %247 : vector<8x128xf32>
    %281 = arith.addf %279, %280 : vector<8x128xf32>
    %282 = arith.index_cast %251 : i32 to index
    %c0_66 = arith.constant 0 : index
    %283 = vector.load %arg14[%282, %c0_66] : memref<64x128xf32, #tpu.memory_space<vmem>>, vector<8x128xf32>
    tpu.vector_store %arg14[%282, %c0_66], %281 {strides = array<i32>} : memref<64x128xf32, #tpu.memory_space<vmem>>, vector<8x128xf32>,
    %c8_i32_67 = arith.constant 8 : i32
    %c0_68 = arith.constant 0 : index
    %c0_69 = arith.constant 0 : index
    %284 = vector.load %arg14[%c0_68, %c0_69] : memref<64x128xf32, #tpu.memory_space<vmem>>, vector<64x128xf32>
    %c0_70 = arith.constant 0 : index
    %c0_71 = arith.constant 0 : index
    %285 = vector.load %arg5[%c0_70, %c0_71] : memref<128x384xf32, #tpu.memory_space<vmem>>, vector<128x384xf32>
    %cst_72 = arith.constant dense<0.000000e+00> : vector<64x384xf32>
    %286 = tpu.matmul %284, %285, %cst_72 {dimension_numbers = #tpu.dot_dimension_numbers<[1], [0], [0], [1], [0, 0, 1, 1], [], []>} : vector<64x128xf32>, vector<128x384xf32>, vector<64x384xf32> -> vector<64x384xf32>
    %c0_73 = arith.constant 0 : index
    %c0_74 = arith.constant 0 : index
    %287 = vector.load %arg7[%c0_73, %c0_74] : memref<1x384xf32, #tpu.memory_space<vmem>>, vector<1x384xf32>
    %288 = vector.broadcast %287 : vector<1x384xf32> to vector<64x384xf32>
    %289 = arith.addf %286, %288 : vector<64x384xf32>
    %c0_75 = arith.constant 0 : index
    %c0_76 = arith.constant 0 : index
    %290 = vector.load %arg13[%c0_75, %c0_76] : memref<64x384xf32, #tpu.memory_space<vmem>>, vector<64x384xf32>
    tpu.vector_store %arg13[%c0_75, %c0_76], %289 {strides = array<i32>} : memref<64x384xf32, #tpu.memory_space<vmem>>, vector<64x384xf32>,
    %c0_77 = arith.constant 0 : index
    %c0_78 = arith.constant 0 : index
    %291 = vector.load %arg6[%c0_77, %c0_78] : memref<128x384xf32, #tpu.memory_space<vmem>>, vector<128x384xf32>
    %c0_79 = arith.constant 0 : index
    %c0_80 = arith.constant 0 : index
    %292 = vector.load %arg8[%c0_79, %c0_80] : memref<1x128xf32, #tpu.memory_space<vmem>>, vector<1x128xf32>
    %293 = vector.shape_cast %292 : vector<1x128xf32> to vector<1x128xf32>
    %294 = vector.broadcast %293 : vector<1x128xf32> to vector<8x128xf32>
    %cst_81 = arith.constant 0.000000e+00 : f32
    %295 = vector.broadcast %cst_81 : f32 to vector<8x128xf32>
    %c0_i32_82 = arith.constant 0 : i32
    %c8_i32_83 = arith.constant 8 : i32
    %296 = arith.muli %c0_i32_82, %c8_i32_83 : i32
    %297 = tpu.assume_multiple %296, 8 : i32
    %298 = arith.index_cast %297 : i32 to index
    %c0_84 = arith.constant 0 : index
    %299 = vector.load %arg13[%298, %c0_84] : memref<64x384xf32, #tpu.memory_space<vmem>>, vector<8x384xf32>
    %cst_85 = arith.constant dense<0.000000e+00> : vector<8x384xf32>
    %300 = tpu.matmul %295, %291, %cst_85 {dimension_numbers = #tpu.dot_dimension_numbers<[1], [0], [0], [1], [0, 0, 1, 1], [], []>} : vector<8x128xf32>, vector<128x384xf32>, vector<8x384xf32> -> vector<8x384xf32>
    %301 = vector.extract_strided_slice %299 {offsets = [0, 0], sizes = [8, 128], strides = [1, 1]} : vector<8x384xf32> to vector<8x128xf32>
    %302 = vector.extract_strided_slice %300 {offsets = [0, 0], sizes = [8, 128], strides = [1, 1]} : vector<8x384xf32> to vector<8x128xf32>
    %303 = arith.addf %301, %302 : vector<8x128xf32>
    %304 = arith.negf %303 : vector<8x128xf32>
    %305 = math.exp %304 : vector<8x128xf32>
    %cst_86 = arith.constant 1.000000e+00 : f32
    %306 = vector.broadcast %cst_86 : f32 to vector<8x128xf32>
    %307 = arith.addf %306, %305 : vector<8x128xf32>
    %308 = arith.divf %306, %307 : vector<8x128xf32>
    %309 = vector.extract_strided_slice %299 {offsets = [0, 128], sizes = [8, 128], strides = [1, 1]} : vector<8x384xf32> to vector<8x128xf32>
    %310 = vector.extract_strided_slice %300 {offsets = [0, 128], sizes = [8, 128], strides = [1, 1]} : vector<8x384xf32> to vector<8x128xf32>
    %311 = arith.addf %309, %310 : vector<8x128xf32>
    %312 = arith.negf %311 : vector<8x128xf32>
    %313 = math.exp %312 : vector<8x128xf32>
    %cst_87 = arith.constant 1.000000e+00 : f32
    %314 = vector.broadcast %cst_87 : f32 to vector<8x128xf32>
    %315 = arith.addf %314, %313 : vector<8x128xf32>
    %316 = arith.divf %314, %315 : vector<8x128xf32>
    %317 = vector.extract_strided_slice %299 {offsets = [0, 256], sizes = [8, 128], strides = [1, 1]} : vector<8x384xf32> to vector<8x128xf32>
    %318 = vector.extract_strided_slice %300 {offsets = [0, 256], sizes = [8, 128], strides = [1, 1]} : vector<8x384xf32> to vector<8x128xf32>
    %319 = arith.addf %318, %294 : vector<8x128xf32>
    %320 = arith.mulf %308, %319 : vector<8x128xf32>
    %321 = arith.addf %317, %320 : vector<8x128xf32>
    %322 = math.tanh %321 : vector<8x128xf32>
    %cst_88 = arith.constant 1.000000e+00 : f32
    %323 = vector.broadcast %cst_88 : f32 to vector<8x128xf32>
    %324 = arith.subf %323, %316 : vector<8x128xf32>
    %325 = arith.mulf %324, %322 : vector<8x128xf32>
    %326 = arith.mulf %316, %295 : vector<8x128xf32>
    %327 = arith.addf %325, %326 : vector<8x128xf32>
    %328 = arith.index_cast %297 : i32 to index
    %c0_89 = arith.constant 0 : index
    %329 = vector.load %arg11[%328, %c0_89] : memref<64x128xf32, #tpu.memory_space<vmem>>, vector<8x128xf32>
    tpu.vector_store %arg11[%328, %c0_89], %327 {strides = array<i32>} : memref<64x128xf32, #tpu.memory_space<vmem>>, vector<8x128xf32>,
    %c1_i32_90 = arith.constant 1 : i32
    %c8_i32_91 = arith.constant 8 : i32
    %330 = arith.muli %c1_i32_90, %c8_i32_91 : i32
    %331 = tpu.assume_multiple %330, 8 : i32
    %332 = arith.index_cast %331 : i32 to index
    %c0_92 = arith.constant 0 : index
    %333 = vector.load %arg13[%332, %c0_92] : memref<64x384xf32, #tpu.memory_space<vmem>>, vector<8x384xf32>
    %cst_93 = arith.constant dense<0.000000e+00> : vector<8x384xf32>
    %334 = tpu.matmul %327, %291, %cst_93 {dimension_numbers = #tpu.dot_dimension_numbers<[1], [0], [0], [1], [0, 0, 1, 1], [], []>} : vector<8x128xf32>, vector<128x384xf32>, vector<8x384xf32> -> vector<8x384xf32>
    %335 = vector.extract_strided_slice %333 {offsets = [0, 0], sizes = [8, 128], strides = [1, 1]} : vector<8x384xf32> to vector<8x128xf32>
    %336 = vector.extract_strided_slice %334 {offsets = [0, 0], sizes = [8, 128], strides = [1, 1]} : vector<8x384xf32> to vector<8x128xf32>
    %337 = arith.addf %335, %336 : vector<8x128xf32>
    %338 = arith.negf %337 : vector<8x128xf32>
    %339 = math.exp %338 : vector<8x128xf32>
    %cst_94 = arith.constant 1.000000e+00 : f32
    %340 = vector.broadcast %cst_94 : f32 to vector<8x128xf32>
    %341 = arith.addf %340, %339 : vector<8x128xf32>
    %342 = arith.divf %340, %341 : vector<8x128xf32>
    %343 = vector.extract_strided_slice %333 {offsets = [0, 128], sizes = [8, 128], strides = [1, 1]} : vector<8x384xf32> to vector<8x128xf32>
    %344 = vector.extract_strided_slice %334 {offsets = [0, 128], sizes = [8, 128], strides = [1, 1]} : vector<8x384xf32> to vector<8x128xf32>
    %345 = arith.addf %343, %344 : vector<8x128xf32>
    %346 = arith.negf %345 : vector<8x128xf32>
    %347 = math.exp %346 : vector<8x128xf32>
    %cst_95 = arith.constant 1.000000e+00 : f32
    %348 = vector.broadcast %cst_95 : f32 to vector<8x128xf32>
    %349 = arith.addf %348, %347 : vector<8x128xf32>
    %350 = arith.divf %348, %349 : vector<8x128xf32>
    %351 = vector.extract_strided_slice %333 {offsets = [0, 256], sizes = [8, 128], strides = [1, 1]} : vector<8x384xf32> to vector<8x128xf32>
    %352 = vector.extract_strided_slice %334 {offsets = [0, 256], sizes = [8, 128], strides = [1, 1]} : vector<8x384xf32> to vector<8x128xf32>
    %353 = arith.addf %352, %294 : vector<8x128xf32>
    %354 = arith.mulf %342, %353 : vector<8x128xf32>
    %355 = arith.addf %351, %354 : vector<8x128xf32>
    %356 = math.tanh %355 : vector<8x128xf32>
    %cst_96 = arith.constant 1.000000e+00 : f32
    %357 = vector.broadcast %cst_96 : f32 to vector<8x128xf32>
    %358 = arith.subf %357, %350 : vector<8x128xf32>
    %359 = arith.mulf %358, %356 : vector<8x128xf32>
    %360 = arith.mulf %350, %327 : vector<8x128xf32>
    %361 = arith.addf %359, %360 : vector<8x128xf32>
    %362 = arith.index_cast %331 : i32 to index
    %c0_97 = arith.constant 0 : index
    %363 = vector.load %arg11[%362, %c0_97] : memref<64x128xf32, #tpu.memory_space<vmem>>, vector<8x128xf32>
    tpu.vector_store %arg11[%362, %c0_97], %361 {strides = array<i32>} : memref<64x128xf32, #tpu.memory_space<vmem>>, vector<8x128xf32>,
    %c2_i32_98 = arith.constant 2 : i32
    %c8_i32_99 = arith.constant 8 : i32
    %364 = arith.muli %c2_i32_98, %c8_i32_99 : i32
    %365 = tpu.assume_multiple %364, 8 : i32
    %366 = arith.index_cast %365 : i32 to index
    %c0_100 = arith.constant 0 : index
    %367 = vector.load %arg13[%366, %c0_100] : memref<64x384xf32, #tpu.memory_space<vmem>>, vector<8x384xf32>
    %cst_101 = arith.constant dense<0.000000e+00> : vector<8x384xf32>
    %368 = tpu.matmul %361, %291, %cst_101 {dimension_numbers = #tpu.dot_dimension_numbers<[1], [0], [0], [1], [0, 0, 1, 1], [], []>} : vector<8x128xf32>, vector<128x384xf32>, vector<8x384xf32> -> vector<8x384xf32>
    %369 = vector.extract_strided_slice %367 {offsets = [0, 0], sizes = [8, 128], strides = [1, 1]} : vector<8x384xf32> to vector<8x128xf32>
    %370 = vector.extract_strided_slice %368 {offsets = [0, 0], sizes = [8, 128], strides = [1, 1]} : vector<8x384xf32> to vector<8x128xf32>
    %371 = arith.addf %369, %370 : vector<8x128xf32>
    %372 = arith.negf %371 : vector<8x128xf32>
    %373 = math.exp %372 : vector<8x128xf32>
    %cst_102 = arith.constant 1.000000e+00 : f32
    %374 = vector.broadcast %cst_102 : f32 to vector<8x128xf32>
    %375 = arith.addf %374, %373 : vector<8x128xf32>
    %376 = arith.divf %374, %375 : vector<8x128xf32>
    %377 = vector.extract_strided_slice %367 {offsets = [0, 128], sizes = [8, 128], strides = [1, 1]} : vector<8x384xf32> to vector<8x128xf32>
    %378 = vector.extract_strided_slice %368 {offsets = [0, 128], sizes = [8, 128], strides = [1, 1]} : vector<8x384xf32> to vector<8x128xf32>
    %379 = arith.addf %377, %378 : vector<8x128xf32>
    %380 = arith.negf %379 : vector<8x128xf32>
    %381 = math.exp %380 : vector<8x128xf32>
    %cst_103 = arith.constant 1.000000e+00 : f32
    %382 = vector.broadcast %cst_103 : f32 to vector<8x128xf32>
    %383 = arith.addf %382, %381 : vector<8x128xf32>
    %384 = arith.divf %382, %383 : vector<8x128xf32>
    %385 = vector.extract_strided_slice %367 {offsets = [0, 256], sizes = [8, 128], strides = [1, 1]} : vector<8x384xf32> to vector<8x128xf32>
    %386 = vector.extract_strided_slice %368 {offsets = [0, 256], sizes = [8, 128], strides = [1, 1]} : vector<8x384xf32> to vector<8x128xf32>
    %387 = arith.addf %386, %294 : vector<8x128xf32>
    %388 = arith.mulf %376, %387 : vector<8x128xf32>
    %389 = arith.addf %385, %388 : vector<8x128xf32>
    %390 = math.tanh %389 : vector<8x128xf32>
    %cst_104 = arith.constant 1.000000e+00 : f32
    %391 = vector.broadcast %cst_104 : f32 to vector<8x128xf32>
    %392 = arith.subf %391, %384 : vector<8x128xf32>
    %393 = arith.mulf %392, %390 : vector<8x128xf32>
    %394 = arith.mulf %384, %361 : vector<8x128xf32>
    %395 = arith.addf %393, %394 : vector<8x128xf32>
    %396 = arith.index_cast %365 : i32 to index
    %c0_105 = arith.constant 0 : index
    %397 = vector.load %arg11[%396, %c0_105] : memref<64x128xf32, #tpu.memory_space<vmem>>, vector<8x128xf32>
    tpu.vector_store %arg11[%396, %c0_105], %395 {strides = array<i32>} : memref<64x128xf32, #tpu.memory_space<vmem>>, vector<8x128xf32>,
    %c3_i32_106 = arith.constant 3 : i32
    %c8_i32_107 = arith.constant 8 : i32
    %398 = arith.muli %c3_i32_106, %c8_i32_107 : i32
    %399 = tpu.assume_multiple %398, 8 : i32
    %400 = arith.index_cast %399 : i32 to index
    %c0_108 = arith.constant 0 : index
    %401 = vector.load %arg13[%400, %c0_108] : memref<64x384xf32, #tpu.memory_space<vmem>>, vector<8x384xf32>
    %cst_109 = arith.constant dense<0.000000e+00> : vector<8x384xf32>
    %402 = tpu.matmul %395, %291, %cst_109 {dimension_numbers = #tpu.dot_dimension_numbers<[1], [0], [0], [1], [0, 0, 1, 1], [], []>} : vector<8x128xf32>, vector<128x384xf32>, vector<8x384xf32> -> vector<8x384xf32>
    %403 = vector.extract_strided_slice %401 {offsets = [0, 0], sizes = [8, 128], strides = [1, 1]} : vector<8x384xf32> to vector<8x128xf32>
    %404 = vector.extract_strided_slice %402 {offsets = [0, 0], sizes = [8, 128], strides = [1, 1]} : vector<8x384xf32> to vector<8x128xf32>
    %405 = arith.addf %403, %404 : vector<8x128xf32>
    %406 = arith.negf %405 : vector<8x128xf32>
    %407 = math.exp %406 : vector<8x128xf32>
    %cst_110 = arith.constant 1.000000e+00 : f32
    %408 = vector.broadcast %cst_110 : f32 to vector<8x128xf32>
    %409 = arith.addf %408, %407 : vector<8x128xf32>
    %410 = arith.divf %408, %409 : vector<8x128xf32>
    %411 = vector.extract_strided_slice %401 {offsets = [0, 128], sizes = [8, 128], strides = [1, 1]} : vector<8x384xf32> to vector<8x128xf32>
    %412 = vector.extract_strided_slice %402 {offsets = [0, 128], sizes = [8, 128], strides = [1, 1]} : vector<8x384xf32> to vector<8x128xf32>
    %413 = arith.addf %411, %412 : vector<8x128xf32>
    %414 = arith.negf %413 : vector<8x128xf32>
    %415 = math.exp %414 : vector<8x128xf32>
    %cst_111 = arith.constant 1.000000e+00 : f32
    %416 = vector.broadcast %cst_111 : f32 to vector<8x128xf32>
    %417 = arith.addf %416, %415 : vector<8x128xf32>
    %418 = arith.divf %416, %417 : vector<8x128xf32>
    %419 = vector.extract_strided_slice %401 {offsets = [0, 256], sizes = [8, 128], strides = [1, 1]} : vector<8x384xf32> to vector<8x128xf32>
    %420 = vector.extract_strided_slice %402 {offsets = [0, 256], sizes = [8, 128], strides = [1, 1]} : vector<8x384xf32> to vector<8x128xf32>
    %421 = arith.addf %420, %294 : vector<8x128xf32>
    %422 = arith.mulf %410, %421 : vector<8x128xf32>
    %423 = arith.addf %419, %422 : vector<8x128xf32>
    %424 = math.tanh %423 : vector<8x128xf32>
    %cst_112 = arith.constant 1.000000e+00 : f32
    %425 = vector.broadcast %cst_112 : f32 to vector<8x128xf32>
    %426 = arith.subf %425, %418 : vector<8x128xf32>
    %427 = arith.mulf %426, %424 : vector<8x128xf32>
    %428 = arith.mulf %418, %395 : vector<8x128xf32>
    %429 = arith.addf %427, %428 : vector<8x128xf32>
    %430 = arith.index_cast %399 : i32 to index
    %c0_113 = arith.constant 0 : index
    %431 = vector.load %arg11[%430, %c0_113] : memref<64x128xf32, #tpu.memory_space<vmem>>, vector<8x128xf32>
    tpu.vector_store %arg11[%430, %c0_113], %429 {strides = array<i32>} : memref<64x128xf32, #tpu.memory_space<vmem>>, vector<8x128xf32>,
    %c4_i32_114 = arith.constant 4 : i32
    %c8_i32_115 = arith.constant 8 : i32
    %432 = arith.muli %c4_i32_114, %c8_i32_115 : i32
    %433 = tpu.assume_multiple %432, 8 : i32
    %434 = arith.index_cast %433 : i32 to index
    %c0_116 = arith.constant 0 : index
    %435 = vector.load %arg13[%434, %c0_116] : memref<64x384xf32, #tpu.memory_space<vmem>>, vector<8x384xf32>
    %cst_117 = arith.constant dense<0.000000e+00> : vector<8x384xf32>
    %436 = tpu.matmul %429, %291, %cst_117 {dimension_numbers = #tpu.dot_dimension_numbers<[1], [0], [0], [1], [0, 0, 1, 1], [], []>} : vector<8x128xf32>, vector<128x384xf32>, vector<8x384xf32> -> vector<8x384xf32>
    %437 = vector.extract_strided_slice %435 {offsets = [0, 0], sizes = [8, 128], strides = [1, 1]} : vector<8x384xf32> to vector<8x128xf32>
    %438 = vector.extract_strided_slice %436 {offsets = [0, 0], sizes = [8, 128], strides = [1, 1]} : vector<8x384xf32> to vector<8x128xf32>
    %439 = arith.addf %437, %438 : vector<8x128xf32>
    %440 = arith.negf %439 : vector<8x128xf32>
    %441 = math.exp %440 : vector<8x128xf32>
    %cst_118 = arith.constant 1.000000e+00 : f32
    %442 = vector.broadcast %cst_118 : f32 to vector<8x128xf32>
    %443 = arith.addf %442, %441 : vector<8x128xf32>
    %444 = arith.divf %442, %443 : vector<8x128xf32>
    %445 = vector.extract_strided_slice %435 {offsets = [0, 128], sizes = [8, 128], strides = [1, 1]} : vector<8x384xf32> to vector<8x128xf32>
    %446 = vector.extract_strided_slice %436 {offsets = [0, 128], sizes = [8, 128], strides = [1, 1]} : vector<8x384xf32> to vector<8x128xf32>
    %447 = arith.addf %445, %446 : vector<8x128xf32>
    %448 = arith.negf %447 : vector<8x128xf32>
    %449 = math.exp %448 : vector<8x128xf32>
    %cst_119 = arith.constant 1.000000e+00 : f32
    %450 = vector.broadcast %cst_119 : f32 to vector<8x128xf32>
    %451 = arith.addf %450, %449 : vector<8x128xf32>
    %452 = arith.divf %450, %451 : vector<8x128xf32>
    %453 = vector.extract_strided_slice %435 {offsets = [0, 256], sizes = [8, 128], strides = [1, 1]} : vector<8x384xf32> to vector<8x128xf32>
    %454 = vector.extract_strided_slice %436 {offsets = [0, 256], sizes = [8, 128], strides = [1, 1]} : vector<8x384xf32> to vector<8x128xf32>
    %455 = arith.addf %454, %294 : vector<8x128xf32>
    %456 = arith.mulf %444, %455 : vector<8x128xf32>
    %457 = arith.addf %453, %456 : vector<8x128xf32>
    %458 = math.tanh %457 : vector<8x128xf32>
    %cst_120 = arith.constant 1.000000e+00 : f32
    %459 = vector.broadcast %cst_120 : f32 to vector<8x128xf32>
    %460 = arith.subf %459, %452 : vector<8x128xf32>
    %461 = arith.mulf %460, %458 : vector<8x128xf32>
    %462 = arith.mulf %452, %429 : vector<8x128xf32>
    %463 = arith.addf %461, %462 : vector<8x128xf32>
    %464 = arith.index_cast %433 : i32 to index
    %c0_121 = arith.constant 0 : index
    %465 = vector.load %arg11[%464, %c0_121] : memref<64x128xf32, #tpu.memory_space<vmem>>, vector<8x128xf32>
    tpu.vector_store %arg11[%464, %c0_121], %463 {strides = array<i32>} : memref<64x128xf32, #tpu.memory_space<vmem>>, vector<8x128xf32>,
    %c5_i32_122 = arith.constant 5 : i32
    %c8_i32_123 = arith.constant 8 : i32
    %466 = arith.muli %c5_i32_122, %c8_i32_123 : i32
    %467 = tpu.assume_multiple %466, 8 : i32
    %468 = arith.index_cast %467 : i32 to index
    %c0_124 = arith.constant 0 : index
    %469 = vector.load %arg13[%468, %c0_124] : memref<64x384xf32, #tpu.memory_space<vmem>>, vector<8x384xf32>
    %cst_125 = arith.constant dense<0.000000e+00> : vector<8x384xf32>
    %470 = tpu.matmul %463, %291, %cst_125 {dimension_numbers = #tpu.dot_dimension_numbers<[1], [0], [0], [1], [0, 0, 1, 1], [], []>} : vector<8x128xf32>, vector<128x384xf32>, vector<8x384xf32> -> vector<8x384xf32>
    %471 = vector.extract_strided_slice %469 {offsets = [0, 0], sizes = [8, 128], strides = [1, 1]} : vector<8x384xf32> to vector<8x128xf32>
    %472 = vector.extract_strided_slice %470 {offsets = [0, 0], sizes = [8, 128], strides = [1, 1]} : vector<8x384xf32> to vector<8x128xf32>
    %473 = arith.addf %471, %472 : vector<8x128xf32>
    %474 = arith.negf %473 : vector<8x128xf32>
    %475 = math.exp %474 : vector<8x128xf32>
    %cst_126 = arith.constant 1.000000e+00 : f32
    %476 = vector.broadcast %cst_126 : f32 to vector<8x128xf32>
    %477 = arith.addf %476, %475 : vector<8x128xf32>
    %478 = arith.divf %476, %477 : vector<8x128xf32>
    %479 = vector.extract_strided_slice %469 {offsets = [0, 128], sizes = [8, 128], strides = [1, 1]} : vector<8x384xf32> to vector<8x128xf32>
    %480 = vector.extract_strided_slice %470 {offsets = [0, 128], sizes = [8, 128], strides = [1, 1]} : vector<8x384xf32> to vector<8x128xf32>
    %481 = arith.addf %479, %480 : vector<8x128xf32>
    %482 = arith.negf %481 : vector<8x128xf32>
    %483 = math.exp %482 : vector<8x128xf32>
    %cst_127 = arith.constant 1.000000e+00 : f32
    %484 = vector.broadcast %cst_127 : f32 to vector<8x128xf32>
    %485 = arith.addf %484, %483 : vector<8x128xf32>
    %486 = arith.divf %484, %485 : vector<8x128xf32>
    %487 = vector.extract_strided_slice %469 {offsets = [0, 256], sizes = [8, 128], strides = [1, 1]} : vector<8x384xf32> to vector<8x128xf32>
    %488 = vector.extract_strided_slice %470 {offsets = [0, 256], sizes = [8, 128], strides = [1, 1]} : vector<8x384xf32> to vector<8x128xf32>
    %489 = arith.addf %488, %294 : vector<8x128xf32>
    %490 = arith.mulf %478, %489 : vector<8x128xf32>
    %491 = arith.addf %487, %490 : vector<8x128xf32>
    %492 = math.tanh %491 : vector<8x128xf32>
    %cst_128 = arith.constant 1.000000e+00 : f32
    %493 = vector.broadcast %cst_128 : f32 to vector<8x128xf32>
    %494 = arith.subf %493, %486 : vector<8x128xf32>
    %495 = arith.mulf %494, %492 : vector<8x128xf32>
    %496 = arith.mulf %486, %463 : vector<8x128xf32>
    %497 = arith.addf %495, %496 : vector<8x128xf32>
    %498 = arith.index_cast %467 : i32 to index
    %c0_129 = arith.constant 0 : index
    %499 = vector.load %arg11[%498, %c0_129] : memref<64x128xf32, #tpu.memory_space<vmem>>, vector<8x128xf32>
    tpu.vector_store %arg11[%498, %c0_129], %497 {strides = array<i32>} : memref<64x128xf32, #tpu.memory_space<vmem>>, vector<8x128xf32>,
    %c6_i32_130 = arith.constant 6 : i32
    %c8_i32_131 = arith.constant 8 : i32
    %500 = arith.muli %c6_i32_130, %c8_i32_131 : i32
    %501 = tpu.assume_multiple %500, 8 : i32
    %502 = arith.index_cast %501 : i32 to index
    %c0_132 = arith.constant 0 : index
    %503 = vector.load %arg13[%502, %c0_132] : memref<64x384xf32, #tpu.memory_space<vmem>>, vector<8x384xf32>
    %cst_133 = arith.constant dense<0.000000e+00> : vector<8x384xf32>
    %504 = tpu.matmul %497, %291, %cst_133 {dimension_numbers = #tpu.dot_dimension_numbers<[1], [0], [0], [1], [0, 0, 1, 1], [], []>} : vector<8x128xf32>, vector<128x384xf32>, vector<8x384xf32> -> vector<8x384xf32>
    %505 = vector.extract_strided_slice %503 {offsets = [0, 0], sizes = [8, 128], strides = [1, 1]} : vector<8x384xf32> to vector<8x128xf32>
    %506 = vector.extract_strided_slice %504 {offsets = [0, 0], sizes = [8, 128], strides = [1, 1]} : vector<8x384xf32> to vector<8x128xf32>
    %507 = arith.addf %505, %506 : vector<8x128xf32>
    %508 = arith.negf %507 : vector<8x128xf32>
    %509 = math.exp %508 : vector<8x128xf32>
    %cst_134 = arith.constant 1.000000e+00 : f32
    %510 = vector.broadcast %cst_134 : f32 to vector<8x128xf32>
    %511 = arith.addf %510, %509 : vector<8x128xf32>
    %512 = arith.divf %510, %511 : vector<8x128xf32>
    %513 = vector.extract_strided_slice %503 {offsets = [0, 128], sizes = [8, 128], strides = [1, 1]} : vector<8x384xf32> to vector<8x128xf32>
    %514 = vector.extract_strided_slice %504 {offsets = [0, 128], sizes = [8, 128], strides = [1, 1]} : vector<8x384xf32> to vector<8x128xf32>
    %515 = arith.addf %513, %514 : vector<8x128xf32>
    %516 = arith.negf %515 : vector<8x128xf32>
    %517 = math.exp %516 : vector<8x128xf32>
    %cst_135 = arith.constant 1.000000e+00 : f32
    %518 = vector.broadcast %cst_135 : f32 to vector<8x128xf32>
    %519 = arith.addf %518, %517 : vector<8x128xf32>
    %520 = arith.divf %518, %519 : vector<8x128xf32>
    %521 = vector.extract_strided_slice %503 {offsets = [0, 256], sizes = [8, 128], strides = [1, 1]} : vector<8x384xf32> to vector<8x128xf32>
    %522 = vector.extract_strided_slice %504 {offsets = [0, 256], sizes = [8, 128], strides = [1, 1]} : vector<8x384xf32> to vector<8x128xf32>
    %523 = arith.addf %522, %294 : vector<8x128xf32>
    %524 = arith.mulf %512, %523 : vector<8x128xf32>
    %525 = arith.addf %521, %524 : vector<8x128xf32>
    %526 = math.tanh %525 : vector<8x128xf32>
    %cst_136 = arith.constant 1.000000e+00 : f32
    %527 = vector.broadcast %cst_136 : f32 to vector<8x128xf32>
    %528 = arith.subf %527, %520 : vector<8x128xf32>
    %529 = arith.mulf %528, %526 : vector<8x128xf32>
    %530 = arith.mulf %520, %497 : vector<8x128xf32>
    %531 = arith.addf %529, %530 : vector<8x128xf32>
    %532 = arith.index_cast %501 : i32 to index
    %c0_137 = arith.constant 0 : index
    %533 = vector.load %arg11[%532, %c0_137] : memref<64x128xf32, #tpu.memory_space<vmem>>, vector<8x128xf32>
    tpu.vector_store %arg11[%532, %c0_137], %531 {strides = array<i32>} : memref<64x128xf32, #tpu.memory_space<vmem>>, vector<8x128xf32>,
    %c7_i32_138 = arith.constant 7 : i32
    %c8_i32_139 = arith.constant 8 : i32
    %534 = arith.muli %c7_i32_138, %c8_i32_139 : i32
    %535 = tpu.assume_multiple %534, 8 : i32
    %536 = arith.index_cast %535 : i32 to index
    %c0_140 = arith.constant 0 : index
    %537 = vector.load %arg13[%536, %c0_140] : memref<64x384xf32, #tpu.memory_space<vmem>>, vector<8x384xf32>
    %cst_141 = arith.constant dense<0.000000e+00> : vector<8x384xf32>
    %538 = tpu.matmul %531, %291, %cst_141 {dimension_numbers = #tpu.dot_dimension_numbers<[1], [0], [0], [1], [0, 0, 1, 1], [], []>} : vector<8x128xf32>, vector<128x384xf32>, vector<8x384xf32> -> vector<8x384xf32>
    %539 = vector.extract_strided_slice %537 {offsets = [0, 0], sizes = [8, 128], strides = [1, 1]} : vector<8x384xf32> to vector<8x128xf32>
    %540 = vector.extract_strided_slice %538 {offsets = [0, 0], sizes = [8, 128], strides = [1, 1]} : vector<8x384xf32> to vector<8x128xf32>
    %541 = arith.addf %539, %540 : vector<8x128xf32>
    %542 = arith.negf %541 : vector<8x128xf32>
    %543 = math.exp %542 : vector<8x128xf32>
    %cst_142 = arith.constant 1.000000e+00 : f32
    %544 = vector.broadcast %cst_142 : f32 to vector<8x128xf32>
    %545 = arith.addf %544, %543 : vector<8x128xf32>
    %546 = arith.divf %544, %545 : vector<8x128xf32>
    %547 = vector.extract_strided_slice %537 {offsets = [0, 128], sizes = [8, 128], strides = [1, 1]} : vector<8x384xf32> to vector<8x128xf32>
    %548 = vector.extract_strided_slice %538 {offsets = [0, 128], sizes = [8, 128], strides = [1, 1]} : vector<8x384xf32> to vector<8x128xf32>
    %549 = arith.addf %547, %548 : vector<8x128xf32>
    %550 = arith.negf %549 : vector<8x128xf32>
    %551 = math.exp %550 : vector<8x128xf32>
    %cst_143 = arith.constant 1.000000e+00 : f32
    %552 = vector.broadcast %cst_143 : f32 to vector<8x128xf32>
    %553 = arith.addf %552, %551 : vector<8x128xf32>
    %554 = arith.divf %552, %553 : vector<8x128xf32>
    %555 = vector.extract_strided_slice %537 {offsets = [0, 256], sizes = [8, 128], strides = [1, 1]} : vector<8x384xf32> to vector<8x128xf32>
    %556 = vector.extract_strided_slice %538 {offsets = [0, 256], sizes = [8, 128], strides = [1, 1]} : vector<8x384xf32> to vector<8x128xf32>
    %557 = arith.addf %556, %294 : vector<8x128xf32>
    %558 = arith.mulf %546, %557 : vector<8x128xf32>
    %559 = arith.addf %555, %558 : vector<8x128xf32>
    %560 = math.tanh %559 : vector<8x128xf32>
    %cst_144 = arith.constant 1.000000e+00 : f32
    %561 = vector.broadcast %cst_144 : f32 to vector<8x128xf32>
    %562 = arith.subf %561, %554 : vector<8x128xf32>
    %563 = arith.mulf %562, %560 : vector<8x128xf32>
    %564 = arith.mulf %554, %531 : vector<8x128xf32>
    %565 = arith.addf %563, %564 : vector<8x128xf32>
    %566 = arith.index_cast %535 : i32 to index
    %c0_145 = arith.constant 0 : index
    %567 = vector.load %arg11[%566, %c0_145] : memref<64x128xf32, #tpu.memory_space<vmem>>, vector<8x128xf32>
    tpu.vector_store %arg11[%566, %c0_145], %565 {strides = array<i32>} : memref<64x128xf32, #tpu.memory_space<vmem>>, vector<8x128xf32>,
    %c8_i32_146 = arith.constant 8 : i32
    %c0_147 = arith.constant 0 : index
    %c0_148 = arith.constant 0 : index
    %568 = vector.load %arg11[%c0_147, %c0_148] : memref<64x128xf32, #tpu.memory_space<vmem>>, vector<64x128xf32>
    %c0_149 = arith.constant 0 : index
    %c0_150 = arith.constant 0 : index
    %569 = vector.load %arg9[%c0_149, %c0_150] : memref<128x128xf32, #tpu.memory_space<vmem>>, vector<128x128xf32>
    %cst_151 = arith.constant dense<0.000000e+00> : vector<64x128xf32>
    %570 = tpu.matmul %568, %569, %cst_151 {dimension_numbers = #tpu.dot_dimension_numbers<[1], [0], [0], [1], [0, 0, 1, 1], [], []>} : vector<64x128xf32>, vector<128x128xf32>, vector<64x128xf32> -> vector<64x128xf32>
    %c0_152 = arith.constant 0 : index
    %c0_153 = arith.constant 0 : index
    %571 = vector.load %arg10[%c0_152, %c0_153] : memref<1x128xf32, #tpu.memory_space<vmem>>, vector<1x128xf32>
    %572 = vector.broadcast %571 : vector<1x128xf32> to vector<64x128xf32>
    %573 = arith.addf %570, %572 : vector<64x128xf32>
    %c0_154 = arith.constant 0 : index
    %c0_155 = arith.constant 0 : index
    %574 = vector.load %arg12[%c0_154, %c0_155] : memref<64x128xf32, #tpu.memory_space<vmem>>, vector<64x128xf32>
    tpu.vector_store %arg12[%c0_154, %c0_155], %573 {strides = array<i32>} : memref<64x128xf32, #tpu.memory_space<vmem>>, vector<64x128xf32>,
    return
  }
}

</mosaic_0001>

<llo_original>
// kernel: encoder_forward.1
$region0: #{encoder_forward.1}
  #allocation0 [shape = 'u32[]', space=smem, size = 0x4, offset = 0x4, fixed_abs, tag = 'smem constant byte address 0x4 - core index']
  #allocation1 [shape = 'u32[72,128]{1,0:T(1,128)}', space=vmem, size = 0x9000, scoped, tag = 'internal scratch']
  #allocation2 [shape = 'f32[64,384]{1,0:T(8,128)}', space=vmem, size = 0x18000, scoped, tag = 'scratch operand']
  #allocation3 [shape = 'f32[64,128]{1,0:T(8,128)}', space=vmem, size = 0x8000, scoped, tag = 'scratch operand']
  %s0 = inlined_call_operand.vmem [shape: f32[64,128], index: 0, kind: input, shape index: {}]
  %s1 = inlined_call_operand.hbm [shape: f32[128,384], index: 1, kind: input, shape index: {}]
  %s2 = inlined_call_operand.hbm [shape: f32[128,384], index: 2, kind: input, shape index: {}]
  %s3 = inlined_call_operand.vmem [shape: f32[1,384], index: 3, kind: input, shape index: {}]
  %s4 = inlined_call_operand.vmem [shape: f32[1,128], index: 4, kind: input, shape index: {}]
  %s5 = inlined_call_operand.hbm [shape: f32[128,384], index: 5, kind: input, shape index: {}]
  %s6 = inlined_call_operand.hbm [shape: f32[128,384], index: 6, kind: input, shape index: {}]
  %s7 = inlined_call_operand.vmem [shape: f32[1,384], index: 7, kind: input, shape index: {}]
  %s8 = inlined_call_operand.vmem [shape: f32[1,128], index: 8, kind: input, shape index: {}]
  %s9 = inlined_call_operand.hbm [shape: f32[128,128], index: 9, kind: input, shape index: {}]
  %s10 = inlined_call_operand.vmem [shape: f32[1,128], index: 10, kind: input, shape index: {}]
  %s11 = inlined_call_operand.vmem [shape: f32[64,128], index: 11, kind: output, shape index: {0}]
  %s12 = inlined_call_operand.vmem [shape: f32[64,128], index: 12, kind: output, shape index: {1}]
  %13 = xla_tuple %s11, %s12
  %s14 = sld [smem:[#allocation0]]
  $region82: #{encoder_forward.1} parent=0
    _
  %s16 = ssub.s32 1, %s14
  %s17 = scalar_select 0, %s16, %s14
  $region1: #{encoder_forward.1} parent=0
    #allocation4 [shape = 'u8[196608]{0}', space=vmem, size = 0x30000, scoped, tag = 'input window, operand 1, single buffered']
    #allocation5 [shape = 's32[1]{0}', space=sflag, size = 0x4, scoped, tag = 'scoped memory for encoder_forward.1']
    #allocation6 [shape = 'u8[196608]{0}', space=vmem, size = 0x30000, scoped, tag = 'input window, operand 2, single buffered']
    #allocation7 [shape = 's32[1]{0}', space=sflag, size = 0x4, scoped, tag = 'scoped memory for encoder_forward.1']
    #allocation8 [shape = 'u8[196608]{0}', space=vmem, size = 0x30000, scoped, tag = 'input window, operand 5, single buffered']
    #allocation9 [shape = 'u8[196608]{0}', space=vmem, size = 0x30000, scoped, tag = 'input window, operand 6, single buffered']
    #allocation10 [shape = 's32[1]{0}', space=sflag, size = 0x4, scoped, tag = 'scoped memory for encoder_forward.1']
    #allocation11 [shape = 'u8[65536]{0}', space=vmem, size = 0x10000, scoped, tag = 'input window, operand 9, single buffered']
    %18 = vsyncpa [#allocation5], 0
    %19 = vsyncpa [#allocation7], 0
    %20 = vsyncpa [#allocation10], 0
    // Predicated region
    $region2: #{encoder_forward.1} parent=1 // pred_check
      _
    $region3: #{encoder_forward.1} parent=1 // pred_check_branch
      %22 = sbr.rel (0) target = $region5
    $region4: #{encoder_forward.1} parent=1 // pred_region
      _
    $region5: #{encoder_forward.1} parent=1 // pred_fallthru
      _
    // Predicated region
    $region6: #{encoder_forward.1} parent=1 // pred_check
      _
    $region7: #{encoder_forward.1} parent=1 // pred_check_branch
      %24 = sbr.rel (0) target = $region9
    $region8: #{encoder_forward.1} parent=1 // pred_region
      %26 = vsyncadd [#allocation5], 0
      %s27 = sshll.u32 %s1, 4
      %s28 = int_to_ptr.hbm [resolvable:$true] %s27
      %s29 = sshll.u32 [#allocation4], 4
      %s30 = int_to_ptr.vmem [resolvable:$true] %s29
      %35 = dma.hbm_to_vmem [thread:$0]  %s28, 6144, %s30, [#allocation5], 384, 384, 24
    $region9: #{encoder_forward.1} parent=1 // pred_fallthru
      _
    // Predicated region
    $region10: #{encoder_forward.1} parent=1 // pred_check
      _
    $region11: #{encoder_forward.1} parent=1 // pred_check_branch
      %37 = sbr.rel (0) target = $region13
    $region12: #{encoder_forward.1} parent=1 // pred_region
      %39 = vsyncadd [#allocation7], 0
      %s40 = sshll.u32 %s2, 4
      %s41 = int_to_ptr.hbm [resolvable:$true] %s40
      %s42 = sshll.u32 [#allocation6], 4
      %s43 = int_to_ptr.vmem [resolvable:$true] %s42
      %48 = dma.hbm_to_vmem [thread:$0]  %s41, 6144, %s43, [#allocation7], 384, 384, 24
    $region13: #{encoder_forward.1} parent=1 // pred_fallthru
      _
    // Predicated region
    $region14: #{encoder_forward.1} parent=1 // pred_check
      _
    $region15: #{encoder_forward.1} parent=1 // pred_check_branch
      %50 = sbr.rel (0) target = $region17
    $region16: #{encoder_forward.1} parent=1 // pred_region
      _
    $region17: #{encoder_forward.1} parent=1 // pred_fallthru
      _
    // Predicated region
    $region18: #{encoder_forward.1} parent=1 // pred_check
      _
    $region19: #{encoder_forward.1} parent=1 // pred_check_branch
      %52 = sbr.rel (0) target = $region21
    $region20: #{encoder_forward.1} parent=1 // pred_region
      _
    $region21: #{encoder_forward.1} parent=1 // pred_fallthru
      _
    // Predicated region
    $region22: #{encoder_forward.1} parent=1 // pred_check
      _
    $region23: #{encoder_forward.1} parent=1 // pred_check_branch
      %54 = sbr.rel (0) target = $region25
    $region24: #{encoder_forward.1} parent=1 // pred_region
      %56 = vsyncadd [#allocation7], 0
      %s57 = sshll.u32 %s5, 4
      %s58 = int_to_ptr.hbm [resolvable:$true] %s57
      %s59 = sshll.u32 [#allocation8], 4
      %s60 = int_to_ptr.vmem [resolvable:$true] %s59
      %65 = dma.hbm_to_vmem [thread:$0]  %s58, 6144, %s60, [#allocation7], 384, 384, 24
    $region25: #{encoder_forward.1} parent=1 // pred_fallthru
      _
    // Predicated region
    $region26: #{encoder_forward.1} parent=1 // pred_check
      _
    $region27: #{encoder_forward.1} parent=1 // pred_check_branch
      %67 = sbr.rel (0) target = $region29
    $region28: #{encoder_forward.1} parent=1 // pred_region
      %69 = vsyncadd [#allocation10], 0
      %s70 = sshll.u32 %s6, 4
      %s71 = int_to_ptr.hbm [resolvable:$true] %s70
      %s72 = sshll.u32 [#allocation9], 4
      %s73 = int_to_ptr.vmem [resolvable:$true] %s72
      %78 = dma.hbm_to_vmem [thread:$0]  %s71, 6144, %s73, [#allocation10], 384, 384, 24
    $region29: #{encoder_forward.1} parent=1 // pred_fallthru
      _
    // Predicated region
    $region30: #{encoder_forward.1} parent=1 // pred_check
      _
    $region31: #{encoder_forward.1} parent=1 // pred_check_branch
      %80 = sbr.rel (0) target = $region33
    $region32: #{encoder_forward.1} parent=1 // pred_region
      _
    $region33: #{encoder_forward.1} parent=1 // pred_fallthru
      _
    // Predicated region
    $region34: #{encoder_forward.1} parent=1 // pred_check
      _
    $region35: #{encoder_forward.1} parent=1 // pred_check_branch
      %82 = sbr.rel (0) target = $region37
    $region36: #{encoder_forward.1} parent=1 // pred_region
      _
    $region37: #{encoder_forward.1} parent=1 // pred_fallthru
      _
    // Predicated region
    $region38: #{encoder_forward.1} parent=1 // pred_check
      _
    $region39: #{encoder_forward.1} parent=1 // pred_check_branch
      %84 = sbr.rel (0) target = $region41
    $region40: #{encoder_forward.1} parent=1 // pred_region
      %86 = vsyncadd [#allocation10], 0
      %s87 = sshll.u32 %s9, 4
      %s88 = int_to_ptr.hbm [resolvable:$true] %s87
      %s89 = sshll.u32 [#allocation11], 4
      %s90 = int_to_ptr.vmem [resolvable:$true] %s89
      %95 = dma.hbm_to_vmem [thread:$0]  %s88, 2048, %s90, [#allocation10], 128, 128, 8
    $region41: #{encoder_forward.1} parent=1 // pred_fallthru
      _
    // Predicated region
    $region42: #{encoder_forward.1} parent=1 // pred_check
      _
    $region43: #{encoder_forward.1} parent=1 // pred_check_branch
      %97 = sbr.rel (0) target = $region45
    $region44: #{encoder_forward.1} parent=1 // pred_region
      _
    $region45: #{encoder_forward.1} parent=1 // pred_fallthru
      _
    // Predicated region
    $region46: #{encoder_forward.1} parent=1 // pred_check
      _
    $region47: #{encoder_forward.1} parent=1 // pred_check_branch
      %99 = sbr.rel (0) target = $region49
    $region48: #{encoder_forward.1} parent=1 // pred_region
      %101 = dma.done [#allocation5], 6144
    $region49: #{encoder_forward.1} parent=1 // pred_fallthru
      _
    // Predicated region
    $region50: #{encoder_forward.1} parent=1 // pred_check
      _
    $region51: #{encoder_forward.1} parent=1 // pred_check_branch
      %103 = sbr.rel (0) target = $region53
    $region52: #{encoder_forward.1} parent=1 // pred_region
      %105 = dma.done [#allocation7], 6144
    $region53: #{encoder_forward.1} parent=1 // pred_fallthru
      _
    // Predicated region
    $region54: #{encoder_forward.1} parent=1 // pred_check
      _
    $region55: #{encoder_forward.1} parent=1 // pred_check_branch
      %107 = sbr.rel (0) target = $region57
    $region56: #{encoder_forward.1} parent=1 // pred_region
      %109 = dma.done [#allocation7], 6144
    $region57: #{encoder_forward.1} parent=1 // pred_fallthru
      _
    // Predicated region
    $region58: #{encoder_forward.1} parent=1 // pred_check
      _
    $region59: #{encoder_forward.1} parent=1 // pred_check_branch
      %111 = sbr.rel (0) target = $region61
    $region60: #{encoder_forward.1} parent=1 // pred_region
      %113 = dma.done [#allocation10], 6144
    $region61: #{encoder_forward.1} parent=1 // pred_fallthru
      _
    // Predicated region
    $region62: #{encoder_forward.1} parent=1 // pred_check
      _
    $region63: #{encoder_forward.1} parent=1 // pred_check_branch
      %115 = sbr.rel (0) target = $region65
    $region64: #{encoder_forward.1} parent=1 // pred_region
      %117 = dma.done [#allocation10], 2048
    $region65: #{encoder_forward.1} parent=1 // pred_fallthru
      _
    %v118 = vld [vmem:[%s0] sm:$0xff]
    %v119 = vld [vmem:[%s0 + $0x8] sm:$0xff]
    %v120 = vld [vmem:[%s0 + $0x10] sm:$0xff]
    %v121 = vld [vmem:[%s0 + $0x18] sm:$0xff]
    %v122 = vld [vmem:[%s0 + $0x20] sm:$0xff]
    %v123 = vld [vmem:[%s0 + $0x28] sm:$0xff]
    %v124 = vld [vmem:[%s0 + $0x30] sm:$0xff]
    %v125 = vld [vmem:[%s0 + $0x38] sm:$0xff]
    %v126 = vld [vmem:[#allocation4] sm:$0xff]
    %v127 = vld [vmem:[#allocation4 + $0x8] sm:$0xff]
    %v128 = vld [vmem:[#allocation4 + $0x10] sm:$0xff]
    %v129 = vld [vmem:[#allocation4 + $0x18] sm:$0xff]
    %v130 = vld [vmem:[#allocation4 + $0x20] sm:$0xff]
    %v131 = vld [vmem:[#allocation4 + $0x28] sm:$0xff]
    %v132 = vld [vmem:[#allocation4 + $0x30] sm:$0xff]
    %v133 = vld [vmem:[#allocation4 + $0x38] sm:$0xff]
    %v134 = vld [vmem:[#allocation4 + $0x40] sm:$0xff]
    %v135 = vld [vmem:[#allocation4 + $0x48] sm:$0xff]
    %v136 = vld [vmem:[#allocation4 + $0x50] sm:$0xff]
    %v137 = vld [vmem:[#allocation4 + $0x58] sm:$0xff]
    %v138 = vld [vmem:[#allocation4 + $0x60] sm:$0xff]
    %v139 = vld [vmem:[#allocation4 + $0x68] sm:$0xff]
    %v140 = vld [vmem:[#allocation4 + $0x70] sm:$0xff]
    %v141 = vld [vmem:[#allocation4 + $0x78] sm:$0xff]
    %v142 = vld [vmem:[#allocation4 + $0x80] sm:$0xff]
    %v143 = vld [vmem:[#allocation4 + $0x88] sm:$0xff]
    %v144 = vld [vmem:[#allocation4 + $0x90] sm:$0xff]
    %v145 = vld [vmem:[#allocation4 + $0x98] sm:$0xff]
    %v146 = vld [vmem:[#allocation4 + $0xa0] sm:$0xff]
    %v147 = vld [vmem:[#allocation4 + $0xa8] sm:$0xff]
    %v148 = vld [vmem:[#allocation4 + $0xb0] sm:$0xff]
    %v149 = vld [vmem:[#allocation4 + $0xb8] sm:$0xff]
    %v150 = vld [vmem:[#allocation4 + $0xc0] sm:$0xff]
    %v151 = vld [vmem:[#allocation4 + $0xc8] sm:$0xff]
    %v152 = vld [vmem:[#allocation4 + $0xd0] sm:$0xff]
    %v153 = vld [vmem:[#allocation4 + $0xd8] sm:$0xff]
    %v154 = vld [vmem:[#allocation4 + $0xe0] sm:$0xff]
    %v155 = vld [vmem:[#allocation4 + $0xe8] sm:$0xff]
    %v156 = vld [vmem:[#allocation4 + $0xf0] sm:$0xff]
    %v157 = vld [vmem:[#allocation4 + $0xf8] sm:$0xff]
    %v158 = vld [vmem:[#allocation4 + $0x100] sm:$0xff]
    %v159 = vld [vmem:[#allocation4 + $0x108] sm:$0xff]
    %v160 = vld [vmem:[#allocation4 + $0x110] sm:$0xff]
    %v161 = vld [vmem:[#allocation4 + $0x118] sm:$0xff]
    %v162 = vld [vmem:[#allocation4 + $0x120] sm:$0xff]
    %v163 = vld [vmem:[#allocation4 + $0x128] sm:$0xff]
    %v164 = vld [vmem:[#allocation4 + $0x130] sm:$0xff]
    %v165 = vld [vmem:[#allocation4 + $0x138] sm:$0xff]
    %v166 = vld [vmem:[#allocation4 + $0x140] sm:$0xff]
    %v167 = vld [vmem:[#allocation4 + $0x148] sm:$0xff]
    %v168 = vld [vmem:[#allocation4 + $0x150] sm:$0xff]
    %v169 = vld [vmem:[#allocation4 + $0x158] sm:$0xff]
    %v170 = vld [vmem:[#allocation4 + $0x160] sm:$0xff]
    %v171 = vld [vmem:[#allocation4 + $0x168] sm:$0xff]
    %v172 = vld [vmem:[#allocation4 + $0x170] sm:$0xff]
    %v173 = vld [vmem:[#allocation4 + $0x178] sm:$0xff]
    %v174 = vld [vmem:[%s3] sm:$0x7]
    %v176 = vperm.slane %v174, 0
    %v177 = vperm.slane %v174, 1
    %v178 = vperm.slane %v174, 2
    %182 = vmatpush.msra.mxu0 %v171
    %183 = vmatpush.msra.mxu0 %v168
    %184 = vmatpush.msra.mxu0 %v165
    %185 = vmatpush.msra.mxu0 %v162
    %186 = vmatpush.msra.mxu0 %v159
    %187 = vmatpush.msra.mxu0 %v156
    %188 = vmatpush.msra.mxu0 %v153
    %189 = vmatpush.msra.mxu0 %v150
    %190 = vmatpush.msra.mxu0 %v147
    %191 = vmatpush.msra.mxu0 %v144
    %192 = vmatpush.msra.mxu0 %v141
    %193 = vmatpush.msra.mxu0 %v138
    %194 = vmatpush.msra.mxu0 %v135
    %195 = vmatpush.msra.mxu0 %v132
    %196 = vmatpush.msra.mxu0 %v129
    %197 = vmatpush.msra.mxu0 %v126
    %198 = vmatmul.f32.gmra.mxu0 %v118
    %v199 = vpop.f32.mrf.mxu0
    %v200 = vadd.f32 %v176, %v199
    %201 = vmatmul.f32.gmra.mxu0 %v119
    %v202 = vpop.f32.mrf.mxu0
    %v203 = vadd.f32 %v176, %v202
    %204 = vmatmul.f32.gmra.mxu0 %v120
    %v205 = vpop.f32.mrf.mxu0
    %v206 = vadd.f32 %v176, %v205
    %207 = vmatmul.f32.gmra.mxu0 %v121
    %v208 = vpop.f32.mrf.mxu0
    %v209 = vadd.f32 %v176, %v208
    %210 = vmatmul.f32.gmra.mxu0 %v122
    %v211 = vpop.f32.mrf.mxu0
    %v212 = vadd.f32 %v176, %v211
    %213 = vmatmul.f32.gmra.mxu0 %v123
    %v214 = vpop.f32.mrf.mxu0
    %v215 = vadd.f32 %v176, %v214
    %216 = vmatmul.f32.gmra.mxu0 %v124
    %v217 = vpop.f32.mrf.mxu0
    %v218 = vadd.f32 %v176, %v217
    %219 = vmatmul.f32.gmra.mxu0 %v125
    %v220 = vpop.f32.mrf.mxu0
    %v221 = vadd.f32 %v176, %v220
    %222 = vdwg.mxu0
    %223 = vmatpush.msra.mxu0 %v172
    %224 = vmatpush.msra.mxu0 %v169
    %225 = vmatpush.msra.mxu0 %v166
    %226 = vmatpush.msra.mxu0 %v163
    %227 = vmatpush.msra.mxu0 %v160
    %228 = vmatpush.msra.mxu0 %v157
    %229 = vmatpush.msra.mxu0 %v154
    %230 = vmatpush.msra.mxu0 %v151
    %231 = vmatpush.msra.mxu0 %v148
    %232 = vmatpush.msra.mxu0 %v145
    %233 = vmatpush.msra.mxu0 %v142
    %234 = vmatpush.msra.mxu0 %v139
    %235 = vmatpush.msra.mxu0 %v136
    %236 = vmatpush.msra.mxu0 %v133
    %237 = vmatpush.msra.mxu0 %v130
    %238 = vmatpush.msra.mxu0 %v127
    %239 = vmatmul.f32.gmra.mxu0 %v118
    %v240 = vpop.f32.mrf.mxu0
    %v241 = vadd.f32 %v177, %v240
    %242 = vmatmul.f32.gmra.mxu0 %v119
    %v243 = vpop.f32.mrf.mxu0
    %v244 = vadd.f32 %v177, %v243
    %245 = vmatmul.f32.gmra.mxu0 %v120
    %v246 = vpop.f32.mrf.mxu0
    %v247 = vadd.f32 %v177, %v246
    %248 = vmatmul.f32.gmra.mxu0 %v121
    %v249 = vpop.f32.mrf.mxu0
    %v250 = vadd.f32 %v177, %v249
    %251 = vmatmul.f32.gmra.mxu0 %v122
    %v252 = vpop.f32.mrf.mxu0
    %v253 = vadd.f32 %v177, %v252
    %254 = vmatmul.f32.gmra.mxu0 %v123
    %v255 = vpop.f32.mrf.mxu0
    %v256 = vadd.f32 %v177, %v255
    %257 = vmatmul.f32.gmra.mxu0 %v124
    %v258 = vpop.f32.mrf.mxu0
    %v259 = vadd.f32 %v177, %v258
    %260 = vmatmul.f32.gmra.mxu0 %v125
    %v261 = vpop.f32.mrf.mxu0
    %v262 = vadd.f32 %v177, %v261
    %263 = vdwg.mxu0
    %264 = vmatpush.msra.mxu0 %v173
    %265 = vmatpush.msra.mxu0 %v170
    %266 = vmatpush.msra.mxu0 %v167
    %267 = vmatpush.msra.mxu0 %v164
    %268 = vmatpush.msra.mxu0 %v161
    %269 = vmatpush.msra.mxu0 %v158
    %270 = vmatpush.msra.mxu0 %v155
    %271 = vmatpush.msra.mxu0 %v152
    %272 = vmatpush.msra.mxu0 %v149
    %273 = vmatpush.msra.mxu0 %v146
    %274 = vmatpush.msra.mxu0 %v143
    %275 = vmatpush.msra.mxu0 %v140
    %276 = vmatpush.msra.mxu0 %v137
    %277 = vmatpush.msra.mxu0 %v134
    %278 = vmatpush.msra.mxu0 %v131
    %279 = vmatpush.msra.mxu0 %v128
    %280 = vmatmul.f32.gmra.mxu0 %v118
    %v281 = vpop.f32.mrf.mxu0
    %v282 = vadd.f32 %v178, %v281
    %283 = vmatmul.f32.gmra.mxu0 %v119
    %v284 = vpop.f32.mrf.mxu0
    %v285 = vadd.f32 %v178, %v284
    %286 = vmatmul.f32.gmra.mxu0 %v120
    %v287 = vpop.f32.mrf.mxu0
    %v288 = vadd.f32 %v178, %v287
    %289 = vmatmul.f32.gmra.mxu0 %v121
    %v290 = vpop.f32.mrf.mxu0
    %v291 = vadd.f32 %v178, %v290
    %292 = vmatmul.f32.gmra.mxu0 %v122
    %v293 = vpop.f32.mrf.mxu0
    %v294 = vadd.f32 %v178, %v293
    %295 = vmatmul.f32.gmra.mxu0 %v123
    %v296 = vpop.f32.mrf.mxu0
    %v297 = vadd.f32 %v178, %v296
    %298 = vmatmul.f32.gmra.mxu0 %v124
    %v299 = vpop.f32.mrf.mxu0
    %v300 = vadd.f32 %v178, %v299
    %301 = vmatmul.f32.gmra.mxu0 %v125
    %v302 = vpop.f32.mrf.mxu0
    %v303 = vadd.f32 %v178, %v302
    %304 = vdwg.mxu0
    %305 = vst [vmem:[#allocation2] sm:$0xff] %v200
    %306 = vst [vmem:[#allocation2 + $0x8] sm:$0xff] %v241
    %307 = vst [vmem:[#allocation2 + $0x10] sm:$0xff] %v282
    %308 = vst [vmem:[#allocation2 + $0x18] sm:$0xff] %v203
    %309 = vst [vmem:[#allocation2 + $0x20] sm:$0xff] %v244
    %310 = vst [vmem:[#allocation2 + $0x28] sm:$0xff] %v285
    %311 = vst [vmem:[#allocation2 + $0x30] sm:$0xff] %v206
    %312 = vst [vmem:[#allocation2 + $0x38] sm:$0xff] %v247
    %313 = vst [vmem:[#allocation2 + $0x40] sm:$0xff] %v288
    %314 = vst [vmem:[#allocation2 + $0x48] sm:$0xff] %v209
    %315 = vst [vmem:[#allocation2 + $0x50] sm:$0xff] %v250
    %316 = vst [vmem:[#allocation2 + $0x58] sm:$0xff] %v291
    %317 = vst [vmem:[#allocation2 + $0x60] sm:$0xff] %v212
    %318 = vst [vmem:[#allocation2 + $0x68] sm:$0xff] %v253
    %319 = vst [vmem:[#allocation2 + $0x70] sm:$0xff] %v294
    %320 = vst [vmem:[#allocation2 + $0x78] sm:$0xff] %v215
    %321 = vst [vmem:[#allocation2 + $0x80] sm:$0xff] %v256
    %322 = vst [vmem:[#allocation2 + $0x88] sm:$0xff] %v297
    %323 = vst [vmem:[#allocation2 + $0x90] sm:$0xff] %v218
    %324 = vst [vmem:[#allocation2 + $0x98] sm:$0xff] %v259
    %325 = vst [vmem:[#allocation2 + $0xa0] sm:$0xff] %v300
    %326 = vst [vmem:[#allocation2 + $0xa8] sm:$0xff] %v221
    %327 = vst [vmem:[#allocation2 + $0xb0] sm:$0xff] %v262
    %328 = vst [vmem:[#allocation2 + $0xb8] sm:$0xff] %v303
    %v329 = vld [vmem:[#allocation6] sm:$0xff]
    %v330 = vld [vmem:[#allocation6 + $0x8] sm:$0xff]
    %v331 = vld [vmem:[#allocation6 + $0x10] sm:$0xff]
    %v332 = vld [vmem:[#allocation6 + $0x18] sm:$0xff]
    %v333 = vld [vmem:[#allocation6 + $0x20] sm:$0xff]
    %v334 = vld [vmem:[#allocation6 + $0x28] sm:$0xff]
    %v335 = vld [vmem:[#allocation6 + $0x30] sm:$0xff]
    %v336 = vld [vmem:[#allocation6 + $0x38] sm:$0xff]
    %v337 = vld [vmem:[#allocation6 + $0x40] sm:$0xff]
    %v338 = vld [vmem:[#allocation6 + $0x48] sm:$0xff]
    %v339 = vld [vmem:[#allocation6 + $0x50] sm:$0xff]
    %v340 = vld [vmem:[#allocation6 + $0x58] sm:$0xff]
    %v341 = vld [vmem:[#allocation6 + $0x60] sm:$0xff]
    %v342 = vld [vmem:[#allocation6 + $0x68] sm:$0xff]
    %v343 = vld [vmem:[#allocation6 + $0x70] sm:$0xff]
    %v344 = vld [vmem:[#allocation6 + $0x78] sm:$0xff]
    %v345 = vld [vmem:[#allocation6 + $0x80] sm:$0xff]
    %v346 = vld [vmem:[#allocation6 + $0x88] sm:$0xff]
    %v347 = vld [vmem:[#allocation6 + $0x90] sm:$0xff]
    %v348 = vld [vmem:[#allocation6 + $0x98] sm:$0xff]
    %v349 = vld [vmem:[#allocation6 + $0xa0] sm:$0xff]
    %v350 = vld [vmem:[#allocation6 + $0xa8] sm:$0xff]
    %v351 = vld [vmem:[#allocation6 + $0xb0] sm:$0xff]
    %v352 = vld [vmem:[#allocation6 + $0xb8] sm:$0xff]
    %v353 = vld [vmem:[#allocation6 + $0xc0] sm:$0xff]
    %v354 = vld [vmem:[#allocation6 + $0xc8] sm:$0xff]
    %v355 = vld [vmem:[#allocation6 + $0xd0] sm:$0xff]
    %v356 = vld [vmem:[#allocation6 + $0xd8] sm:$0xff]
    %v357 = vld [vmem:[#allocation6 + $0xe0] sm:$0xff]
    %v358 = vld [vmem:[#allocation6 + $0xe8] sm:$0xff]
    %v359 = vld [vmem:[#allocation6 + $0xf0] sm:$0xff]
    %v360 = vld [vmem:[#allocation6 + $0xf8] sm:$0xff]
    %v361 = vld [vmem:[#allocation6 + $0x100] sm:$0xff]
    %v362 = vld [vmem:[#allocation6 + $0x108] sm:$0xff]
    %v363 = vld [vmem:[#allocation6 + $0x110] sm:$0xff]
    %v364 = vld [vmem:[#allocation6 + $0x118] sm:$0xff]
    %v365 = vld [vmem:[#allocation6 + $0x120] sm:$0xff]
    %v366 = vld [vmem:[#allocation6 + $0x128] sm:$0xff]
    %v367 = vld [vmem:[#allocation6 + $0x130] sm:$0xff]
    %v368 = vld [vmem:[#allocation6 + $0x138] sm:$0xff]
    %v369 = vld [vmem:[#allocation6 + $0x140] sm:$0xff]
    %v370 = vld [vmem:[#allocation6 + $0x148] sm:$0xff]
    %v371 = vld [vmem:[#allocation6 + $0x150] sm:$0xff]
    %v372 = vld [vmem:[#allocation6 + $0x158] sm:$0xff]
    %v373 = vld [vmem:[#allocation6 + $0x160] sm:$0xff]
    %v374 = vld [vmem:[#allocation6 + $0x168] sm:$0xff]
    %v375 = vld [vmem:[#allocation6 + $0x170] sm:$0xff]
    %v376 = vld [vmem:[#allocation6 + $0x178] sm:$0xff]
    %v377 = vld [vmem:[%s4] sm:$0x1]
    %v379 = vperm.slane %v377, 0
    %s381 = smul.u32 0, 3
    %s382 = smul.addr %s381, 8
    %s383 = scalar_lea.vmem [#allocation2], %s382
    %v384 = vld [vmem:[%s383] sm:$0xff]
    %v385 = vld [vmem:[%s383 + $0x8] sm:$0xff]
    %v386 = vld [vmem:[%s383 + $0x10] sm:$0xff]
    %387 = vmatpush.msra.mxu0 %v374
    %388 = vmatpush.msra.mxu0 %v371
    %389 = vmatpush.msra.mxu0 %v368
    %390 = vmatpush.msra.mxu0 %v365
    %391 = vmatpush.msra.mxu0 %v362
    %392 = vmatpush.msra.mxu0 %v359
    %393 = vmatpush.msra.mxu0 %v356
    %394 = vmatpush.msra.mxu0 %v353
    %395 = vmatpush.msra.mxu0 %v350
    %396 = vmatpush.msra.mxu0 %v347
    %397 = vmatpush.msra.mxu0 %v344
    %398 = vmatpush.msra.mxu0 %v341
    %399 = vmatpush.msra.mxu0 %v338
    %400 = vmatpush.msra.mxu0 %v335
    %401 = vmatpush.msra.mxu0 %v332
    %402 = vmatpush.msra.mxu0 %v329
    %403 = vmatmul.f32.gmra.mxu0 0.0
    %v404 = vpop.f32.mrf.mxu0
    %v405 = vadd.f32 0.0, %v404
    %406 = vdwg.mxu0
    %407 = vmatpush.msra.mxu0 %v375
    %408 = vmatpush.msra.mxu0 %v372
    %409 = vmatpush.msra.mxu0 %v369
    %410 = vmatpush.msra.mxu0 %v366
    %411 = vmatpush.msra.mxu0 %v363
    %412 = vmatpush.msra.mxu0 %v360
    %413 = vmatpush.msra.mxu0 %v357
    %414 = vmatpush.msra.mxu0 %v354
    %415 = vmatpush.msra.mxu0 %v351
    %416 = vmatpush.msra.mxu0 %v348
    %417 = vmatpush.msra.mxu0 %v345
    %418 = vmatpush.msra.mxu0 %v342
    %419 = vmatpush.msra.mxu0 %v339
    %420 = vmatpush.msra.mxu0 %v336
    %421 = vmatpush.msra.mxu0 %v333
    %422 = vmatpush.msra.mxu0 %v330
    %423 = vmatmul.f32.gmra.mxu0 0.0
    %v424 = vpop.f32.mrf.mxu0
    %v425 = vadd.f32 0.0, %v424
    %426 = vdwg.mxu0
    %427 = vmatpush.msra.mxu0 %v376
    %428 = vmatpush.msra.mxu0 %v373
    %429 = vmatpush.msra.mxu0 %v370
    %430 = vmatpush.msra.mxu0 %v367
    %431 = vmatpush.msra.mxu0 %v364
    %432 = vmatpush.msra.mxu0 %v361
    %433 = vmatpush.msra.mxu0 %v358
    %434 = vmatpush.msra.mxu0 %v355
    %435 = vmatpush.msra.mxu0 %v352
    %436 = vmatpush.msra.mxu0 %v349
    %437 = vmatpush.msra.mxu0 %v346
    %438 = vmatpush.msra.mxu0 %v343
    %439 = vmatpush.msra.mxu0 %v340
    %440 = vmatpush.msra.mxu0 %v337
    %441 = vmatpush.msra.mxu0 %v334
    %442 = vmatpush.msra.mxu0 %v331
    %443 = vmatmul.f32.gmra.mxu0 0.0
    %v444 = vpop.f32.mrf.mxu0
    %v445 = vadd.f32 0.0, %v444
    %446 = vdwg.mxu0
    %v447 = vadd.f32 %v384, %v405
    %v448 = vxor.u32 %v447, 2147483648
    %v449 = vmul.f32 %v448, 1.442695
    %v450 = vpow.pop %v449
    %v451 = vadd.f32 %v450, 1.0
    %v452 = vrcp.pop %v451
    %v453 = vmul.f32 %v451, %v452
    %v454 = vsub.f32 1.0, %v453
    %v455 = vmul.f32 %v452, %v454
    %v456 = vadd.f32 %v452, %v455
    %vm457 = vweird.f32 %v451
    %vm458 = vweird.f32 %v452
    %vm459 = vmor %vm457, %vm458
    %v460 = vsel %vm459, %v452, %v456
    %v461 = vand.u32 2147483647, %v451
    %vm462 = vcmp.eq.f32.partialorder %v461, 8.507059e+37
    %v463 = vand.u32 %v451, 2147483648
    %v464 = vor.u32 1.1754944e-38, %v463
    %v465 = vsel %vm462, %v464, %v460
    %v466 = vmul.f32 1.0, %v465
    %v467 = vadd.f32 %v385, %v425
    %v468 = vxor.u32 %v467, 2147483648
    %v469 = vmul.f32 %v468, 1.442695
    %v470 = vpow.pop %v469
    %v471 = vadd.f32 %v470, 1.0
    %v472 = vrcp.pop %v471
    %v473 = vmul.f32 %v471, %v472
    %v474 = vsub.f32 1.0, %v473
    %v475 = vmul.f32 %v472, %v474
    %v476 = vadd.f32 %v472, %v475
    %vm477 = vweird.f32 %v471
    %vm478 = vweird.f32 %v472
    %vm479 = vmor %vm477, %vm478
    %v480 = vsel %vm479, %v472, %v476
    %v481 = vand.u32 2147483647, %v471
    %vm482 = vcmp.eq.f32.partialorder %v481, 8.507059e+37
    %v483 = vand.u32 %v471, 2147483648
    %v484 = vor.u32 1.1754944e-38, %v483
    %v485 = vsel %vm482, %v484, %v480
    %v486 = vmul.f32 1.0, %v485
    %v487 = vadd.f32 %v445, %v379
    %v488 = vmul.f32 %v466, %v487
    %v489 = vadd.f32 %v386, %v488
    %v490 = vtanh.pop %v489
    %v491 = vsub.f32 1.0, %v486
    %v492 = vmul.f32 %v491, %v490
    %v493 = vmul.f32 %v486, 0.0
    %v494 = vadd.f32 %v492, %v493
    %495 = vst [vmem:[#allocation3] sm:$0xff] %v494
    %s496 = smul.u32 1, 3
    %s497 = smul.addr %s496, 8
    %s498 = scalar_lea.vmem [#allocation2], %s497
    %v499 = vld [vmem:[%s498] sm:$0xff]
    %v500 = vld [vmem:[%s498 + $0x8] sm:$0xff]
    %v501 = vld [vmem:[%s498 + $0x10] sm:$0xff]
    %502 = vmatpush.msra.mxu0 %v374
    %503 = vmatpush.msra.mxu0 %v371
    %504 = vmatpush.msra.mxu0 %v368
    %505 = vmatpush.msra.mxu0 %v365
    %506 = vmatpush.msra.mxu0 %v362
    %507 = vmatpush.msra.mxu0 %v359
    %508 = vmatpush.msra.mxu0 %v356
    %509 = vmatpush.msra.mxu0 %v353
    %510 = vmatpush.msra.mxu0 %v350
    %511 = vmatpush.msra.mxu0 %v347
    %512 = vmatpush.msra.mxu0 %v344
    %513 = vmatpush.msra.mxu0 %v341
    %514 = vmatpush.msra.mxu0 %v338
    %515 = vmatpush.msra.mxu0 %v335
    %516 = vmatpush.msra.mxu0 %v332
    %517 = vmatpush.msra.mxu0 %v329
    %518 = vmatmul.f32.gmra.mxu0 %v494
    %v519 = vpop.f32.mrf.mxu0
    %v520 = vadd.f32 0.0, %v519
    %521 = vdwg.mxu0
    %522 = vmatpush.msra.mxu0 %v375
    %523 = vmatpush.msra.mxu0 %v372
    %524 = vmatpush.msra.mxu0 %v369
    %525 = vmatpush.msra.mxu0 %v366
    %526 = vmatpush.msra.mxu0 %v363
    %527 = vmatpush.msra.mxu0 %v360
    %528 = vmatpush.msra.mxu0 %v357
    %529 = vmatpush.msra.mxu0 %v354
    %530 = vmatpush.msra.mxu0 %v351
    %531 = vmatpush.msra.mxu0 %v348
    %532 = vmatpush.msra.mxu0 %v345
    %533 = vmatpush.msra.mxu0 %v342
    %534 = vmatpush.msra.mxu0 %v339
    %535 = vmatpush.msra.mxu0 %v336
    %536 = vmatpush.msra.mxu0 %v333
    %537 = vmatpush.msra.mxu0 %v330
    %538 = vmatmul.f32.gmra.mxu0 %v494
    %v539 = vpop.f32.mrf.mxu0
    %v540 = vadd.f32 0.0, %v539
    %541 = vdwg.mxu0
    %542 = vmatpush.msra.mxu0 %v376
    %543 = vmatpush.msra.mxu0 %v373
    %544 = vmatpush.msra.mxu0 %v370
    %545 = vmatpush.msra.mxu0 %v367
    %546 = vmatpush.msra.mxu0 %v364
    %547 = vmatpush.msra.mxu0 %v361
    %548 = vmatpush.msra.mxu0 %v358
    %549 = vmatpush.msra.mxu0 %v355
    %550 = vmatpush.msra.mxu0 %v352
    %551 = vmatpush.msra.mxu0 %v349
    %552 = vmatpush.msra.mxu0 %v346
    %553 = vmatpush.msra.mxu0 %v343
    %554 = vmatpush.msra.mxu0 %v340
    %555 = vmatpush.msra.mxu0 %v337
    %556 = vmatpush.msra.mxu0 %v334
    %557 = vmatpush.msra.mxu0 %v331
    %558 = vmatmul.f32.gmra.mxu0 %v494
    %v559 = vpop.f32.mrf.mxu0
    %v560 = vadd.f32 0.0, %v559
    %561 = vdwg.mxu0
    %v562 = vadd.f32 %v499, %v520
    %v563 = vxor.u32 %v562, 2147483648
    %v564 = vmul.f32 %v563, 1.442695
    %v565 = vpow.pop %v564
    %v566 = vadd.f32 %v565, 1.0
    %v567 = vrcp.pop %v566
    %v568 = vmul.f32 %v566, %v567
    %v569 = vsub.f32 1.0, %v568
    %v570 = vmul.f32 %v567, %v569
    %v571 = vadd.f32 %v567, %v570
    %vm572 = vweird.f32 %v566
    %vm573 = vweird.f32 %v567
    %vm574 = vmor %vm572, %vm573
    %v575 = vsel %vm574, %v567, %v571
    %v576 = vand.u32 2147483647, %v566
    %vm577 = vcmp.eq.f32.partialorder %v576, 8.507059e+37
    %v578 = vand.u32 %v566, 2147483648
    %v579 = vor.u32 1.1754944e-38, %v578
    %v580 = vsel %vm577, %v579, %v575
    %v581 = vmul.f32 1.0, %v580
    %v582 = vadd.f32 %v500, %v540
    %v583 = vxor.u32 %v582, 2147483648
    %v584 = vmul.f32 %v583, 1.442695
    %v585 = vpow.pop %v584
    %v586 = vadd.f32 %v585, 1.0
    %v587 = vrcp.pop %v586
    %v588 = vmul.f32 %v586, %v587
    %v589 = vsub.f32 1.0, %v588
    %v590 = vmul.f32 %v587, %v589
    %v591 = vadd.f32 %v587, %v590
    %vm592 = vweird.f32 %v586
    %vm593 = vweird.f32 %v587
    %vm594 = vmor %vm592, %vm593
    %v595 = vsel %vm594, %v587, %v591
    %v596 = vand.u32 2147483647, %v586
    %vm597 = vcmp.eq.f32.partialorder %v596, 8.507059e+37
    %v598 = vand.u32 %v586, 2147483648
    %v599 = vor.u32 1.1754944e-38, %v598
    %v600 = vsel %vm597, %v599, %v595
    %v601 = vmul.f32 1.0, %v600
    %v602 = vadd.f32 %v560, %v379
    %v603 = vmul.f32 %v581, %v602
    %v604 = vadd.f32 %v501, %v603
    %v605 = vtanh.pop %v604
    %v606 = vsub.f32 1.0, %v601
    %v607 = vmul.f32 %v606, %v605
    %v608 = vmul.f32 %v601, %v494
    %v609 = vadd.f32 %v607, %v608
    %s610 = scalar_lea.vmem [#allocation3], 8
    %611 = vst [vmem:[%s610] sm:$0xff] %v609
    %s612 = smul.u32 2, 3
    %s613 = smul.addr %s612, 8
    %s614 = scalar_lea.vmem [#allocation2], %s613
    %v615 = vld [vmem:[%s614] sm:$0xff]
    %v616 = vld [vmem:[%s614 + $0x8] sm:$0xff]
    %v617 = vld [vmem:[%s614 + $0x10] sm:$0xff]
    %618 = vmatpush.msra.mxu0 %v374
    %619 = vmatpush.msra.mxu0 %v371
    %620 = vmatpush.msra.mxu0 %v368
    %621 = vmatpush.msra.mxu0 %v365
    %622 = vmatpush.msra.mxu0 %v362
    %623 = vmatpush.msra.mxu0 %v359
    %624 = vmatpush.msra.mxu0 %v356
    %625 = vmatpush.msra.mxu0 %v353
    %626 = vmatpush.msra.mxu0 %v350
    %627 = vmatpush.msra.mxu0 %v347
    %628 = vmatpush.msra.mxu0 %v344
    %629 = vmatpush.msra.mxu0 %v341
    %630 = vmatpush.msra.mxu0 %v338
    %631 = vmatpush.msra.mxu0 %v335
    %632 = vmatpush.msra.mxu0 %v332
    %633 = vmatpush.msra.mxu0 %v329
    %634 = vmatmul.f32.gmra.mxu0 %v609
    %v635 = vpop.f32.mrf.mxu0
    %v636 = vadd.f32 0.0, %v635
    %637 = vdwg.mxu0
    %638 = vmatpush.msra.mxu0 %v375
    %639 = vmatpush.msra.mxu0 %v372
    %640 = vmatpush.msra.mxu0 %v369
    %641 = vmatpush.msra.mxu0 %v366
    %642 = vmatpush.msra.mxu0 %v363
    %643 = vmatpush.msra.mxu0 %v360
    %644 = vmatpush.msra.mxu0 %v357
    %645 = vmatpush.msra.mxu0 %v354
    %646 = vmatpush.msra.mxu0 %v351
    %647 = vmatpush.msra.mxu0 %v348
    %648 = vmatpush.msra.mxu0 %v345
    %649 = vmatpush.msra.mxu0 %v342
    %650 = vmatpush.msra.mxu0 %v339
    %651 = vmatpush.msra.mxu0 %v336
    %652 = vmatpush.msra.mxu0 %v333
    %653 = vmatpush.msra.mxu0 %v330
    %654 = vmatmul.f32.gmra.mxu0 %v609
    %v655 = vpop.f32.mrf.mxu0
    %v656 = vadd.f32 0.0, %v655
    %657 = vdwg.mxu0
    %658 = vmatpush.msra.mxu0 %v376
    %659 = vmatpush.msra.mxu0 %v373
    %660 = vmatpush.msra.mxu0 %v370
    %661 = vmatpush.msra.mxu0 %v367
    %662 = vmatpush.msra.mxu0 %v364
    %663 = vmatpush.msra.mxu0 %v361
    %664 = vmatpush.msra.mxu0 %v358
    %665 = vmatpush.msra.mxu0 %v355
    %666 = vmatpush.msra.mxu0 %v352
    %667 = vmatpush.msra.mxu0 %v349
    %668 = vmatpush.msra.mxu0 %v346
    %669 = vmatpush.msra.mxu0 %v343
    %670 = vmatpush.msra.mxu0 %v340
    %671 = vmatpush.msra.mxu0 %v337
    %672 = vmatpush.msra.mxu0 %v334
    %673 = vmatpush.msra.mxu0 %v331
    %674 = vmatmul.f32.gmra.mxu0 %v609
    %v675 = vpop.f32.mrf.mxu0
    %v676 = vadd.f32 0.0, %v675
    %677 = vdwg.mxu0
    %v678 = vadd.f32 %v615, %v636
    %v679 = vxor.u32 %v678, 2147483648
    %v680 = vmul.f32 %v679, 1.442695
    %v681 = vpow.pop %v680
    %v682 = vadd.f32 %v681, 1.0
    %v683 = vrcp.pop %v682
    %v684 = vmul.f32 %v682, %v683
    %v685 = vsub.f32 1.0, %v684
    %v686 = vmul.f32 %v683, %v685
    %v687 = vadd.f32 %v683, %v686
    %vm688 = vweird.f32 %v682
    %vm689 = vweird.f32 %v683
    %vm690 = vmor %vm688, %vm689
    %v691 = vsel %vm690, %v683, %v687
    %v692 = vand.u32 2147483647, %v682
    %vm693 = vcmp.eq.f32.partialorder %v692, 8.507059e+37
    %v694 = vand.u32 %v682, 2147483648
    %v695 = vor.u32 1.1754944e-38, %v694
    %v696 = vsel %vm693, %v695, %v691
    %v697 = vmul.f32 1.0, %v696
    %v698 = vadd.f32 %v616, %v656
    %v699 = vxor.u32 %v698, 2147483648
    %v700 = vmul.f32 %v699, 1.442695
    %v701 = vpow.pop %v700
    %v702 = vadd.f32 %v701, 1.0
    %v703 = vrcp.pop %v702
    %v704 = vmul.f32 %v702, %v703
    %v705 = vsub.f32 1.0, %v704
    %v706 = vmul.f32 %v703, %v705
    %v707 = vadd.f32 %v703, %v706
    %vm708 = vweird.f32 %v702
    %vm709 = vweird.f32 %v703
    %vm710 = vmor %vm708, %vm709
    %v711 = vsel %vm710, %v703, %v707
    %v712 = vand.u32 2147483647, %v702
    %vm713 = vcmp.eq.f32.partialorder %v712, 8.507059e+37
    %v714 = vand.u32 %v702, 2147483648
    %v715 = vor.u32 1.1754944e-38, %v714
    %v716 = vsel %vm713, %v715, %v711
    %v717 = vmul.f32 1.0, %v716
    %v718 = vadd.f32 %v676, %v379
    %v719 = vmul.f32 %v697, %v718
    %v720 = vadd.f32 %v617, %v719
    %v721 = vtanh.pop %v720
    %v722 = vsub.f32 1.0, %v717
    %v723 = vmul.f32 %v722, %v721
    %v724 = vmul.f32 %v717, %v609
    %v725 = vadd.f32 %v723, %v724
    %s726 = scalar_lea.vmem [#allocation3], 16
    %727 = vst [vmem:[%s726] sm:$0xff] %v725
    %s728 = smul.u32 3, 3
    %s729 = smul.addr %s728, 8
    %s730 = scalar_lea.vmem [#allocation2], %s729
    %v731 = vld [vmem:[%s730] sm:$0xff]
    %v732 = vld [vmem:[%s730 + $0x8] sm:$0xff]
    %v733 = vld [vmem:[%s730 + $0x10] sm:$0xff]
    %734 = vmatpush.msra.mxu0 %v374
    %735 = vmatpush.msra.mxu0 %v371
    %736 = vmatpush.msra.mxu0 %v368
    %737 = vmatpush.msra.mxu0 %v365
    %738 = vmatpush.msra.mxu0 %v362
    %739 = vmatpush.msra.mxu0 %v359
    %740 = vmatpush.msra.mxu0 %v356
    %741 = vmatpush.msra.mxu0 %v353
    %742 = vmatpush.msra.mxu0 %v350
    %743 = vmatpush.msra.mxu0 %v347
    %744 = vmatpush.msra.mxu0 %v344
    %745 = vmatpush.msra.mxu0 %v341
    %746 = vmatpush.msra.mxu0 %v338
    %747 = vmatpush.msra.mxu0 %v335
    %748 = vmatpush.msra.mxu0 %v332
    %749 = vmatpush.msra.mxu0 %v329
    %750 = vmatmul.f32.gmra.mxu0 %v725
    %v751 = vpop.f32.mrf.mxu0
    %v752 = vadd.f32 0.0, %v751
    %753 = vdwg.mxu0
    %754 = vmatpush.msra.mxu0 %v375
    %755 = vmatpush.msra.mxu0 %v372
    %756 = vmatpush.msra.mxu0 %v369
    %757 = vmatpush.msra.mxu0 %v366
    %758 = vmatpush.msra.mxu0 %v363
    %759 = vmatpush.msra.mxu0 %v360
    %760 = vmatpush.msra.mxu0 %v357
    %761 = vmatpush.msra.mxu0 %v354
    %762 = vmatpush.msra.mxu0 %v351
    %763 = vmatpush.msra.mxu0 %v348
    %764 = vmatpush.msra.mxu0 %v345
    %765 = vmatpush.msra.mxu0 %v342
    %766 = vmatpush.msra.mxu0 %v339
    %767 = vmatpush.msra.mxu0 %v336
    %768 = vmatpush.msra.mxu0 %v333
    %769 = vmatpush.msra.mxu0 %v330
    %770 = vmatmul.f32.gmra.mxu0 %v725
    %v771 = vpop.f32.mrf.mxu0
    %v772 = vadd.f32 0.0, %v771
    %773 = vdwg.mxu0
    %774 = vmatpush.msra.mxu0 %v376
    %775 = vmatpush.msra.mxu0 %v373
    %776 = vmatpush.msra.mxu0 %v370
    %777 = vmatpush.msra.mxu0 %v367
    %778 = vmatpush.msra.mxu0 %v364
    %779 = vmatpush.msra.mxu0 %v361
    %780 = vmatpush.msra.mxu0 %v358
    %781 = vmatpush.msra.mxu0 %v355
    %782 = vmatpush.msra.mxu0 %v352
    %783 = vmatpush.msra.mxu0 %v349
    %784 = vmatpush.msra.mxu0 %v346
    %785 = vmatpush.msra.mxu0 %v343
    %786 = vmatpush.msra.mxu0 %v340
    %787 = vmatpush.msra.mxu0 %v337
    %788 = vmatpush.msra.mxu0 %v334
    %789 = vmatpush.msra.mxu0 %v331
    %790 = vmatmul.f32.gmra.mxu0 %v725
    %v791 = vpop.f32.mrf.mxu0
    %v792 = vadd.f32 0.0, %v791
    %793 = vdwg.mxu0
    %v794 = vadd.f32 %v731, %v752
    %v795 = vxor.u32 %v794, 2147483648
    %v796 = vmul.f32 %v795, 1.442695
    %v797 = vpow.pop %v796
    %v798 = vadd.f32 %v797, 1.0
    %v799 = vrcp.pop %v798
    %v800 = vmul.f32 %v798, %v799
    %v801 = vsub.f32 1.0, %v800
    %v802 = vmul.f32 %v799, %v801
    %v803 = vadd.f32 %v799, %v802
    %vm804 = vweird.f32 %v798
    %vm805 = vweird.f32 %v799
    %vm806 = vmor %vm804, %vm805
    %v807 = vsel %vm806, %v799, %v803
    %v808 = vand.u32 2147483647, %v798
    %vm809 = vcmp.eq.f32.partialorder %v808, 8.507059e+37
    %v810 = vand.u32 %v798, 2147483648
    %v811 = vor.u32 1.1754944e-38, %v810
    %v812 = vsel %vm809, %v811, %v807
    %v813 = vmul.f32 1.0, %v812
    %v814 = vadd.f32 %v732, %v772
    %v815 = vxor.u32 %v814, 2147483648
    %v816 = vmul.f32 %v815, 1.442695
    %v817 = vpow.pop %v816
    %v818 = vadd.f32 %v817, 1.0
    %v819 = vrcp.pop %v818
    %v820 = vmul.f32 %v818, %v819
    %v821 = vsub.f32 1.0, %v820
    %v822 = vmul.f32 %v819, %v821
    %v823 = vadd.f32 %v819, %v822
    %vm824 = vweird.f32 %v818
    %vm825 = vweird.f32 %v819
    %vm826 = vmor %vm824, %vm825
    %v827 = vsel %vm826, %v819, %v823
    %v828 = vand.u32 2147483647, %v818
    %vm829 = vcmp.eq.f32.partialorder %v828, 8.507059e+37
    %v830 = vand.u32 %v818, 2147483648
    %v831 = vor.u32 1.1754944e-38, %v830
    %v832 = vsel %vm829, %v831, %v827
    %v833 = vmul.f32 1.0, %v832
    %v834 = vadd.f32 %v792, %v379
    %v835 = vmul.f32 %v813, %v834
    %v836 = vadd.f32 %v733, %v835
    %v837 = vtanh.pop %v836
    %v838 = vsub.f32 1.0, %v833
    %v839 = vmul.f32 %v838, %v837
    %v840 = vmul.f32 %v833, %v725
    %v841 = vadd.f32 %v839, %v840
    %s842 = scalar_lea.vmem [#allocation3], 24
    %843 = vst [vmem:[%s842] sm:$0xff] %v841
    %s844 = smul.u32 4, 3
    %s845 = smul.addr %s844, 8
    %s846 = scalar_lea.vmem [#allocation2], %s845
    %v847 = vld [vmem:[%s846] sm:$0xff]
    %v848 = vld [vmem:[%s846 + $0x8] sm:$0xff]
    %v849 = vld [vmem:[%s846 + $0x10] sm:$0xff]
    %850 = vmatpush.msra.mxu0 %v374
    %851 = vmatpush.msra.mxu0 %v371
    %852 = vmatpush.msra.mxu0 %v368
    %853 = vmatpush.msra.mxu0 %v365
    %854 = vmatpush.msra.mxu0 %v362
    %855 = vmatpush.msra.mxu0 %v359
    %856 = vmatpush.msra.mxu0 %v356
    %857 = vmatpush.msra.mxu0 %v353
    %858 = vmatpush.msra.mxu0 %v350
    %859 = vmatpush.msra.mxu0 %v347
    %860 = vmatpush.msra.mxu0 %v344
    %861 = vmatpush.msra.mxu0 %v341
    %862 = vmatpush.msra.mxu0 %v338
    %863 = vmatpush.msra.mxu0 %v335
    %864 = vmatpush.msra.mxu0 %v332
    %865 = vmatpush.msra.mxu0 %v329
    %866 = vmatmul.f32.gmra.mxu0 %v841
    %v867 = vpop.f32.mrf.mxu0
    %v868 = vadd.f32 0.0, %v867
    %869 = vdwg.mxu0
    %870 = vmatpush.msra.mxu0 %v375
    %871 = vmatpush.msra.mxu0 %v372
    %872 = vmatpush.msra.mxu0 %v369
    %873 = vmatpush.msra.mxu0 %v366
    %874 = vmatpush.msra.mxu0 %v363
    %875 = vmatpush.msra.mxu0 %v360
    %876 = vmatpush.msra.mxu0 %v357
    %877 = vmatpush.msra.mxu0 %v354
    %878 = vmatpush.msra.mxu0 %v351
    %879 = vmatpush.msra.mxu0 %v348
    %880 = vmatpush.msra.mxu0 %v345
    %881 = vmatpush.msra.mxu0 %v342
    %882 = vmatpush.msra.mxu0 %v339
    %883 = vmatpush.msra.mxu0 %v336
    %884 = vmatpush.msra.mxu0 %v333
    %885 = vmatpush.msra.mxu0 %v330
    %886 = vmatmul.f32.gmra.mxu0 %v841
    %v887 = vpop.f32.mrf.mxu0
    %v888 = vadd.f32 0.0, %v887
    %889 = vdwg.mxu0
    %890 = vmatpush.msra.mxu0 %v376
    %891 = vmatpush.msra.mxu0 %v373
    %892 = vmatpush.msra.mxu0 %v370
    %893 = vmatpush.msra.mxu0 %v367
    %894 = vmatpush.msra.mxu0 %v364
    %895 = vmatpush.msra.mxu0 %v361
    %896 = vmatpush.msra.mxu0 %v358
    %897 = vmatpush.msra.mxu0 %v355
    %898 = vmatpush.msra.mxu0 %v352
    %899 = vmatpush.msra.mxu0 %v349
    %900 = vmatpush.msra.mxu0 %v346
    %901 = vmatpush.msra.mxu0 %v343
    %902 = vmatpush.msra.mxu0 %v340
    %903 = vmatpush.msra.mxu0 %v337
    %904 = vmatpush.msra.mxu0 %v334
    %905 = vmatpush.msra.mxu0 %v331
    %906 = vmatmul.f32.gmra.mxu0 %v841
    %v907 = vpop.f32.mrf.mxu0
    %v908 = vadd.f32 0.0, %v907
    %909 = vdwg.mxu0
    %v910 = vadd.f32 %v847, %v868
    %v911 = vxor.u32 %v910, 2147483648
    %v912 = vmul.f32 %v911, 1.442695
    %v913 = vpow.pop %v912
    %v914 = vadd.f32 %v913, 1.0
    %v915 = vrcp.pop %v914
    %v916 = vmul.f32 %v914, %v915
    %v917 = vsub.f32 1.0, %v916
    %v918 = vmul.f32 %v915, %v917
    %v919 = vadd.f32 %v915, %v918
    %vm920 = vweird.f32 %v914
    %vm921 = vweird.f32 %v915
    %vm922 = vmor %vm920, %vm921
    %v923 = vsel %vm922, %v915, %v919
    %v924 = vand.u32 2147483647, %v914
    %vm925 = vcmp.eq.f32.partialorder %v924, 8.507059e+37
    %v926 = vand.u32 %v914, 2147483648
    %v927 = vor.u32 1.1754944e-38, %v926
    %v928 = vsel %vm925, %v927, %v923
    %v929 = vmul.f32 1.0, %v928
    %v930 = vadd.f32 %v848, %v888
    %v931 = vxor.u32 %v930, 2147483648
    %v932 = vmul.f32 %v931, 1.442695
    %v933 = vpow.pop %v932
    %v934 = vadd.f32 %v933, 1.0
    %v935 = vrcp.pop %v934
    %v936 = vmul.f32 %v934, %v935
    %v937 = vsub.f32 1.0, %v936
    %v938 = vmul.f32 %v935, %v937
    %v939 = vadd.f32 %v935, %v938
    %vm940 = vweird.f32 %v934
    %vm941 = vweird.f32 %v935
    %vm942 = vmor %vm940, %vm941
    %v943 = vsel %vm942, %v935, %v939
    %v944 = vand.u32 2147483647, %v934
    %vm945 = vcmp.eq.f32.partialorder %v944, 8.507059e+37
    %v946 = vand.u32 %v934, 2147483648
    %v947 = vor.u32 1.1754944e-38, %v946
    %v948 = vsel %vm945, %v947, %v943
    %v949 = vmul.f32 1.0, %v948
    %v950 = vadd.f32 %v908, %v379
    %v951 = vmul.f32 %v929, %v950
    %v952 = vadd.f32 %v849, %v951
    %v953 = vtanh.pop %v952
    %v954 = vsub.f32 1.0, %v949
    %v955 = vmul.f32 %v954, %v953
    %v956 = vmul.f32 %v949, %v841
    %v957 = vadd.f32 %v955, %v956
    %s958 = scalar_lea.vmem [#allocation3], 32
    %959 = vst [vmem:[%s958] sm:$0xff] %v957
    %s960 = smul.u32 5, 3
    %s961 = smul.addr %s960, 8
    %s962 = scalar_lea.vmem [#allocation2], %s961
    %v963 = vld [vmem:[%s962] sm:$0xff]
    %v964 = vld [vmem:[%s962 + $0x8] sm:$0xff]
    %v965 = vld [vmem:[%s962 + $0x10] sm:$0xff]
    %966 = vmatpush.msra.mxu0 %v374
    %967 = vmatpush.msra.mxu0 %v371
    %968 = vmatpush.msra.mxu0 %v368
    %969 = vmatpush.msra.mxu0 %v365
    %970 = vmatpush.msra.mxu0 %v362
    %971 = vmatpush.msra.mxu0 %v359
    %972 = vmatpush.msra.mxu0 %v356
    %973 = vmatpush.msra.mxu0 %v353
    %974 = vmatpush.msra.mxu0 %v350
    %975 = vmatpush.msra.mxu0 %v347
    %976 = vmatpush.msra.mxu0 %v344
    %977 = vmatpush.msra.mxu0 %v341
    %978 = vmatpush.msra.mxu0 %v338
    %979 = vmatpush.msra.mxu0 %v335
    %980 = vmatpush.msra.mxu0 %v332
    %981 = vmatpush.msra.mxu0 %v329
    %982 = vmatmul.f32.gmra.mxu0 %v957
    %v983 = vpop.f32.mrf.mxu0
    %v984 = vadd.f32 0.0, %v983
    %985 = vdwg.mxu0
    %986 = vmatpush.msra.mxu0 %v375
    %987 = vmatpush.msra.mxu0 %v372
    %988 = vmatpush.msra.mxu0 %v369
    %989 = vmatpush.msra.mxu0 %v366
    %990 = vmatpush.msra.mxu0 %v363
    %991 = vmatpush.msra.mxu0 %v360
    %992 = vmatpush.msra.mxu0 %v357
    %993 = vmatpush.msra.mxu0 %v354
    %994 = vmatpush.msra.mxu0 %v351
    %995 = vmatpush.msra.mxu0 %v348
    %996 = vmatpush.msra.mxu0 %v345
    %997 = vmatpush.msra.mxu0 %v342
    %998 = vmatpush.msra.mxu0 %v339
    %999 = vmatpush.msra.mxu0 %v336
    %1000 = vmatpush.msra.mxu0 %v333
    %1001 = vmatpush.msra.mxu0 %v330
    %1002 = vmatmul.f32.gmra.mxu0 %v957
    %v1003 = vpop.f32.mrf.mxu0
    %v1004 = vadd.f32 0.0, %v1003
    %1005 = vdwg.mxu0
    %1006 = vmatpush.msra.mxu0 %v376
    %1007 = vmatpush.msra.mxu0 %v373
    %1008 = vmatpush.msra.mxu0 %v370
    %1009 = vmatpush.msra.mxu0 %v367
    %1010 = vmatpush.msra.mxu0 %v364
    %1011 = vmatpush.msra.mxu0 %v361
    %1012 = vmatpush.msra.mxu0 %v358
    %1013 = vmatpush.msra.mxu0 %v355
    %1014 = vmatpush.msra.mxu0 %v352
    %1015 = vmatpush.msra.mxu0 %v349
    %1016 = vmatpush.msra.mxu0 %v346
    %1017 = vmatpush.msra.mxu0 %v343
    %1018 = vmatpush.msra.mxu0 %v340
    %1019 = vmatpush.msra.mxu0 %v337
    %1020 = vmatpush.msra.mxu0 %v334
    %1021 = vmatpush.msra.mxu0 %v331
    %1022 = vmatmul.f32.gmra.mxu0 %v957
    %v1023 = vpop.f32.mrf.mxu0
    %v1024 = vadd.f32 0.0, %v1023
    %1025 = vdwg.mxu0
    %v1026 = vadd.f32 %v963, %v984
    %v1027 = vxor.u32 %v1026, 2147483648
    %v1028 = vmul.f32 %v1027, 1.442695
    %v1029 = vpow.pop %v1028
    %v1030 = vadd.f32 %v1029, 1.0
    %v1031 = vrcp.pop %v1030
    %v1032 = vmul.f32 %v1030, %v1031
    %v1033 = vsub.f32 1.0, %v1032
    %v1034 = vmul.f32 %v1031, %v1033
    %v1035 = vadd.f32 %v1031, %v1034
    %vm1036 = vweird.f32 %v1030
    %vm1037 = vweird.f32 %v1031
    %vm1038 = vmor %vm1036, %vm1037
    %v1039 = vsel %vm1038, %v1031, %v1035
    %v1040 = vand.u32 2147483647, %v1030
    %vm1041 = vcmp.eq.f32.partialorder %v1040, 8.507059e+37
    %v1042 = vand.u32 %v1030, 2147483648
    %v1043 = vor.u32 1.1754944e-38, %v1042
    %v1044 = vsel %vm1041, %v1043, %v1039
    %v1045 = vmul.f32 1.0, %v1044
    %v1046 = vadd.f32 %v964, %v1004
    %v1047 = vxor.u32 %v1046, 2147483648
    %v1048 = vmul.f32 %v1047, 1.442695
    %v1049 = vpow.pop %v1048
    %v1050 = vadd.f32 %v1049, 1.0
    %v1051 = vrcp.pop %v1050
    %v1052 = vmul.f32 %v1050, %v1051
    %v1053 = vsub.f32 1.0, %v1052
    %v1054 = vmul.f32 %v1051, %v1053
    %v1055 = vadd.f32 %v1051, %v1054
    %vm1056 = vweird.f32 %v1050
    %vm1057 = vweird.f32 %v1051
    %vm1058 = vmor %vm1056, %vm1057
    %v1059 = vsel %vm1058, %v1051, %v1055
    %v1060 = vand.u32 2147483647, %v1050
    %vm1061 = vcmp.eq.f32.partialorder %v1060, 8.507059e+37
    %v1062 = vand.u32 %v1050, 2147483648
    %v1063 = vor.u32 1.1754944e-38, %v1062
    %v1064 = vsel %vm1061, %v1063, %v1059
    %v1065 = vmul.f32 1.0, %v1064
    %v1066 = vadd.f32 %v1024, %v379
    %v1067 = vmul.f32 %v1045, %v1066
    %v1068 = vadd.f32 %v965, %v1067
    %v1069 = vtanh.pop %v1068
    %v1070 = vsub.f32 1.0, %v1065
    %v1071 = vmul.f32 %v1070, %v1069
    %v1072 = vmul.f32 %v1065, %v957
    %v1073 = vadd.f32 %v1071, %v1072
    %s1074 = scalar_lea.vmem [#allocation3], 40
    %1075 = vst [vmem:[%s1074] sm:$0xff] %v1073
    %s1076 = smul.u32 6, 3
    %s1077 = smul.addr %s1076, 8
    %s1078 = scalar_lea.vmem [#allocation2], %s1077
    %v1079 = vld [vmem:[%s1078] sm:$0xff]
    %v1080 = vld [vmem:[%s1078 + $0x8] sm:$0xff]
    %v1081 = vld [vmem:[%s1078 + $0x10] sm:$0xff]
    %1082 = vmatpush.msra.mxu0 %v374
    %1083 = vmatpush.msra.mxu0 %v371
    %1084 = vmatpush.msra.mxu0 %v368
    %1085 = vmatpush.msra.mxu0 %v365
    %1086 = vmatpush.msra.mxu0 %v362
    %1087 = vmatpush.msra.mxu0 %v359
    %1088 = vmatpush.msra.mxu0 %v356
    %1089 = vmatpush.msra.mxu0 %v353
    %1090 = vmatpush.msra.mxu0 %v350
    %1091 = vmatpush.msra.mxu0 %v347
    %1092 = vmatpush.msra.mxu0 %v344
    %1093 = vmatpush.msra.mxu0 %v341
    %1094 = vmatpush.msra.mxu0 %v338
    %1095 = vmatpush.msra.mxu0 %v335
    %1096 = vmatpush.msra.mxu0 %v332
    %1097 = vmatpush.msra.mxu0 %v329
    %1098 = vmatmul.f32.gmra.mxu0 %v1073
    %v1099 = vpop.f32.mrf.mxu0
    %v1100 = vadd.f32 0.0, %v1099
    %1101 = vdwg.mxu0
    %1102 = vmatpush.msra.mxu0 %v375
    %1103 = vmatpush.msra.mxu0 %v372
    %1104 = vmatpush.msra.mxu0 %v369
    %1105 = vmatpush.msra.mxu0 %v366
    %1106 = vmatpush.msra.mxu0 %v363
    %1107 = vmatpush.msra.mxu0 %v360
    %1108 = vmatpush.msra.mxu0 %v357
    %1109 = vmatpush.msra.mxu0 %v354
    %1110 = vmatpush.msra.mxu0 %v351
    %1111 = vmatpush.msra.mxu0 %v348
    %1112 = vmatpush.msra.mxu0 %v345
    %1113 = vmatpush.msra.mxu0 %v342
    %1114 = vmatpush.msra.mxu0 %v339
    %1115 = vmatpush.msra.mxu0 %v336
    %1116 = vmatpush.msra.mxu0 %v333
    %1117 = vmatpush.msra.mxu0 %v330
    %1118 = vmatmul.f32.gmra.mxu0 %v1073
    %v1119 = vpop.f32.mrf.mxu0
    %v1120 = vadd.f32 0.0, %v1119
    %1121 = vdwg.mxu0
    %1122 = vmatpush.msra.mxu0 %v376
    %1123 = vmatpush.msra.mxu0 %v373
    %1124 = vmatpush.msra.mxu0 %v370
    %1125 = vmatpush.msra.mxu0 %v367
    %1126 = vmatpush.msra.mxu0 %v364
    %1127 = vmatpush.msra.mxu0 %v361
    %1128 = vmatpush.msra.mxu0 %v358
    %1129 = vmatpush.msra.mxu0 %v355
    %1130 = vmatpush.msra.mxu0 %v352
    %1131 = vmatpush.msra.mxu0 %v349
    %1132 = vmatpush.msra.mxu0 %v346
    %1133 = vmatpush.msra.mxu0 %v343
    %1134 = vmatpush.msra.mxu0 %v340
    %1135 = vmatpush.msra.mxu0 %v337
    %1136 = vmatpush.msra.mxu0 %v334
    %1137 = vmatpush.msra.mxu0 %v331
    %1138 = vmatmul.f32.gmra.mxu0 %v1073
    %v1139 = vpop.f32.mrf.mxu0
    %v1140 = vadd.f32 0.0, %v1139
    %1141 = vdwg.mxu0
    %v1142 = vadd.f32 %v1079, %v1100
    %v1143 = vxor.u32 %v1142, 2147483648
    %v1144 = vmul.f32 %v1143, 1.442695
    %v1145 = vpow.pop %v1144
    %v1146 = vadd.f32 %v1145, 1.0
    %v1147 = vrcp.pop %v1146
    %v1148 = vmul.f32 %v1146, %v1147
    %v1149 = vsub.f32 1.0, %v1148
    %v1150 = vmul.f32 %v1147, %v1149
    %v1151 = vadd.f32 %v1147, %v1150
    %vm1152 = vweird.f32 %v1146
    %vm1153 = vweird.f32 %v1147
    %vm1154 = vmor %vm1152, %vm1153
    %v1155 = vsel %vm1154, %v1147, %v1151
    %v1156 = vand.u32 2147483647, %v1146
    %vm1157 = vcmp.eq.f32.partialorder %v1156, 8.507059e+37
    %v1158 = vand.u32 %v1146, 2147483648
    %v1159 = vor.u32 1.1754944e-38, %v1158
    %v1160 = vsel %vm1157, %v1159, %v1155
    %v1161 = vmul.f32 1.0, %v1160
    %v1162 = vadd.f32 %v1080, %v1120
    %v1163 = vxor.u32 %v1162, 2147483648
    %v1164 = vmul.f32 %v1163, 1.442695
    %v1165 = vpow.pop %v1164
    %v1166 = vadd.f32 %v1165, 1.0
    %v1167 = vrcp.pop %v1166
    %v1168 = vmul.f32 %v1166, %v1167
    %v1169 = vsub.f32 1.0, %v1168
    %v1170 = vmul.f32 %v1167, %v1169
    %v1171 = vadd.f32 %v1167, %v1170
    %vm1172 = vweird.f32 %v1166
    %vm1173 = vweird.f32 %v1167
    %vm1174 = vmor %vm1172, %vm1173
    %v1175 = vsel %vm1174, %v1167, %v1171
    %v1176 = vand.u32 2147483647, %v1166
    %vm1177 = vcmp.eq.f32.partialorder %v1176, 8.507059e+37
    %v1178 = vand.u32 %v1166, 2147483648
    %v1179 = vor.u32 1.1754944e-38, %v1178
    %v1180 = vsel %vm1177, %v1179, %v1175
    %v1181 = vmul.f32 1.0, %v1180
    %v1182 = vadd.f32 %v1140, %v379
    %v1183 = vmul.f32 %v1161, %v1182
    %v1184 = vadd.f32 %v1081, %v1183
    %v1185 = vtanh.pop %v1184
    %v1186 = vsub.f32 1.0, %v1181
    %v1187 = vmul.f32 %v1186, %v1185
    %v1188 = vmul.f32 %v1181, %v1073
    %v1189 = vadd.f32 %v1187, %v1188
    %s1190 = scalar_lea.vmem [#allocation3], 48
    %1191 = vst [vmem:[%s1190] sm:$0xff] %v1189
    %s1192 = smul.u32 7, 3
    %s1193 = smul.addr %s1192, 8
    %s1194 = scalar_lea.vmem [#allocation2], %s1193
    %v1195 = vld [vmem:[%s1194] sm:$0xff]
    %v1196 = vld [vmem:[%s1194 + $0x8] sm:$0xff]
    %v1197 = vld [vmem:[%s1194 + $0x10] sm:$0xff]
    %1198 = vmatpush.msra.mxu0 %v374
    %1199 = vmatpush.msra.mxu0 %v371
    %1200 = vmatpush.msra.mxu0 %v368
    %1201 = vmatpush.msra.mxu0 %v365
    %1202 = vmatpush.msra.mxu0 %v362
    %1203 = vmatpush.msra.mxu0 %v359
    %1204 = vmatpush.msra.mxu0 %v356
    %1205 = vmatpush.msra.mxu0 %v353
    %1206 = vmatpush.msra.mxu0 %v350
    %1207 = vmatpush.msra.mxu0 %v347
    %1208 = vmatpush.msra.mxu0 %v344
    %1209 = vmatpush.msra.mxu0 %v341
    %1210 = vmatpush.msra.mxu0 %v338
    %1211 = vmatpush.msra.mxu0 %v335
    %1212 = vmatpush.msra.mxu0 %v332
    %1213 = vmatpush.msra.mxu0 %v329
    %1214 = vmatmul.f32.gmra.mxu0 %v1189
    %v1215 = vpop.f32.mrf.mxu0
    %v1216 = vadd.f32 0.0, %v1215
    %1217 = vdwg.mxu0
    %1218 = vmatpush.msra.mxu0 %v375
    %1219 = vmatpush.msra.mxu0 %v372
    %1220 = vmatpush.msra.mxu0 %v369
    %1221 = vmatpush.msra.mxu0 %v366
    %1222 = vmatpush.msra.mxu0 %v363
    %1223 = vmatpush.msra.mxu0 %v360
    %1224 = vmatpush.msra.mxu0 %v357
    %1225 = vmatpush.msra.mxu0 %v354
    %1226 = vmatpush.msra.mxu0 %v351
    %1227 = vmatpush.msra.mxu0 %v348
    %1228 = vmatpush.msra.mxu0 %v345
    %1229 = vmatpush.msra.mxu0 %v342
    %1230 = vmatpush.msra.mxu0 %v339
    %1231 = vmatpush.msra.mxu0 %v336
    %1232 = vmatpush.msra.mxu0 %v333
    %1233 = vmatpush.msra.mxu0 %v330
    %1234 = vmatmul.f32.gmra.mxu0 %v1189
    %v1235 = vpop.f32.mrf.mxu0
    %v1236 = vadd.f32 0.0, %v1235
    %1237 = vdwg.mxu0
    %1238 = vmatpush.msra.mxu0 %v376
    %1239 = vmatpush.msra.mxu0 %v373
    %1240 = vmatpush.msra.mxu0 %v370
    %1241 = vmatpush.msra.mxu0 %v367
    %1242 = vmatpush.msra.mxu0 %v364
    %1243 = vmatpush.msra.mxu0 %v361
    %1244 = vmatpush.msra.mxu0 %v358
    %1245 = vmatpush.msra.mxu0 %v355
    %1246 = vmatpush.msra.mxu0 %v352
    %1247 = vmatpush.msra.mxu0 %v349
    %1248 = vmatpush.msra.mxu0 %v346
    %1249 = vmatpush.msra.mxu0 %v343
    %1250 = vmatpush.msra.mxu0 %v340
    %1251 = vmatpush.msra.mxu0 %v337
    %1252 = vmatpush.msra.mxu0 %v334
    %1253 = vmatpush.msra.mxu0 %v331
    %1254 = vmatmul.f32.gmra.mxu0 %v1189
    %v1255 = vpop.f32.mrf.mxu0
    %v1256 = vadd.f32 0.0, %v1255
    %1257 = vdwg.mxu0
    %v1258 = vadd.f32 %v1195, %v1216
    %v1259 = vxor.u32 %v1258, 2147483648
    %v1260 = vmul.f32 %v1259, 1.442695
    %v1261 = vpow.pop %v1260
    %v1262 = vadd.f32 %v1261, 1.0
    %v1263 = vrcp.pop %v1262
    %v1264 = vmul.f32 %v1262, %v1263
    %v1265 = vsub.f32 1.0, %v1264
    %v1266 = vmul.f32 %v1263, %v1265
    %v1267 = vadd.f32 %v1263, %v1266
    %vm1268 = vweird.f32 %v1262
    %vm1269 = vweird.f32 %v1263
    %vm1270 = vmor %vm1268, %vm1269
    %v1271 = vsel %vm1270, %v1263, %v1267
    %v1272 = vand.u32 2147483647, %v1262
    %vm1273 = vcmp.eq.f32.partialorder %v1272, 8.507059e+37
    %v1274 = vand.u32 %v1262, 2147483648
    %v1275 = vor.u32 1.1754944e-38, %v1274
    %v1276 = vsel %vm1273, %v1275, %v1271
    %v1277 = vmul.f32 1.0, %v1276
    %v1278 = vadd.f32 %v1196, %v1236
    %v1279 = vxor.u32 %v1278, 2147483648
    %v1280 = vmul.f32 %v1279, 1.442695
    %v1281 = vpow.pop %v1280
    %v1282 = vadd.f32 %v1281, 1.0
    %v1283 = vrcp.pop %v1282
    %v1284 = vmul.f32 %v1282, %v1283
    %v1285 = vsub.f32 1.0, %v1284
    %v1286 = vmul.f32 %v1283, %v1285
    %v1287 = vadd.f32 %v1283, %v1286
    %vm1288 = vweird.f32 %v1282
    %vm1289 = vweird.f32 %v1283
    %vm1290 = vmor %vm1288, %vm1289
    %v1291 = vsel %vm1290, %v1283, %v1287
    %v1292 = vand.u32 2147483647, %v1282
    %vm1293 = vcmp.eq.f32.partialorder %v1292, 8.507059e+37
    %v1294 = vand.u32 %v1282, 2147483648
    %v1295 = vor.u32 1.1754944e-38, %v1294
    %v1296 = vsel %vm1293, %v1295, %v1291
    %v1297 = vmul.f32 1.0, %v1296
    %v1298 = vadd.f32 %v1256, %v379
    %v1299 = vmul.f32 %v1277, %v1298
    %v1300 = vadd.f32 %v1197, %v1299
    %v1301 = vtanh.pop %v1300
    %v1302 = vsub.f32 1.0, %v1297
    %v1303 = vmul.f32 %v1302, %v1301
    %v1304 = vmul.f32 %v1297, %v1189
    %v1305 = vadd.f32 %v1303, %v1304
    %s1306 = scalar_lea.vmem [#allocation3], 56
    %1307 = vst [vmem:[%s1306] sm:$0xff] %v1305
    %v1308 = vld [vmem:[#allocation3] sm:$0xff]
    %v1309 = vld [vmem:[#allocation3 + $0x8] sm:$0xff]
    %v1310 = vld [vmem:[#allocation3 + $0x10] sm:$0xff]
    %v1311 = vld [vmem:[#allocation3 + $0x18] sm:$0xff]
    %v1312 = vld [vmem:[#allocation3 + $0x20] sm:$0xff]
    %v1313 = vld [vmem:[#allocation3 + $0x28] sm:$0xff]
    %v1314 = vld [vmem:[#allocation3 + $0x30] sm:$0xff]
    %v1315 = vld [vmem:[#allocation3 + $0x38] sm:$0xff]
    %v1316 = vld [vmem:[#allocation8] sm:$0xff]
    %v1317 = vld [vmem:[#allocation8 + $0x8] sm:$0xff]
    %v1318 = vld [vmem:[#allocation8 + $0x10] sm:$0xff]
    %v1319 = vld [vmem:[#allocation8 + $0x18] sm:$0xff]
    %v1320 = vld [vmem:[#allocation8 + $0x20] sm:$0xff]
    %v1321 = vld [vmem:[#allocation8 + $0x28] sm:$0xff]
    %v1322 = vld [vmem:[#allocation8 + $0x30] sm:$0xff]
    %v1323 = vld [vmem:[#allocation8 + $0x38] sm:$0xff]
    %v1324 = vld [vmem:[#allocation8 + $0x40] sm:$0xff]
    %v1325 = vld [vmem:[#allocation8 + $0x48] sm:$0xff]
    %v1326 = vld [vmem:[#allocation8 + $0x50] sm:$0xff]
    %v1327 = vld [vmem:[#allocation8 + $0x58] sm:$0xff]
    %v1328 = vld [vmem:[#allocation8 + $0x60] sm:$0xff]
    %v1329 = vld [vmem:[#allocation8 + $0x68] sm:$0xff]
    %v1330 = vld [vmem:[#allocation8 + $0x70] sm:$0xff]
    %v1331 = vld [vmem:[#allocation8 + $0x78] sm:$0xff]
    %v1332 = vld [vmem:[#allocation8 + $0x80] sm:$0xff]
    %v1333 = vld [vmem:[#allocation8 + $0x88] sm:$0xff]
    %v1334 = vld [vmem:[#allocation8 + $0x90] sm:$0xff]
    %v1335 = vld [vmem:[#allocation8 + $0x98] sm:$0xff]
    %v1336 = vld [vmem:[#allocation8 + $0xa0] sm:$0xff]
    %v1337 = vld [vmem:[#allocation8 + $0xa8] sm:$0xff]
    %v1338 = vld [vmem:[#allocation8 + $0xb0] sm:$0xff]
    %v1339 = vld [vmem:[#allocation8 + $0xb8] sm:$0xff]
    %v1340 = vld [vmem:[#allocation8 + $0xc0] sm:$0xff]
    %v1341 = vld [vmem:[#allocation8 + $0xc8] sm:$0xff]
    %v1342 = vld [vmem:[#allocation8 + $0xd0] sm:$0xff]
    %v1343 = vld [vmem:[#allocation8 + $0xd8] sm:$0xff]
    %v1344 = vld [vmem:[#allocation8 + $0xe0] sm:$0xff]
    %v1345 = vld [vmem:[#allocation8 + $0xe8] sm:$0xff]
    %v1346 = vld [vmem:[#allocation8 + $0xf0] sm:$0xff]
    %v1347 = vld [vmem:[#allocation8 + $0xf8] sm:$0xff]
    %v1348 = vld [vmem:[#allocation8 + $0x100] sm:$0xff]
    %v1349 = vld [vmem:[#allocation8 + $0x108] sm:$0xff]
    %v1350 = vld [vmem:[#allocation8 + $0x110] sm:$0xff]
    %v1351 = vld [vmem:[#allocation8 + $0x118] sm:$0xff]
    %v1352 = vld [vmem:[#allocation8 + $0x120] sm:$0xff]
    %v1353 = vld [vmem:[#allocation8 + $0x128] sm:$0xff]
    %v1354 = vld [vmem:[#allocation8 + $0x130] sm:$0xff]
    %v1355 = vld [vmem:[#allocation8 + $0x138] sm:$0xff]
    %v1356 = vld [vmem:[#allocation8 + $0x140] sm:$0xff]
    %v1357 = vld [vmem:[#allocation8 + $0x148] sm:$0xff]
    %v1358 = vld [vmem:[#allocation8 + $0x150] sm:$0xff]
    %v1359 = vld [vmem:[#allocation8 + $0x158] sm:$0xff]
    %v1360 = vld [vmem:[#allocation8 + $0x160] sm:$0xff]
    %v1361 = vld [vmem:[#allocation8 + $0x168] sm:$0xff]
    %v1362 = vld [vmem:[#allocation8 + $0x170] sm:$0xff]
    %v1363 = vld [vmem:[#allocation8 + $0x178] sm:$0xff]
    %v1364 = vld [vmem:[%s7] sm:$0x7]
    %v1366 = vperm.slane %v1364, 0
    %v1367 = vperm.slane %v1364, 1
    %v1368 = vperm.slane %v1364, 2
    %1372 = vmatpush.msra.mxu0 %v1361
    %1373 = vmatpush.msra.mxu0 %v1358
    %1374 = vmatpush.msra.mxu0 %v1355
    %1375 = vmatpush.msra.mxu0 %v1352
    %1376 = vmatpush.msra.mxu0 %v1349
    %1377 = vmatpush.msra.mxu0 %v1346
    %1378 = vmatpush.msra.mxu0 %v1343
    %1379 = vmatpush.msra.mxu0 %v1340
    %1380 = vmatpush.msra.mxu0 %v1337
    %1381 = vmatpush.msra.mxu0 %v1334
    %1382 = vmatpush.msra.mxu0 %v1331
    %1383 = vmatpush.msra.mxu0 %v1328
    %1384 = vmatpush.msra.mxu0 %v1325
    %1385 = vmatpush.msra.mxu0 %v1322
    %1386 = vmatpush.msra.mxu0 %v1319
    %1387 = vmatpush.msra.mxu0 %v1316
    %1388 = vmatmul.f32.gmra.mxu0 %v1308
    %v1389 = vpop.f32.mrf.mxu0
    %v1390 = vadd.f32 %v1366, %v1389
    %1391 = vmatmul.f32.gmra.mxu0 %v1309
    %v1392 = vpop.f32.mrf.mxu0
    %v1393 = vadd.f32 %v1366, %v1392
    %1394 = vmatmul.f32.gmra.mxu0 %v1310
    %v1395 = vpop.f32.mrf.mxu0
    %v1396 = vadd.f32 %v1366, %v1395
    %1397 = vmatmul.f32.gmra.mxu0 %v1311
    %v1398 = vpop.f32.mrf.mxu0
    %v1399 = vadd.f32 %v1366, %v1398
    %1400 = vmatmul.f32.gmra.mxu0 %v1312
    %v1401 = vpop.f32.mrf.mxu0
    %v1402 = vadd.f32 %v1366, %v1401
    %1403 = vmatmul.f32.gmra.mxu0 %v1313
    %v1404 = vpop.f32.mrf.mxu0
    %v1405 = vadd.f32 %v1366, %v1404
    %1406 = vmatmul.f32.gmra.mxu0 %v1314
    %v1407 = vpop.f32.mrf.mxu0
    %v1408 = vadd.f32 %v1366, %v1407
    %1409 = vmatmul.f32.gmra.mxu0 %v1315
    %v1410 = vpop.f32.mrf.mxu0
    %v1411 = vadd.f32 %v1366, %v1410
    %1412 = vdwg.mxu0
    %1413 = vmatpush.msra.mxu0 %v1362
    %1414 = vmatpush.msra.mxu0 %v1359
    %1415 = vmatpush.msra.mxu0 %v1356
    %1416 = vmatpush.msra.mxu0 %v1353
    %1417 = vmatpush.msra.mxu0 %v1350
    %1418 = vmatpush.msra.mxu0 %v1347
    %1419 = vmatpush.msra.mxu0 %v1344
    %1420 = vmatpush.msra.mxu0 %v1341
    %1421 = vmatpush.msra.mxu0 %v1338
    %1422 = vmatpush.msra.mxu0 %v1335
    %1423 = vmatpush.msra.mxu0 %v1332
    %1424 = vmatpush.msra.mxu0 %v1329
    %1425 = vmatpush.msra.mxu0 %v1326
    %1426 = vmatpush.msra.mxu0 %v1323
    %1427 = vmatpush.msra.mxu0 %v1320
    %1428 = vmatpush.msra.mxu0 %v1317
    %1429 = vmatmul.f32.gmra.mxu0 %v1308
    %v1430 = vpop.f32.mrf.mxu0
    %v1431 = vadd.f32 %v1367, %v1430
    %1432 = vmatmul.f32.gmra.mxu0 %v1309
    %v1433 = vpop.f32.mrf.mxu0
    %v1434 = vadd.f32 %v1367, %v1433
    %1435 = vmatmul.f32.gmra.mxu0 %v1310
    %v1436 = vpop.f32.mrf.mxu0
    %v1437 = vadd.f32 %v1367, %v1436
    %1438 = vmatmul.f32.gmra.mxu0 %v1311
    %v1439 = vpop.f32.mrf.mxu0
    %v1440 = vadd.f32 %v1367, %v1439
    %1441 = vmatmul.f32.gmra.mxu0 %v1312
    %v1442 = vpop.f32.mrf.mxu0
    %v1443 = vadd.f32 %v1367, %v1442
    %1444 = vmatmul.f32.gmra.mxu0 %v1313
    %v1445 = vpop.f32.mrf.mxu0
    %v1446 = vadd.f32 %v1367, %v1445
    %1447 = vmatmul.f32.gmra.mxu0 %v1314
    %v1448 = vpop.f32.mrf.mxu0
    %v1449 = vadd.f32 %v1367, %v1448
    %1450 = vmatmul.f32.gmra.mxu0 %v1315
    %v1451 = vpop.f32.mrf.mxu0
    %v1452 = vadd.f32 %v1367, %v1451
    %1453 = vdwg.mxu0
    %1454 = vmatpush.msra.mxu0 %v1363
    %1455 = vmatpush.msra.mxu0 %v1360
    %1456 = vmatpush.msra.mxu0 %v1357
    %1457 = vmatpush.msra.mxu0 %v1354
    %1458 = vmatpush.msra.mxu0 %v1351
    %1459 = vmatpush.msra.mxu0 %v1348
    %1460 = vmatpush.msra.mxu0 %v1345
    %1461 = vmatpush.msra.mxu0 %v1342
    %1462 = vmatpush.msra.mxu0 %v1339
    %1463 = vmatpush.msra.mxu0 %v1336
    %1464 = vmatpush.msra.mxu0 %v1333
    %1465 = vmatpush.msra.mxu0 %v1330
    %1466 = vmatpush.msra.mxu0 %v1327
    %1467 = vmatpush.msra.mxu0 %v1324
    %1468 = vmatpush.msra.mxu0 %v1321
    %1469 = vmatpush.msra.mxu0 %v1318
    %1470 = vmatmul.f32.gmra.mxu0 %v1308
    %v1471 = vpop.f32.mrf.mxu0
    %v1472 = vadd.f32 %v1368, %v1471
    %1473 = vmatmul.f32.gmra.mxu0 %v1309
    %v1474 = vpop.f32.mrf.mxu0
    %v1475 = vadd.f32 %v1368, %v1474
    %1476 = vmatmul.f32.gmra.mxu0 %v1310
    %v1477 = vpop.f32.mrf.mxu0
    %v1478 = vadd.f32 %v1368, %v1477
    %1479 = vmatmul.f32.gmra.mxu0 %v1311
    %v1480 = vpop.f32.mrf.mxu0
    %v1481 = vadd.f32 %v1368, %v1480
    %1482 = vmatmul.f32.gmra.mxu0 %v1312
    %v1483 = vpop.f32.mrf.mxu0
    %v1484 = vadd.f32 %v1368, %v1483
    %1485 = vmatmul.f32.gmra.mxu0 %v1313
    %v1486 = vpop.f32.mrf.mxu0
    %v1487 = vadd.f32 %v1368, %v1486
    %1488 = vmatmul.f32.gmra.mxu0 %v1314
    %v1489 = vpop.f32.mrf.mxu0
    %v1490 = vadd.f32 %v1368, %v1489
    %1491 = vmatmul.f32.gmra.mxu0 %v1315
    %v1492 = vpop.f32.mrf.mxu0
    %v1493 = vadd.f32 %v1368, %v1492
    %1494 = vdwg.mxu0
    %1495 = vst [vmem:[#allocation2] sm:$0xff] %v1390
    %1496 = vst [vmem:[#allocation2 + $0x8] sm:$0xff] %v1431
    %1497 = vst [vmem:[#allocation2 + $0x10] sm:$0xff] %v1472
    %1498 = vst [vmem:[#allocation2 + $0x18] sm:$0xff] %v1393
    %1499 = vst [vmem:[#allocation2 + $0x20] sm:$0xff] %v1434
    %1500 = vst [vmem:[#allocation2 + $0x28] sm:$0xff] %v1475
    %1501 = vst [vmem:[#allocation2 + $0x30] sm:$0xff] %v1396
    %1502 = vst [vmem:[#allocation2 + $0x38] sm:$0xff] %v1437
    %1503 = vst [vmem:[#allocation2 + $0x40] sm:$0xff] %v1478
    %1504 = vst [vmem:[#allocation2 + $0x48] sm:$0xff] %v1399
    %1505 = vst [vmem:[#allocation2 + $0x50] sm:$0xff] %v1440
    %1506 = vst [vmem:[#allocation2 + $0x58] sm:$0xff] %v1481
    %1507 = vst [vmem:[#allocation2 + $0x60] sm:$0xff] %v1402
    %1508 = vst [vmem:[#allocation2 + $0x68] sm:$0xff] %v1443
    %1509 = vst [vmem:[#allocation2 + $0x70] sm:$0xff] %v1484
    %1510 = vst [vmem:[#allocation2 + $0x78] sm:$0xff] %v1405
    %1511 = vst [vmem:[#allocation2 + $0x80] sm:$0xff] %v1446
    %1512 = vst [vmem:[#allocation2 + $0x88] sm:$0xff] %v1487
    %1513 = vst [vmem:[#allocation2 + $0x90] sm:$0xff] %v1408
    %1514 = vst [vmem:[#allocation2 + $0x98] sm:$0xff] %v1449
    %1515 = vst [vmem:[#allocation2 + $0xa0] sm:$0xff] %v1490
    %1516 = vst [vmem:[#allocation2 + $0xa8] sm:$0xff] %v1411
    %1517 = vst [vmem:[#allocation2 + $0xb0] sm:$0xff] %v1452
    %1518 = vst [vmem:[#allocation2 + $0xb8] sm:$0xff] %v1493
    %v1519 = vld [vmem:[#allocation9] sm:$0xff]
    %v1520 = vld [vmem:[#allocation9 + $0x8] sm:$0xff]
    %v1521 = vld [vmem:[#allocation9 + $0x10] sm:$0xff]
    %v1522 = vld [vmem:[#allocation9 + $0x18] sm:$0xff]
    %v1523 = vld [vmem:[#allocation9 + $0x20] sm:$0xff]
    %v1524 = vld [vmem:[#allocation9 + $0x28] sm:$0xff]
    %v1525 = vld [vmem:[#allocation9 + $0x30] sm:$0xff]
    %v1526 = vld [vmem:[#allocation9 + $0x38] sm:$0xff]
    %v1527 = vld [vmem:[#allocation9 + $0x40] sm:$0xff]
    %v1528 = vld [vmem:[#allocation9 + $0x48] sm:$0xff]
    %v1529 = vld [vmem:[#allocation9 + $0x50] sm:$0xff]
    %v1530 = vld [vmem:[#allocation9 + $0x58] sm:$0xff]
    %v1531 = vld [vmem:[#allocation9 + $0x60] sm:$0xff]
    %v1532 = vld [vmem:[#allocation9 + $0x68] sm:$0xff]
    %v1533 = vld [vmem:[#allocation9 + $0x70] sm:$0xff]
    %v1534 = vld [vmem:[#allocation9 + $0x78] sm:$0xff]
    %v1535 = vld [vmem:[#allocation9 + $0x80] sm:$0xff]
    %v1536 = vld [vmem:[#allocation9 + $0x88] sm:$0xff]
    %v1537 = vld [vmem:[#allocation9 + $0x90] sm:$0xff]
    %v1538 = vld [vmem:[#allocation9 + $0x98] sm:$0xff]
    %v1539 = vld [vmem:[#allocation9 + $0xa0] sm:$0xff]
    %v1540 = vld [vmem:[#allocation9 + $0xa8] sm:$0xff]
    %v1541 = vld [vmem:[#allocation9 + $0xb0] sm:$0xff]
    %v1542 = vld [vmem:[#allocation9 + $0xb8] sm:$0xff]
    %v1543 = vld [vmem:[#allocation9 + $0xc0] sm:$0xff]
    %v1544 = vld [vmem:[#allocation9 + $0xc8] sm:$0xff]
    %v1545 = vld [vmem:[#allocation9 + $0xd0] sm:$0xff]
    %v1546 = vld [vmem:[#allocation9 + $0xd8] sm:$0xff]
    %v1547 = vld [vmem:[#allocation9 + $0xe0] sm:$0xff]
    %v1548 = vld [vmem:[#allocation9 + $0xe8] sm:$0xff]
    %v1549 = vld [vmem:[#allocation9 + $0xf0] sm:$0xff]
    %v1550 = vld [vmem:[#allocation9 + $0xf8] sm:$0xff]
    %v1551 = vld [vmem:[#allocation9 + $0x100] sm:$0xff]
    %v1552 = vld [vmem:[#allocation9 + $0x108] sm:$0xff]
    %v1553 = vld [vmem:[#allocation9 + $0x110] sm:$0xff]
    %v1554 = vld [vmem:[#allocation9 + $0x118] sm:$0xff]
    %v1555 = vld [vmem:[#allocation9 + $0x120] sm:$0xff]
    %v1556 = vld [vmem:[#allocation9 + $0x128] sm:$0xff]
    %v1557 = vld [vmem:[#allocation9 + $0x130] sm:$0xff]
    %v1558 = vld [vmem:[#allocation9 + $0x138] sm:$0xff]
    %v1559 = vld [vmem:[#allocation9 + $0x140] sm:$0xff]
    %v1560 = vld [vmem:[#allocation9 + $0x148] sm:$0xff]
    %v1561 = vld [vmem:[#allocation9 + $0x150] sm:$0xff]
    %v1562 = vld [vmem:[#allocation9 + $0x158] sm:$0xff]
    %v1563 = vld [vmem:[#allocation9 + $0x160] sm:$0xff]
    %v1564 = vld [vmem:[#allocation9 + $0x168] sm:$0xff]
    %v1565 = vld [vmem:[#allocation9 + $0x170] sm:$0xff]
    %v1566 = vld [vmem:[#allocation9 + $0x178] sm:$0xff]
    %v1567 = vld [vmem:[%s8] sm:$0x1]
    %v1569 = vperm.slane %v1567, 0
    %v1571 = vld [vmem:[%s383] sm:$0xff]
    %v1572 = vld [vmem:[%s383 + $0x8] sm:$0xff]
    %v1573 = vld [vmem:[%s383 + $0x10] sm:$0xff]
    %1574 = vmatpush.msra.mxu0 %v1564
    %1575 = vmatpush.msra.mxu0 %v1561
    %1576 = vmatpush.msra.mxu0 %v1558
    %1577 = vmatpush.msra.mxu0 %v1555
    %1578 = vmatpush.msra.mxu0 %v1552
    %1579 = vmatpush.msra.mxu0 %v1549
    %1580 = vmatpush.msra.mxu0 %v1546
    %1581 = vmatpush.msra.mxu0 %v1543
    %1582 = vmatpush.msra.mxu0 %v1540
    %1583 = vmatpush.msra.mxu0 %v1537
    %1584 = vmatpush.msra.mxu0 %v1534
    %1585 = vmatpush.msra.mxu0 %v1531
    %1586 = vmatpush.msra.mxu0 %v1528
    %1587 = vmatpush.msra.mxu0 %v1525
    %1588 = vmatpush.msra.mxu0 %v1522
    %1589 = vmatpush.msra.mxu0 %v1519
    %1590 = vmatmul.f32.gmra.mxu0 0.0
    %v1591 = vpop.f32.mrf.mxu0
    %v1592 = vadd.f32 0.0, %v1591
    %1593 = vdwg.mxu0
    %1594 = vmatpush.msra.mxu0 %v1565
    %1595 = vmatpush.msra.mxu0 %v1562
    %1596 = vmatpush.msra.mxu0 %v1559
    %1597 = vmatpush.msra.mxu0 %v1556
    %1598 = vmatpush.msra.mxu0 %v1553
    %1599 = vmatpush.msra.mxu0 %v1550
    %1600 = vmatpush.msra.mxu0 %v1547
    %1601 = vmatpush.msra.mxu0 %v1544
    %1602 = vmatpush.msra.mxu0 %v1541
    %1603 = vmatpush.msra.mxu0 %v1538
    %1604 = vmatpush.msra.mxu0 %v1535
    %1605 = vmatpush.msra.mxu0 %v1532
    %1606 = vmatpush.msra.mxu0 %v1529
    %1607 = vmatpush.msra.mxu0 %v1526
    %1608 = vmatpush.msra.mxu0 %v1523
    %1609 = vmatpush.msra.mxu0 %v1520
    %1610 = vmatmul.f32.gmra.mxu0 0.0
    %v1611 = vpop.f32.mrf.mxu0
    %v1612 = vadd.f32 0.0, %v1611
    %1613 = vdwg.mxu0
    %1614 = vmatpush.msra.mxu0 %v1566
    %1615 = vmatpush.msra.mxu0 %v1563
    %1616 = vmatpush.msra.mxu0 %v1560
    %1617 = vmatpush.msra.mxu0 %v1557
    %1618 = vmatpush.msra.mxu0 %v1554
    %1619 = vmatpush.msra.mxu0 %v1551
    %1620 = vmatpush.msra.mxu0 %v1548
    %1621 = vmatpush.msra.mxu0 %v1545
    %1622 = vmatpush.msra.mxu0 %v1542
    %1623 = vmatpush.msra.mxu0 %v1539
    %1624 = vmatpush.msra.mxu0 %v1536
    %1625 = vmatpush.msra.mxu0 %v1533
    %1626 = vmatpush.msra.mxu0 %v1530
    %1627 = vmatpush.msra.mxu0 %v1527
    %1628 = vmatpush.msra.mxu0 %v1524
    %1629 = vmatpush.msra.mxu0 %v1521
    %1630 = vmatmul.f32.gmra.mxu0 0.0
    %v1631 = vpop.f32.mrf.mxu0
    %v1632 = vadd.f32 0.0, %v1631
    %1633 = vdwg.mxu0
    %v1634 = vadd.f32 %v1571, %v1592
    %v1635 = vxor.u32 %v1634, 2147483648
    %v1636 = vmul.f32 %v1635, 1.442695
    %v1637 = vpow.pop %v1636
    %v1638 = vadd.f32 %v1637, 1.0
    %v1639 = vrcp.pop %v1638
    %v1640 = vmul.f32 %v1638, %v1639
    %v1641 = vsub.f32 1.0, %v1640
    %v1642 = vmul.f32 %v1639, %v1641
    %v1643 = vadd.f32 %v1639, %v1642
    %vm1644 = vweird.f32 %v1638
    %vm1645 = vweird.f32 %v1639
    %vm1646 = vmor %vm1644, %vm1645
    %v1647 = vsel %vm1646, %v1639, %v1643
    %v1648 = vand.u32 2147483647, %v1638
    %vm1649 = vcmp.eq.f32.partialorder %v1648, 8.507059e+37
    %v1650 = vand.u32 %v1638, 2147483648
    %v1651 = vor.u32 1.1754944e-38, %v1650
    %v1652 = vsel %vm1649, %v1651, %v1647
    %v1653 = vmul.f32 1.0, %v1652
    %v1654 = vadd.f32 %v1572, %v1612
    %v1655 = vxor.u32 %v1654, 2147483648
    %v1656 = vmul.f32 %v1655, 1.442695
    %v1657 = vpow.pop %v1656
    %v1658 = vadd.f32 %v1657, 1.0
    %v1659 = vrcp.pop %v1658
    %v1660 = vmul.f32 %v1658, %v1659
    %v1661 = vsub.f32 1.0, %v1660
    %v1662 = vmul.f32 %v1659, %v1661
    %v1663 = vadd.f32 %v1659, %v1662
    %vm1664 = vweird.f32 %v1658
    %vm1665 = vweird.f32 %v1659
    %vm1666 = vmor %vm1664, %vm1665
    %v1667 = vsel %vm1666, %v1659, %v1663
    %v1668 = vand.u32 2147483647, %v1658
    %vm1669 = vcmp.eq.f32.partialorder %v1668, 8.507059e+37
    %v1670 = vand.u32 %v1658, 2147483648
    %v1671 = vor.u32 1.1754944e-38, %v1670
    %v1672 = vsel %vm1669, %v1671, %v1667
    %v1673 = vmul.f32 1.0, %v1672
    %v1674 = vadd.f32 %v1632, %v1569
    %v1675 = vmul.f32 %v1653, %v1674
    %v1676 = vadd.f32 %v1573, %v1675
    %v1677 = vtanh.pop %v1676
    %v1678 = vsub.f32 1.0, %v1673
    %v1679 = vmul.f32 %v1678, %v1677
    %v1680 = vmul.f32 %v1673, 0.0
    %v1681 = vadd.f32 %v1679, %v1680
    %1682 = vst [vmem:[%s11] sm:$0xff] %v1681
    %v1683 = vld [vmem:[%s498] sm:$0xff]
    %v1684 = vld [vmem:[%s498 + $0x8] sm:$0xff]
    %v1685 = vld [vmem:[%s498 + $0x10] sm:$0xff]
    %1686 = vmatpush.msra.mxu0 %v1564
    %1687 = vmatpush.msra.mxu0 %v1561
    %1688 = vmatpush.msra.mxu0 %v1558
    %1689 = vmatpush.msra.mxu0 %v1555
    %1690 = vmatpush.msra.mxu0 %v1552
    %1691 = vmatpush.msra.mxu0 %v1549
    %1692 = vmatpush.msra.mxu0 %v1546
    %1693 = vmatpush.msra.mxu0 %v1543
    %1694 = vmatpush.msra.mxu0 %v1540
    %1695 = vmatpush.msra.mxu0 %v1537
    %1696 = vmatpush.msra.mxu0 %v1534
    %1697 = vmatpush.msra.mxu0 %v1531
    %1698 = vmatpush.msra.mxu0 %v1528
    %1699 = vmatpush.msra.mxu0 %v1525
    %1700 = vmatpush.msra.mxu0 %v1522
    %1701 = vmatpush.msra.mxu0 %v1519
    %1702 = vmatmul.f32.gmra.mxu0 %v1681
    %v1703 = vpop.f32.mrf.mxu0
    %v1704 = vadd.f32 0.0, %v1703
    %1705 = vdwg.mxu0
    %1706 = vmatpush.msra.mxu0 %v1565
    %1707 = vmatpush.msra.mxu0 %v1562
    %1708 = vmatpush.msra.mxu0 %v1559
    %1709 = vmatpush.msra.mxu0 %v1556
    %1710 = vmatpush.msra.mxu0 %v1553
    %1711 = vmatpush.msra.mxu0 %v1550
    %1712 = vmatpush.msra.mxu0 %v1547
    %1713 = vmatpush.msra.mxu0 %v1544
    %1714 = vmatpush.msra.mxu0 %v1541
    %1715 = vmatpush.msra.mxu0 %v1538
    %1716 = vmatpush.msra.mxu0 %v1535
    %1717 = vmatpush.msra.mxu0 %v1532
    %1718 = vmatpush.msra.mxu0 %v1529
    %1719 = vmatpush.msra.mxu0 %v1526
    %1720 = vmatpush.msra.mxu0 %v1523
    %1721 = vmatpush.msra.mxu0 %v1520
    %1722 = vmatmul.f32.gmra.mxu0 %v1681
    %v1723 = vpop.f32.mrf.mxu0
    %v1724 = vadd.f32 0.0, %v1723
    %1725 = vdwg.mxu0
    %1726 = vmatpush.msra.mxu0 %v1566
    %1727 = vmatpush.msra.mxu0 %v1563
    %1728 = vmatpush.msra.mxu0 %v1560
    %1729 = vmatpush.msra.mxu0 %v1557
    %1730 = vmatpush.msra.mxu0 %v1554
    %1731 = vmatpush.msra.mxu0 %v1551
    %1732 = vmatpush.msra.mxu0 %v1548
    %1733 = vmatpush.msra.mxu0 %v1545
    %1734 = vmatpush.msra.mxu0 %v1542
    %1735 = vmatpush.msra.mxu0 %v1539
    %1736 = vmatpush.msra.mxu0 %v1536
    %1737 = vmatpush.msra.mxu0 %v1533
    %1738 = vmatpush.msra.mxu0 %v1530
    %1739 = vmatpush.msra.mxu0 %v1527
    %1740 = vmatpush.msra.mxu0 %v1524
    %1741 = vmatpush.msra.mxu0 %v1521
    %1742 = vmatmul.f32.gmra.mxu0 %v1681
    %v1743 = vpop.f32.mrf.mxu0
    %v1744 = vadd.f32 0.0, %v1743
    %1745 = vdwg.mxu0
    %v1746 = vadd.f32 %v1683, %v1704
    %v1747 = vxor.u32 %v1746, 2147483648
    %v1748 = vmul.f32 %v1747, 1.442695
    %v1749 = vpow.pop %v1748
    %v1750 = vadd.f32 %v1749, 1.0
    %v1751 = vrcp.pop %v1750
    %v1752 = vmul.f32 %v1750, %v1751
    %v1753 = vsub.f32 1.0, %v1752
    %v1754 = vmul.f32 %v1751, %v1753
    %v1755 = vadd.f32 %v1751, %v1754
    %vm1756 = vweird.f32 %v1750
    %vm1757 = vweird.f32 %v1751
    %vm1758 = vmor %vm1756, %vm1757
    %v1759 = vsel %vm1758, %v1751, %v1755
    %v1760 = vand.u32 2147483647, %v1750
    %vm1761 = vcmp.eq.f32.partialorder %v1760, 8.507059e+37
    %v1762 = vand.u32 %v1750, 2147483648
    %v1763 = vor.u32 1.1754944e-38, %v1762
    %v1764 = vsel %vm1761, %v1763, %v1759
    %v1765 = vmul.f32 1.0, %v1764
    %v1766 = vadd.f32 %v1684, %v1724
    %v1767 = vxor.u32 %v1766, 2147483648
    %v1768 = vmul.f32 %v1767, 1.442695
    %v1769 = vpow.pop %v1768
    %v1770 = vadd.f32 %v1769, 1.0
    %v1771 = vrcp.pop %v1770
    %v1772 = vmul.f32 %v1770, %v1771
    %v1773 = vsub.f32 1.0, %v1772
    %v1774 = vmul.f32 %v1771, %v1773
    %v1775 = vadd.f32 %v1771, %v1774
    %vm1776 = vweird.f32 %v1770
    %vm1777 = vweird.f32 %v1771
    %vm1778 = vmor %vm1776, %vm1777
    %v1779 = vsel %vm1778, %v1771, %v1775
    %v1780 = vand.u32 2147483647, %v1770
    %vm1781 = vcmp.eq.f32.partialorder %v1780, 8.507059e+37
    %v1782 = vand.u32 %v1770, 2147483648
    %v1783 = vor.u32 1.1754944e-38, %v1782
    %v1784 = vsel %vm1781, %v1783, %v1779
    %v1785 = vmul.f32 1.0, %v1784
    %v1786 = vadd.f32 %v1744, %v1569
    %v1787 = vmul.f32 %v1765, %v1786
    %v1788 = vadd.f32 %v1685, %v1787
    %v1789 = vtanh.pop %v1788
    %v1790 = vsub.f32 1.0, %v1785
    %v1791 = vmul.f32 %v1790, %v1789
    %v1792 = vmul.f32 %v1785, %v1681
    %v1793 = vadd.f32 %v1791, %v1792
    %s1794 = scalar_lea.vmem %s11, 8
    %1795 = vst [vmem:[%s1794] sm:$0xff] %v1793
    %v1796 = vld [vmem:[%s614] sm:$0xff]
    %v1797 = vld [vmem:[%s614 + $0x8] sm:$0xff]
    %v1798 = vld [vmem:[%s614 + $0x10] sm:$0xff]
    %1799 = vmatpush.msra.mxu0 %v1564
    %1800 = vmatpush.msra.mxu0 %v1561
    %1801 = vmatpush.msra.mxu0 %v1558
    %1802 = vmatpush.msra.mxu0 %v1555
    %1803 = vmatpush.msra.mxu0 %v1552
    %1804 = vmatpush.msra.mxu0 %v1549
    %1805 = vmatpush.msra.mxu0 %v1546
    %1806 = vmatpush.msra.mxu0 %v1543
    %1807 = vmatpush.msra.mxu0 %v1540
    %1808 = vmatpush.msra.mxu0 %v1537
    %1809 = vmatpush.msra.mxu0 %v1534
    %1810 = vmatpush.msra.mxu0 %v1531
    %1811 = vmatpush.msra.mxu0 %v1528
    %1812 = vmatpush.msra.mxu0 %v1525
    %1813 = vmatpush.msra.mxu0 %v1522
    %1814 = vmatpush.msra.mxu0 %v1519
    %1815 = vmatmul.f32.gmra.mxu0 %v1793
    %v1816 = vpop.f32.mrf.mxu0
    %v1817 = vadd.f32 0.0, %v1816
    %1818 = vdwg.mxu0
    %1819 = vmatpush.msra.mxu0 %v1565
    %1820 = vmatpush.msra.mxu0 %v1562
    %1821 = vmatpush.msra.mxu0 %v1559
    %1822 = vmatpush.msra.mxu0 %v1556
    %1823 = vmatpush.msra.mxu0 %v1553
    %1824 = vmatpush.msra.mxu0 %v1550
    %1825 = vmatpush.msra.mxu0 %v1547
    %1826 = vmatpush.msra.mxu0 %v1544
    %1827 = vmatpush.msra.mxu0 %v1541
    %1828 = vmatpush.msra.mxu0 %v1538
    %1829 = vmatpush.msra.mxu0 %v1535
    %1830 = vmatpush.msra.mxu0 %v1532
    %1831 = vmatpush.msra.mxu0 %v1529
    %1832 = vmatpush.msra.mxu0 %v1526
    %1833 = vmatpush.msra.mxu0 %v1523
    %1834 = vmatpush.msra.mxu0 %v1520
    %1835 = vmatmul.f32.gmra.mxu0 %v1793
    %v1836 = vpop.f32.mrf.mxu0
    %v1837 = vadd.f32 0.0, %v1836
    %1838 = vdwg.mxu0
    %1839 = vmatpush.msra.mxu0 %v1566
    %1840 = vmatpush.msra.mxu0 %v1563
    %1841 = vmatpush.msra.mxu0 %v1560
    %1842 = vmatpush.msra.mxu0 %v1557
    %1843 = vmatpush.msra.mxu0 %v1554
    %1844 = vmatpush.msra.mxu0 %v1551
    %1845 = vmatpush.msra.mxu0 %v1548
    %1846 = vmatpush.msra.mxu0 %v1545
    %1847 = vmatpush.msra.mxu0 %v1542
    %1848 = vmatpush.msra.mxu0 %v1539
    %1849 = vmatpush.msra.mxu0 %v1536
    %1850 = vmatpush.msra.mxu0 %v1533
    %1851 = vmatpush.msra.mxu0 %v1530
    %1852 = vmatpush.msra.mxu0 %v1527
    %1853 = vmatpush.msra.mxu0 %v1524
    %1854 = vmatpush.msra.mxu0 %v1521
    %1855 = vmatmul.f32.gmra.mxu0 %v1793
    %v1856 = vpop.f32.mrf.mxu0
    %v1857 = vadd.f32 0.0, %v1856
    %1858 = vdwg.mxu0
    %v1859 = vadd.f32 %v1796, %v1817
    %v1860 = vxor.u32 %v1859, 2147483648
    %v1861 = vmul.f32 %v1860, 1.442695
    %v1862 = vpow.pop %v1861
    %v1863 = vadd.f32 %v1862, 1.0
    %v1864 = vrcp.pop %v1863
    %v1865 = vmul.f32 %v1863, %v1864
    %v1866 = vsub.f32 1.0, %v1865
    %v1867 = vmul.f32 %v1864, %v1866
    %v1868 = vadd.f32 %v1864, %v1867
    %vm1869 = vweird.f32 %v1863
    %vm1870 = vweird.f32 %v1864
    %vm1871 = vmor %vm1869, %vm1870
    %v1872 = vsel %vm1871, %v1864, %v1868
    %v1873 = vand.u32 2147483647, %v1863
    %vm1874 = vcmp.eq.f32.partialorder %v1873, 8.507059e+37
    %v1875 = vand.u32 %v1863, 2147483648
    %v1876 = vor.u32 1.1754944e-38, %v1875
    %v1877 = vsel %vm1874, %v1876, %v1872
    %v1878 = vmul.f32 1.0, %v1877
    %v1879 = vadd.f32 %v1797, %v1837
    %v1880 = vxor.u32 %v1879, 2147483648
    %v1881 = vmul.f32 %v1880, 1.442695
    %v1882 = vpow.pop %v1881
    %v1883 = vadd.f32 %v1882, 1.0
    %v1884 = vrcp.pop %v1883
    %v1885 = vmul.f32 %v1883, %v1884
    %v1886 = vsub.f32 1.0, %v1885
    %v1887 = vmul.f32 %v1884, %v1886
    %v1888 = vadd.f32 %v1884, %v1887
    %vm1889 = vweird.f32 %v1883
    %vm1890 = vweird.f32 %v1884
    %vm1891 = vmor %vm1889, %vm1890
    %v1892 = vsel %vm1891, %v1884, %v1888
    %v1893 = vand.u32 2147483647, %v1883
    %vm1894 = vcmp.eq.f32.partialorder %v1893, 8.507059e+37
    %v1895 = vand.u32 %v1883, 2147483648
    %v1896 = vor.u32 1.1754944e-38, %v1895
    %v1897 = vsel %vm1894, %v1896, %v1892
    %v1898 = vmul.f32 1.0, %v1897
    %v1899 = vadd.f32 %v1857, %v1569
    %v1900 = vmul.f32 %v1878, %v1899
    %v1901 = vadd.f32 %v1798, %v1900
    %v1902 = vtanh.pop %v1901
    %v1903 = vsub.f32 1.0, %v1898
    %v1904 = vmul.f32 %v1903, %v1902
    %v1905 = vmul.f32 %v1898, %v1793
    %v1906 = vadd.f32 %v1904, %v1905
    %s1907 = scalar_lea.vmem %s11, 16
    %1908 = vst [vmem:[%s1907] sm:$0xff] %v1906
    %v1909 = vld [vmem:[%s730] sm:$0xff]
    %v1910 = vld [vmem:[%s730 + $0x8] sm:$0xff]
    %v1911 = vld [vmem:[%s730 + $0x10] sm:$0xff]
    %1912 = vmatpush.msra.mxu0 %v1564
    %1913 = vmatpush.msra.mxu0 %v1561
    %1914 = vmatpush.msra.mxu0 %v1558
    %1915 = vmatpush.msra.mxu0 %v1555
    %1916 = vmatpush.msra.mxu0 %v1552
    %1917 = vmatpush.msra.mxu0 %v1549
    %1918 = vmatpush.msra.mxu0 %v1546
    %1919 = vmatpush.msra.mxu0 %v1543
    %1920 = vmatpush.msra.mxu0 %v1540
    %1921 = vmatpush.msra.mxu0 %v1537
    %1922 = vmatpush.msra.mxu0 %v1534
    %1923 = vmatpush.msra.mxu0 %v1531
    %1924 = vmatpush.msra.mxu0 %v1528
    %1925 = vmatpush.msra.mxu0 %v1525
    %1926 = vmatpush.msra.mxu0 %v1522
    %1927 = vmatpush.msra.mxu0 %v1519
    %1928 = vmatmul.f32.gmra.mxu0 %v1906
    %v1929 = vpop.f32.mrf.mxu0
    %v1930 = vadd.f32 0.0, %v1929
    %1931 = vdwg.mxu0
    %1932 = vmatpush.msra.mxu0 %v1565
    %1933 = vmatpush.msra.mxu0 %v1562
    %1934 = vmatpush.msra.mxu0 %v1559
    %1935 = vmatpush.msra.mxu0 %v1556
    %1936 = vmatpush.msra.mxu0 %v1553
    %1937 = vmatpush.msra.mxu0 %v1550
    %1938 = vmatpush.msra.mxu0 %v1547
    %1939 = vmatpush.msra.mxu0 %v1544
    %1940 = vmatpush.msra.mxu0 %v1541
    %1941 = vmatpush.msra.mxu0 %v1538
    %1942 = vmatpush.msra.mxu0 %v1535
    %1943 = vmatpush.msra.mxu0 %v1532
    %1944 = vmatpush.msra.mxu0 %v1529
    %1945 = vmatpush.msra.mxu0 %v1526
    %1946 = vmatpush.msra.mxu0 %v1523
    %1947 = vmatpush.msra.mxu0 %v1520
    %1948 = vmatmul.f32.gmra.mxu0 %v1906
    %v1949 = vpop.f32.mrf.mxu0
    %v1950 = vadd.f32 0.0, %v1949
    %1951 = vdwg.mxu0
    %1952 = vmatpush.msra.mxu0 %v1566
    %1953 = vmatpush.msra.mxu0 %v1563
    %1954 = vmatpush.msra.mxu0 %v1560
    %1955 = vmatpush.msra.mxu0 %v1557
    %1956 = vmatpush.msra.mxu0 %v1554
    %1957 = vmatpush.msra.mxu0 %v1551
    %1958 = vmatpush.msra.mxu0 %v1548
    %1959 = vmatpush.msra.mxu0 %v1545
    %1960 = vmatpush.msra.mxu0 %v1542
    %1961 = vmatpush.msra.mxu0 %v1539
    %1962 = vmatpush.msra.mxu0 %v1536
    %1963 = vmatpush.msra.mxu0 %v1533
    %1964 = vmatpush.msra.mxu0 %v1530
    %1965 = vmatpush.msra.mxu0 %v1527
    %1966 = vmatpush.msra.mxu0 %v1524
    %1967 = vmatpush.msra.mxu0 %v1521
    %1968 = vmatmul.f32.gmra.mxu0 %v1906
    %v1969 = vpop.f32.mrf.mxu0
    %v1970 = vadd.f32 0.0, %v1969
    %1971 = vdwg.mxu0
    %v1972 = vadd.f32 %v1909, %v1930
    %v1973 = vxor.u32 %v1972, 2147483648
    %v1974 = vmul.f32 %v1973, 1.442695
    %v1975 = vpow.pop %v1974
    %v1976 = vadd.f32 %v1975, 1.0
    %v1977 = vrcp.pop %v1976
    %v1978 = vmul.f32 %v1976, %v1977
    %v1979 = vsub.f32 1.0, %v1978
    %v1980 = vmul.f32 %v1977, %v1979
    %v1981 = vadd.f32 %v1977, %v1980
    %vm1982 = vweird.f32 %v1976
    %vm1983 = vweird.f32 %v1977
    %vm1984 = vmor %vm1982, %vm1983
    %v1985 = vsel %vm1984, %v1977, %v1981
    %v1986 = vand.u32 2147483647, %v1976
    %vm1987 = vcmp.eq.f32.partialorder %v1986, 8.507059e+37
    %v1988 = vand.u32 %v1976, 2147483648
    %v1989 = vor.u32 1.1754944e-38, %v1988
    %v1990 = vsel %vm1987, %v1989, %v1985
    %v1991 = vmul.f32 1.0, %v1990
    %v1992 = vadd.f32 %v1910, %v1950
    %v1993 = vxor.u32 %v1992, 2147483648
    %v1994 = vmul.f32 %v1993, 1.442695
    %v1995 = vpow.pop %v1994
    %v1996 = vadd.f32 %v1995, 1.0
    %v1997 = vrcp.pop %v1996
    %v1998 = vmul.f32 %v1996, %v1997
    %v1999 = vsub.f32 1.0, %v1998
    %v2000 = vmul.f32 %v1997, %v1999
    %v2001 = vadd.f32 %v1997, %v2000
    %vm2002 = vweird.f32 %v1996
    %vm2003 = vweird.f32 %v1997
    %vm2004 = vmor %vm2002, %vm2003
    %v2005 = vsel %vm2004, %v1997, %v2001
    %v2006 = vand.u32 2147483647, %v1996
    %vm2007 = vcmp.eq.f32.partialorder %v2006, 8.507059e+37
    %v2008 = vand.u32 %v1996, 2147483648
    %v2009 = vor.u32 1.1754944e-38, %v2008
    %v2010 = vsel %vm2007, %v2009, %v2005
    %v2011 = vmul.f32 1.0, %v2010
    %v2012 = vadd.f32 %v1970, %v1569
    %v2013 = vmul.f32 %v1991, %v2012
    %v2014 = vadd.f32 %v1911, %v2013
    %v2015 = vtanh.pop %v2014
    %v2016 = vsub.f32 1.0, %v2011
    %v2017 = vmul.f32 %v2016, %v2015
    %v2018 = vmul.f32 %v2011, %v1906
    %v2019 = vadd.f32 %v2017, %v2018
    %s2020 = scalar_lea.vmem %s11, 24
    %2021 = vst [vmem:[%s2020] sm:$0xff] %v2019
    %v2022 = vld [vmem:[%s846] sm:$0xff]
    %v2023 = vld [vmem:[%s846 + $0x8] sm:$0xff]
    %v2024 = vld [vmem:[%s846 + $0x10] sm:$0xff]
    %2025 = vmatpush.msra.mxu0 %v1564
    %2026 = vmatpush.msra.mxu0 %v1561
    %2027 = vmatpush.msra.mxu0 %v1558
    %2028 = vmatpush.msra.mxu0 %v1555
    %2029 = vmatpush.msra.mxu0 %v1552
    %2030 = vmatpush.msra.mxu0 %v1549
    %2031 = vmatpush.msra.mxu0 %v1546
    %2032 = vmatpush.msra.mxu0 %v1543
    %2033 = vmatpush.msra.mxu0 %v1540
    %2034 = vmatpush.msra.mxu0 %v1537
    %2035 = vmatpush.msra.mxu0 %v1534
    %2036 = vmatpush.msra.mxu0 %v1531
    %2037 = vmatpush.msra.mxu0 %v1528
    %2038 = vmatpush.msra.mxu0 %v1525
    %2039 = vmatpush.msra.mxu0 %v1522
    %2040 = vmatpush.msra.mxu0 %v1519
    %2041 = vmatmul.f32.gmra.mxu0 %v2019
    %v2042 = vpop.f32.mrf.mxu0
    %v2043 = vadd.f32 0.0, %v2042
    %2044 = vdwg.mxu0
    %2045 = vmatpush.msra.mxu0 %v1565
    %2046 = vmatpush.msra.mxu0 %v1562
    %2047 = vmatpush.msra.mxu0 %v1559
    %2048 = vmatpush.msra.mxu0 %v1556
    %2049 = vmatpush.msra.mxu0 %v1553
    %2050 = vmatpush.msra.mxu0 %v1550
    %2051 = vmatpush.msra.mxu0 %v1547
    %2052 = vmatpush.msra.mxu0 %v1544
    %2053 = vmatpush.msra.mxu0 %v1541
    %2054 = vmatpush.msra.mxu0 %v1538
    %2055 = vmatpush.msra.mxu0 %v1535
    %2056 = vmatpush.msra.mxu0 %v1532
    %2057 = vmatpush.msra.mxu0 %v1529
    %2058 = vmatpush.msra.mxu0 %v1526
    %2059 = vmatpush.msra.mxu0 %v1523
    %2060 = vmatpush.msra.mxu0 %v1520
    %2061 = vmatmul.f32.gmra.mxu0 %v2019
    %v2062 = vpop.f32.mrf.mxu0
    %v2063 = vadd.f32 0.0, %v2062
    %2064 = vdwg.mxu0
    %2065 = vmatpush.msra.mxu0 %v1566
    %2066 = vmatpush.msra.mxu0 %v1563
    %2067 = vmatpush.msra.mxu0 %v1560
    %2068 = vmatpush.msra.mxu0 %v1557
    %2069 = vmatpush.msra.mxu0 %v1554
    %2070 = vmatpush.msra.mxu0 %v1551
    %2071 = vmatpush.msra.mxu0 %v1548
    %2072 = vmatpush.msra.mxu0 %v1545
    %2073 = vmatpush.msra.mxu0 %v1542
    %2074 = vmatpush.msra.mxu0 %v1539
    %2075 = vmatpush.msra.mxu0 %v1536
    %2076 = vmatpush.msra.mxu0 %v1533
    %2077 = vmatpush.msra.mxu0 %v1530
    %2078 = vmatpush.msra.mxu0 %v1527
    %2079 = vmatpush.msra.mxu0 %v1524
    %2080 = vmatpush.msra.mxu0 %v1521
    %2081 = vmatmul.f32.gmra.mxu0 %v2019
    %v2082 = vpop.f32.mrf.mxu0
    %v2083 = vadd.f32 0.0, %v2082
    %2084 = vdwg.mxu0
    %v2085 = vadd.f32 %v2022, %v2043
    %v2086 = vxor.u32 %v2085, 2147483648
    %v2087 = vmul.f32 %v2086, 1.442695
    %v2088 = vpow.pop %v2087
    %v2089 = vadd.f32 %v2088, 1.0
    %v2090 = vrcp.pop %v2089
    %v2091 = vmul.f32 %v2089, %v2090
    %v2092 = vsub.f32 1.0, %v2091
    %v2093 = vmul.f32 %v2090, %v2092
    %v2094 = vadd.f32 %v2090, %v2093
    %vm2095 = vweird.f32 %v2089
    %vm2096 = vweird.f32 %v2090
    %vm2097 = vmor %vm2095, %vm2096
    %v2098 = vsel %vm2097, %v2090, %v2094
    %v2099 = vand.u32 2147483647, %v2089
    %vm2100 = vcmp.eq.f32.partialorder %v2099, 8.507059e+37
    %v2101 = vand.u32 %v2089, 2147483648
    %v2102 = vor.u32 1.1754944e-38, %v2101
    %v2103 = vsel %vm2100, %v2102, %v2098
    %v2104 = vmul.f32 1.0, %v2103
    %v2105 = vadd.f32 %v2023, %v2063
    %v2106 = vxor.u32 %v2105, 2147483648
    %v2107 = vmul.f32 %v2106, 1.442695
    %v2108 = vpow.pop %v2107
    %v2109 = vadd.f32 %v2108, 1.0
    %v2110 = vrcp.pop %v2109
    %v2111 = vmul.f32 %v2109, %v2110
    %v2112 = vsub.f32 1.0, %v2111
    %v2113 = vmul.f32 %v2110, %v2112
    %v2114 = vadd.f32 %v2110, %v2113
    %vm2115 = vweird.f32 %v2109
    %vm2116 = vweird.f32 %v2110
    %vm2117 = vmor %vm2115, %vm2116
    %v2118 = vsel %vm2117, %v2110, %v2114
    %v2119 = vand.u32 2147483647, %v2109
    %vm2120 = vcmp.eq.f32.partialorder %v2119, 8.507059e+37
    %v2121 = vand.u32 %v2109, 2147483648
    %v2122 = vor.u32 1.1754944e-38, %v2121
    %v2123 = vsel %vm2120, %v2122, %v2118
    %v2124 = vmul.f32 1.0, %v2123
    %v2125 = vadd.f32 %v2083, %v1569
    %v2126 = vmul.f32 %v2104, %v2125
    %v2127 = vadd.f32 %v2024, %v2126
    %v2128 = vtanh.pop %v2127
    %v2129 = vsub.f32 1.0, %v2124
    %v2130 = vmul.f32 %v2129, %v2128
    %v2131 = vmul.f32 %v2124, %v2019
    %v2132 = vadd.f32 %v2130, %v2131
    %s2133 = scalar_lea.vmem %s11, 32
    %2134 = vst [vmem:[%s2133] sm:$0xff] %v2132
    %v2135 = vld [vmem:[%s962] sm:$0xff]
    %v2136 = vld [vmem:[%s962 + $0x8] sm:$0xff]
    %v2137 = vld [vmem:[%s962 + $0x10] sm:$0xff]
    %2138 = vmatpush.msra.mxu0 %v1564
    %2139 = vmatpush.msra.mxu0 %v1561
    %2140 = vmatpush.msra.mxu0 %v1558
    %2141 = vmatpush.msra.mxu0 %v1555
    %2142 = vmatpush.msra.mxu0 %v1552
    %2143 = vmatpush.msra.mxu0 %v1549
    %2144 = vmatpush.msra.mxu0 %v1546
    %2145 = vmatpush.msra.mxu0 %v1543
    %2146 = vmatpush.msra.mxu0 %v1540
    %2147 = vmatpush.msra.mxu0 %v1537
    %2148 = vmatpush.msra.mxu0 %v1534
    %2149 = vmatpush.msra.mxu0 %v1531
    %2150 = vmatpush.msra.mxu0 %v1528
    %2151 = vmatpush.msra.mxu0 %v1525
    %2152 = vmatpush.msra.mxu0 %v1522
    %2153 = vmatpush.msra.mxu0 %v1519
    %2154 = vmatmul.f32.gmra.mxu0 %v2132
    %v2155 = vpop.f32.mrf.mxu0
    %v2156 = vadd.f32 0.0, %v2155
    %2157 = vdwg.mxu0
    %2158 = vmatpush.msra.mxu0 %v1565
    %2159 = vmatpush.msra.mxu0 %v1562
    %2160 = vmatpush.msra.mxu0 %v1559
    %2161 = vmatpush.msra.mxu0 %v1556
    %2162 = vmatpush.msra.mxu0 %v1553
    %2163 = vmatpush.msra.mxu0 %v1550
    %2164 = vmatpush.msra.mxu0 %v1547
    %2165 = vmatpush.msra.mxu0 %v1544
    %2166 = vmatpush.msra.mxu0 %v1541
    %2167 = vmatpush.msra.mxu0 %v1538
    %2168 = vmatpush.msra.mxu0 %v1535
    %2169 = vmatpush.msra.mxu0 %v1532
    %2170 = vmatpush.msra.mxu0 %v1529
    %2171 = vmatpush.msra.mxu0 %v1526
    %2172 = vmatpush.msra.mxu0 %v1523
    %2173 = vmatpush.msra.mxu0 %v1520
    %2174 = vmatmul.f32.gmra.mxu0 %v2132
    %v2175 = vpop.f32.mrf.mxu0
    %v2176 = vadd.f32 0.0, %v2175
    %2177 = vdwg.mxu0
    %2178 = vmatpush.msra.mxu0 %v1566
    %2179 = vmatpush.msra.mxu0 %v1563
    %2180 = vmatpush.msra.mxu0 %v1560
    %2181 = vmatpush.msra.mxu0 %v1557
    %2182 = vmatpush.msra.mxu0 %v1554
    %2183 = vmatpush.msra.mxu0 %v1551
    %2184 = vmatpush.msra.mxu0 %v1548
    %2185 = vmatpush.msra.mxu0 %v1545
    %2186 = vmatpush.msra.mxu0 %v1542
    %2187 = vmatpush.msra.mxu0 %v1539
    %2188 = vmatpush.msra.mxu0 %v1536
    %2189 = vmatpush.msra.mxu0 %v1533
    %2190 = vmatpush.msra.mxu0 %v1530
    %2191 = vmatpush.msra.mxu0 %v1527
    %2192 = vmatpush.msra.mxu0 %v1524
    %2193 = vmatpush.msra.mxu0 %v1521
    %2194 = vmatmul.f32.gmra.mxu0 %v2132
    %v2195 = vpop.f32.mrf.mxu0
    %v2196 = vadd.f32 0.0, %v2195
    %2197 = vdwg.mxu0
    %v2198 = vadd.f32 %v2135, %v2156
    %v2199 = vxor.u32 %v2198, 2147483648
    %v2200 = vmul.f32 %v2199, 1.442695
    %v2201 = vpow.pop %v2200
    %v2202 = vadd.f32 %v2201, 1.0
    %v2203 = vrcp.pop %v2202
    %v2204 = vmul.f32 %v2202, %v2203
    %v2205 = vsub.f32 1.0, %v2204
    %v2206 = vmul.f32 %v2203, %v2205
    %v2207 = vadd.f32 %v2203, %v2206
    %vm2208 = vweird.f32 %v2202
    %vm2209 = vweird.f32 %v2203
    %vm2210 = vmor %vm2208, %vm2209
    %v2211 = vsel %vm2210, %v2203, %v2207
    %v2212 = vand.u32 2147483647, %v2202
    %vm2213 = vcmp.eq.f32.partialorder %v2212, 8.507059e+37
    %v2214 = vand.u32 %v2202, 2147483648
    %v2215 = vor.u32 1.1754944e-38, %v2214
    %v2216 = vsel %vm2213, %v2215, %v2211
    %v2217 = vmul.f32 1.0, %v2216
    %v2218 = vadd.f32 %v2136, %v2176
    %v2219 = vxor.u32 %v2218, 2147483648
    %v2220 = vmul.f32 %v2219, 1.442695
    %v2221 = vpow.pop %v2220
    %v2222 = vadd.f32 %v2221, 1.0
    %v2223 = vrcp.pop %v2222
    %v2224 = vmul.f32 %v2222, %v2223
    %v2225 = vsub.f32 1.0, %v2224
    %v2226 = vmul.f32 %v2223, %v2225
    %v2227 = vadd.f32 %v2223, %v2226
    %vm2228 = vweird.f32 %v2222
    %vm2229 = vweird.f32 %v2223
    %vm2230 = vmor %vm2228, %vm2229
    %v2231 = vsel %vm2230, %v2223, %v2227
    %v2232 = vand.u32 2147483647, %v2222
    %vm2233 = vcmp.eq.f32.partialorder %v2232, 8.507059e+37
    %v2234 = vand.u32 %v2222, 2147483648
    %v2235 = vor.u32 1.1754944e-38, %v2234
    %v2236 = vsel %vm2233, %v2235, %v2231
    %v2237 = vmul.f32 1.0, %v2236
    %v2238 = vadd.f32 %v2196, %v1569
    %v2239 = vmul.f32 %v2217, %v2238
    %v2240 = vadd.f32 %v2137, %v2239
    %v2241 = vtanh.pop %v2240
    %v2242 = vsub.f32 1.0, %v2237
    %v2243 = vmul.f32 %v2242, %v2241
    %v2244 = vmul.f32 %v2237, %v2132
    %v2245 = vadd.f32 %v2243, %v2244
    %s2246 = scalar_lea.vmem %s11, 40
    %2247 = vst [vmem:[%s2246] sm:$0xff] %v2245
    %v2248 = vld [vmem:[%s1078] sm:$0xff]
    %v2249 = vld [vmem:[%s1078 + $0x8] sm:$0xff]
    %v2250 = vld [vmem:[%s1078 + $0x10] sm:$0xff]
    %2251 = vmatpush.msra.mxu0 %v1564
    %2252 = vmatpush.msra.mxu0 %v1561
    %2253 = vmatpush.msra.mxu0 %v1558
    %2254 = vmatpush.msra.mxu0 %v1555
    %2255 = vmatpush.msra.mxu0 %v1552
    %2256 = vmatpush.msra.mxu0 %v1549
    %2257 = vmatpush.msra.mxu0 %v1546
    %2258 = vmatpush.msra.mxu0 %v1543
    %2259 = vmatpush.msra.mxu0 %v1540
    %2260 = vmatpush.msra.mxu0 %v1537
    %2261 = vmatpush.msra.mxu0 %v1534
    %2262 = vmatpush.msra.mxu0 %v1531
    %2263 = vmatpush.msra.mxu0 %v1528
    %2264 = vmatpush.msra.mxu0 %v1525
    %2265 = vmatpush.msra.mxu0 %v1522
    %2266 = vmatpush.msra.mxu0 %v1519
    %2267 = vmatmul.f32.gmra.mxu0 %v2245
    %v2268 = vpop.f32.mrf.mxu0
    %v2269 = vadd.f32 0.0, %v2268
    %2270 = vdwg.mxu0
    %2271 = vmatpush.msra.mxu0 %v1565
    %2272 = vmatpush.msra.mxu0 %v1562
    %2273 = vmatpush.msra.mxu0 %v1559
    %2274 = vmatpush.msra.mxu0 %v1556
    %2275 = vmatpush.msra.mxu0 %v1553
    %2276 = vmatpush.msra.mxu0 %v1550
    %2277 = vmatpush.msra.mxu0 %v1547
    %2278 = vmatpush.msra.mxu0 %v1544
    %2279 = vmatpush.msra.mxu0 %v1541
    %2280 = vmatpush.msra.mxu0 %v1538
    %2281 = vmatpush.msra.mxu0 %v1535
    %2282 = vmatpush.msra.mxu0 %v1532
    %2283 = vmatpush.msra.mxu0 %v1529
    %2284 = vmatpush.msra.mxu0 %v1526
    %2285 = vmatpush.msra.mxu0 %v1523
    %2286 = vmatpush.msra.mxu0 %v1520
    %2287 = vmatmul.f32.gmra.mxu0 %v2245
    %v2288 = vpop.f32.mrf.mxu0
    %v2289 = vadd.f32 0.0, %v2288
    %2290 = vdwg.mxu0
    %2291 = vmatpush.msra.mxu0 %v1566
    %2292 = vmatpush.msra.mxu0 %v1563
    %2293 = vmatpush.msra.mxu0 %v1560
    %2294 = vmatpush.msra.mxu0 %v1557
    %2295 = vmatpush.msra.mxu0 %v1554
    %2296 = vmatpush.msra.mxu0 %v1551
    %2297 = vmatpush.msra.mxu0 %v1548
    %2298 = vmatpush.msra.mxu0 %v1545
    %2299 = vmatpush.msra.mxu0 %v1542
    %2300 = vmatpush.msra.mxu0 %v1539
    %2301 = vmatpush.msra.mxu0 %v1536
    %2302 = vmatpush.msra.mxu0 %v1533
    %2303 = vmatpush.msra.mxu0 %v1530
    %2304 = vmatpush.msra.mxu0 %v1527
    %2305 = vmatpush.msra.mxu0 %v1524
    %2306 = vmatpush.msra.mxu0 %v1521
    %2307 = vmatmul.f32.gmra.mxu0 %v2245
    %v2308 = vpop.f32.mrf.mxu0
    %v2309 = vadd.f32 0.0, %v2308
    %2310 = vdwg.mxu0
    %v2311 = vadd.f32 %v2248, %v2269
    %v2312 = vxor.u32 %v2311, 2147483648
    %v2313 = vmul.f32 %v2312, 1.442695
    %v2314 = vpow.pop %v2313
    %v2315 = vadd.f32 %v2314, 1.0
    %v2316 = vrcp.pop %v2315
    %v2317 = vmul.f32 %v2315, %v2316
    %v2318 = vsub.f32 1.0, %v2317
    %v2319 = vmul.f32 %v2316, %v2318
    %v2320 = vadd.f32 %v2316, %v2319
    %vm2321 = vweird.f32 %v2315
    %vm2322 = vweird.f32 %v2316
    %vm2323 = vmor %vm2321, %vm2322
    %v2324 = vsel %vm2323, %v2316, %v2320
    %v2325 = vand.u32 2147483647, %v2315
    %vm2326 = vcmp.eq.f32.partialorder %v2325, 8.507059e+37
    %v2327 = vand.u32 %v2315, 2147483648
    %v2328 = vor.u32 1.1754944e-38, %v2327
    %v2329 = vsel %vm2326, %v2328, %v2324
    %v2330 = vmul.f32 1.0, %v2329
    %v2331 = vadd.f32 %v2249, %v2289
    %v2332 = vxor.u32 %v2331, 2147483648
    %v2333 = vmul.f32 %v2332, 1.442695
    %v2334 = vpow.pop %v2333
    %v2335 = vadd.f32 %v2334, 1.0
    %v2336 = vrcp.pop %v2335
    %v2337 = vmul.f32 %v2335, %v2336
    %v2338 = vsub.f32 1.0, %v2337
    %v2339 = vmul.f32 %v2336, %v2338
    %v2340 = vadd.f32 %v2336, %v2339
    %vm2341 = vweird.f32 %v2335
    %vm2342 = vweird.f32 %v2336
    %vm2343 = vmor %vm2341, %vm2342
    %v2344 = vsel %vm2343, %v2336, %v2340
    %v2345 = vand.u32 2147483647, %v2335
    %vm2346 = vcmp.eq.f32.partialorder %v2345, 8.507059e+37
    %v2347 = vand.u32 %v2335, 2147483648
    %v2348 = vor.u32 1.1754944e-38, %v2347
    %v2349 = vsel %vm2346, %v2348, %v2344
    %v2350 = vmul.f32 1.0, %v2349
    %v2351 = vadd.f32 %v2309, %v1569
    %v2352 = vmul.f32 %v2330, %v2351
    %v2353 = vadd.f32 %v2250, %v2352
    %v2354 = vtanh.pop %v2353
    %v2355 = vsub.f32 1.0, %v2350
    %v2356 = vmul.f32 %v2355, %v2354
    %v2357 = vmul.f32 %v2350, %v2245
    %v2358 = vadd.f32 %v2356, %v2357
    %s2359 = scalar_lea.vmem %s11, 48
    %2360 = vst [vmem:[%s2359] sm:$0xff] %v2358
    %v2361 = vld [vmem:[%s1194] sm:$0xff]
    %v2362 = vld [vmem:[%s1194 + $0x8] sm:$0xff]
    %v2363 = vld [vmem:[%s1194 + $0x10] sm:$0xff]
    %2364 = vmatpush.msra.mxu0 %v1564
    %2365 = vmatpush.msra.mxu0 %v1561
    %2366 = vmatpush.msra.mxu0 %v1558
    %2367 = vmatpush.msra.mxu0 %v1555
    %2368 = vmatpush.msra.mxu0 %v1552
    %2369 = vmatpush.msra.mxu0 %v1549
    %2370 = vmatpush.msra.mxu0 %v1546
    %2371 = vmatpush.msra.mxu0 %v1543
    %2372 = vmatpush.msra.mxu0 %v1540
    %2373 = vmatpush.msra.mxu0 %v1537
    %2374 = vmatpush.msra.mxu0 %v1534
    %2375 = vmatpush.msra.mxu0 %v1531
    %2376 = vmatpush.msra.mxu0 %v1528
    %2377 = vmatpush.msra.mxu0 %v1525
    %2378 = vmatpush.msra.mxu0 %v1522
    %2379 = vmatpush.msra.mxu0 %v1519
    %2380 = vmatmul.f32.gmra.mxu0 %v2358
    %v2381 = vpop.f32.mrf.mxu0
    %v2382 = vadd.f32 0.0, %v2381
    %2383 = vdwg.mxu0
    %2384 = vmatpush.msra.mxu0 %v1565
    %2385 = vmatpush.msra.mxu0 %v1562
    %2386 = vmatpush.msra.mxu0 %v1559
    %2387 = vmatpush.msra.mxu0 %v1556
    %2388 = vmatpush.msra.mxu0 %v1553
    %2389 = vmatpush.msra.mxu0 %v1550
    %2390 = vmatpush.msra.mxu0 %v1547
    %2391 = vmatpush.msra.mxu0 %v1544
    %2392 = vmatpush.msra.mxu0 %v1541
    %2393 = vmatpush.msra.mxu0 %v1538
    %2394 = vmatpush.msra.mxu0 %v1535
    %2395 = vmatpush.msra.mxu0 %v1532
    %2396 = vmatpush.msra.mxu0 %v1529
    %2397 = vmatpush.msra.mxu0 %v1526
    %2398 = vmatpush.msra.mxu0 %v1523
    %2399 = vmatpush.msra.mxu0 %v1520
    %2400 = vmatmul.f32.gmra.mxu0 %v2358
    %v2401 = vpop.f32.mrf.mxu0
    %v2402 = vadd.f32 0.0, %v2401
    %2403 = vdwg.mxu0
    %2404 = vmatpush.msra.mxu0 %v1566
    %2405 = vmatpush.msra.mxu0 %v1563
    %2406 = vmatpush.msra.mxu0 %v1560
    %2407 = vmatpush.msra.mxu0 %v1557
    %2408 = vmatpush.msra.mxu0 %v1554
    %2409 = vmatpush.msra.mxu0 %v1551
    %2410 = vmatpush.msra.mxu0 %v1548
    %2411 = vmatpush.msra.mxu0 %v1545
    %2412 = vmatpush.msra.mxu0 %v1542
    %2413 = vmatpush.msra.mxu0 %v1539
    %2414 = vmatpush.msra.mxu0 %v1536
    %2415 = vmatpush.msra.mxu0 %v1533
    %2416 = vmatpush.msra.mxu0 %v1530
    %2417 = vmatpush.msra.mxu0 %v1527
    %2418 = vmatpush.msra.mxu0 %v1524
    %2419 = vmatpush.msra.mxu0 %v1521
    %2420 = vmatmul.f32.gmra.mxu0 %v2358
    %v2421 = vpop.f32.mrf.mxu0
    %v2422 = vadd.f32 0.0, %v2421
    %2423 = vdwg.mxu0
    %v2424 = vadd.f32 %v2361, %v2382
    %v2425 = vxor.u32 %v2424, 2147483648
    %v2426 = vmul.f32 %v2425, 1.442695
    %v2427 = vpow.pop %v2426
    %v2428 = vadd.f32 %v2427, 1.0
    %v2429 = vrcp.pop %v2428
    %v2430 = vmul.f32 %v2428, %v2429
    %v2431 = vsub.f32 1.0, %v2430
    %v2432 = vmul.f32 %v2429, %v2431
    %v2433 = vadd.f32 %v2429, %v2432
    %vm2434 = vweird.f32 %v2428
    %vm2435 = vweird.f32 %v2429
    %vm2436 = vmor %vm2434, %vm2435
    %v2437 = vsel %vm2436, %v2429, %v2433
    %v2438 = vand.u32 2147483647, %v2428
    %vm2439 = vcmp.eq.f32.partialorder %v2438, 8.507059e+37
    %v2440 = vand.u32 %v2428, 2147483648
    %v2441 = vor.u32 1.1754944e-38, %v2440
    %v2442 = vsel %vm2439, %v2441, %v2437
    %v2443 = vmul.f32 1.0, %v2442
    %v2444 = vadd.f32 %v2362, %v2402
    %v2445 = vxor.u32 %v2444, 2147483648
    %v2446 = vmul.f32 %v2445, 1.442695
    %v2447 = vpow.pop %v2446
    %v2448 = vadd.f32 %v2447, 1.0
    %v2449 = vrcp.pop %v2448
    %v2450 = vmul.f32 %v2448, %v2449
    %v2451 = vsub.f32 1.0, %v2450
    %v2452 = vmul.f32 %v2449, %v2451
    %v2453 = vadd.f32 %v2449, %v2452
    %vm2454 = vweird.f32 %v2448
    %vm2455 = vweird.f32 %v2449
    %vm2456 = vmor %vm2454, %vm2455
    %v2457 = vsel %vm2456, %v2449, %v2453
    %v2458 = vand.u32 2147483647, %v2448
    %vm2459 = vcmp.eq.f32.partialorder %v2458, 8.507059e+37
    %v2460 = vand.u32 %v2448, 2147483648
    %v2461 = vor.u32 1.1754944e-38, %v2460
    %v2462 = vsel %vm2459, %v2461, %v2457
    %v2463 = vmul.f32 1.0, %v2462
    %v2464 = vadd.f32 %v2422, %v1569
    %v2465 = vmul.f32 %v2443, %v2464
    %v2466 = vadd.f32 %v2363, %v2465
    %v2467 = vtanh.pop %v2466
    %v2468 = vsub.f32 1.0, %v2463
    %v2469 = vmul.f32 %v2468, %v2467
    %v2470 = vmul.f32 %v2463, %v2358
    %v2471 = vadd.f32 %v2469, %v2470
    %s2472 = scalar_lea.vmem %s11, 56
    %2473 = vst [vmem:[%s2472] sm:$0xff] %v2471
    %v2474 = vld [vmem:[%s11] sm:$0xff]
    %v2475 = vld [vmem:[%s11 + $0x8] sm:$0xff]
    %v2476 = vld [vmem:[%s11 + $0x10] sm:$0xff]
    %v2477 = vld [vmem:[%s11 + $0x18] sm:$0xff]
    %v2478 = vld [vmem:[%s11 + $0x20] sm:$0xff]
    %v2479 = vld [vmem:[%s11 + $0x28] sm:$0xff]
    %v2480 = vld [vmem:[%s11 + $0x30] sm:$0xff]
    %v2481 = vld [vmem:[%s11 + $0x38] sm:$0xff]
    %v2482 = vld [vmem:[#allocation11] sm:$0xff]
    %v2483 = vld [vmem:[#allocation11 + $0x8] sm:$0xff]
    %v2484 = vld [vmem:[#allocation11 + $0x10] sm:$0xff]
    %v2485 = vld [vmem:[#allocation11 + $0x18] sm:$0xff]
    %v2486 = vld [vmem:[#allocation11 + $0x20] sm:$0xff]
    %v2487 = vld [vmem:[#allocation11 + $0x28] sm:$0xff]
    %v2488 = vld [vmem:[#allocation11 + $0x30] sm:$0xff]
    %v2489 = vld [vmem:[#allocation11 + $0x38] sm:$0xff]
    %v2490 = vld [vmem:[#allocation11 + $0x40] sm:$0xff]
    %v2491 = vld [vmem:[#allocation11 + $0x48] sm:$0xff]
    %v2492 = vld [vmem:[#allocation11 + $0x50] sm:$0xff]
    %v2493 = vld [vmem:[#allocation11 + $0x58] sm:$0xff]
    %v2494 = vld [vmem:[#allocation11 + $0x60] sm:$0xff]
    %v2495 = vld [vmem:[#allocation11 + $0x68] sm:$0xff]
    %v2496 = vld [vmem:[#allocation11 + $0x70] sm:$0xff]
    %v2497 = vld [vmem:[#allocation11 + $0x78] sm:$0xff]
    %v2498 = vld [vmem:[%s10] sm:$0x1]
    %v2500 = vperm.slane %v2498, 0
    %2502 = vmatpush.msra.mxu0 %v2497
    %2503 = vmatpush.msra.mxu0 %v2496
    %2504 = vmatpush.msra.mxu0 %v2495
    %2505 = vmatpush.msra.mxu0 %v2494
    %2506 = vmatpush.msra.mxu0 %v2493
    %2507 = vmatpush.msra.mxu0 %v2492
    %2508 = vmatpush.msra.mxu0 %v2491
    %2509 = vmatpush.msra.mxu0 %v2490
    %2510 = vmatpush.msra.mxu0 %v2489
    %2511 = vmatpush.msra.mxu0 %v2488
    %2512 = vmatpush.msra.mxu0 %v2487
    %2513 = vmatpush.msra.mxu0 %v2486
    %2514 = vmatpush.msra.mxu0 %v2485
    %2515 = vmatpush.msra.mxu0 %v2484
    %2516 = vmatpush.msra.mxu0 %v2483
    %2517 = vmatpush.msra.mxu0 %v2482
    %2518 = vmatmul.f32.gmra.mxu0 %v2474
    %v2519 = vpop.f32.mrf.mxu0
    %v2520 = vadd.f32 %v2500, %v2519
    %2521 = vmatmul.f32.gmra.mxu0 %v2475
    %v2522 = vpop.f32.mrf.mxu0
    %v2523 = vadd.f32 %v2500, %v2522
    %2524 = vmatmul.f32.gmra.mxu0 %v2476
    %v2525 = vpop.f32.mrf.mxu0
    %v2526 = vadd.f32 %v2500, %v2525
    %2527 = vmatmul.f32.gmra.mxu0 %v2477
    %v2528 = vpop.f32.mrf.mxu0
    %v2529 = vadd.f32 %v2500, %v2528
    %2530 = vmatmul.f32.gmra.mxu0 %v2478
    %v2531 = vpop.f32.mrf.mxu0
    %v2532 = vadd.f32 %v2500, %v2531
    %2533 = vmatmul.f32.gmra.mxu0 %v2479
    %v2534 = vpop.f32.mrf.mxu0
    %v2535 = vadd.f32 %v2500, %v2534
    %2536 = vmatmul.f32.gmra.mxu0 %v2480
    %v2537 = vpop.f32.mrf.mxu0
    %v2538 = vadd.f32 %v2500, %v2537
    %2539 = vmatmul.f32.gmra.mxu0 %v2481
    %v2540 = vpop.f32.mrf.mxu0
    %v2541 = vadd.f32 %v2500, %v2540
    %2542 = vdwg.mxu0
    %2543 = vst [vmem:[%s12] sm:$0xff] %v2520
    %2544 = vst [vmem:[%s12 + $0x8] sm:$0xff] %v2523
    %2545 = vst [vmem:[%s12 + $0x10] sm:$0xff] %v2526
    %2546 = vst [vmem:[%s12 + $0x18] sm:$0xff] %v2529
    %2547 = vst [vmem:[%s12 + $0x20] sm:$0xff] %v2532
    %2548 = vst [vmem:[%s12 + $0x28] sm:$0xff] %v2535
    %2549 = vst [vmem:[%s12 + $0x30] sm:$0xff] %v2538
    %2550 = vst [vmem:[%s12 + $0x38] sm:$0xff] %v2541
    // Predicated region
    $region66: #{encoder_forward.1} parent=1 // pred_check
      _
    $region67: #{encoder_forward.1} parent=1 // pred_check_branch
      %2552 = sbr.rel (0) target = $region69
    $region68: #{encoder_forward.1} parent=1 // pred_region
      _
    $region69: #{encoder_forward.1} parent=1 // pred_fallthru
      _
    // Predicated region
    $region70: #{encoder_forward.1} parent=1 // pred_check
      _
    $region71: #{encoder_forward.1} parent=1 // pred_check_branch
      %2554 = sbr.rel (0) target = $region73
    $region72: #{encoder_forward.1} parent=1 // pred_region
      _
    $region73: #{encoder_forward.1} parent=1 // pred_fallthru
      _
    // Predicated region
    $region74: #{encoder_forward.1} parent=1 // pred_check
      _
    $region75: #{encoder_forward.1} parent=1 // pred_check_branch
      %2556 = sbr.rel (0) target = $region77
    $region76: #{encoder_forward.1} parent=1 // pred_region
      _
    $region77: #{encoder_forward.1} parent=1 // pred_fallthru
      _
    // Predicated region
    $region78: #{encoder_forward.1} parent=1 // pred_check
      _
    $region79: #{encoder_forward.1} parent=1 // pred_check_branch
      %2558 = sbr.rel (0) target = $region81
    $region80: #{encoder_forward.1} parent=1 // pred_region
      _
    $region81: #{encoder_forward.1} parent=1 // pred_fallthru
      _
    %2559 = vsyncpa [#allocation5], 1
    %2560 = vsyncpa [#allocation7], 1
    %2561 = vsyncpa [#allocation10], 1

</llo_original>
